<compile_context>
chip_gen: v7x
topology: tpu7x:2x2x1
jax: 0.10.0
libtpu: 0.0.40
codegen_flags: <defaults>
</compile_context>

<pallas_src>
import functools

import jax
import jax.numpy as jnp
from jax import lax
from jax.experimental import pallas as pl
from jax.experimental.pallas import tpu as pltpu

BN_EPS = 1e-5
_VMEM_LIMIT = 32 * 1024 * 1024        # scoped VMEM request (<= physical on v5e/v6e/v7x)
_INFLIGHT_BUDGET = 12 * 1024 * 1024   # double-buffered block budget used to size TILE_M
_FUSED_BUDGET = 24 * 1024 * 1024      # resident-h + in-flight budget for the fused path


def _round_up(x, m):
    return (x + m - 1) // m * m


# ---------------------------------------------------------------------------
# Fused conv + BatchNorm (+ optional fused ReLU) kernel.
# grid = (2, grid_m): phase 0 = matmul + stats (h resident in VMEM), phase 1 = BN apply.
# ---------------------------------------------------------------------------
def _fused_conv_bn_kernel(p_ref, w_ref, gamma_ref, beta_ref, y_ref,
                          h_scr, sum_acc, sq_acc, scale_acc, shift_acc,
                          *, relu, m_total):
    phase = pl.program_id(0)
    i = pl.program_id(1)
    tm = p_ref.shape[0]
    idx = pl.multiple_of(i * tm, 8)

    @pl.when(phase == 0)
    def _conv_and_stats():
        @pl.when(i == 0)
        def _init():
            sum_acc[...] = jnp.zeros_like(sum_acc)
            sq_acc[...] = jnp.zeros_like(sq_acc)

        h = jnp.dot(p_ref[...], w_ref[...], preferred_element_type=jnp.float32)
        rows = i * tm + lax.broadcasted_iota(jnp.int32, (tm, 1), 0)
        hm = jnp.where(rows < m_total, h, 0.0)     # mask ragged tail rows out of the stats
        sum_acc[...] += jnp.sum(hm, axis=0, keepdims=True)
        sq_acc[...] += jnp.sum(hm * hm, axis=0, keepdims=True)
        h_scr[pl.ds(idx, tm), :] = h               # conv output stays resident in VMEM

    @pl.when(phase == 1)
    def _apply():
        @pl.when(i == 0)
        def _fold_bn():
            inv_m = 1.0 / float(m_total)
            mean = sum_acc[...] * inv_m
            # TODO(synk): E[h^2]-E[h]^2 in f32 can cancel when |mean| >> std; the clamp keeps
            # it finite — a per-tile centered (Chan) merge would be more robust.
            var = jnp.maximum(sq_acc[...] * inv_m - mean * mean, 0.0)
            inv = lax.rsqrt(var + BN_EPS)
            scale_acc[...] = gamma_ref[...] * inv
            shift_acc[...] = beta_ref[...] - mean * scale_acc[...]

        y = h_scr[pl.ds(idx, tm), :] * scale_acc[...] + shift_acc[...]
        if relu:
            y = jnp.maximum(y, 0.0)
        y_ref[...] = y.astype(y_ref.dtype)


# ---------------------------------------------------------------------------
# Fallback pass 1: conv + per-channel stats (stats accumulated directly into the
# resident sum/sq output blocks), conv output written back in bf16.
# ---------------------------------------------------------------------------
def _conv_stats_kernel(p_ref, w_ref, h_ref, sum_ref, sq_ref, *, m_total):
    i = pl.program_id(0)
    tm = p_ref.shape[0]

    @pl.when(i == 0)
    def _init():
        sum_ref[...] = jnp.zeros_like(sum_ref)
        sq_ref[...] = jnp.zeros_like(sq_ref)

    h = jnp.dot(p_ref[...], w_ref[...], preferred_element_type=jnp.float32)
    rows = i * tm + lax.broadcasted_iota(jnp.int32, (tm, 1), 0)
    hm = jnp.where(rows < m_total, h, 0.0)
    sum_ref[...] += jnp.sum(hm, axis=0, keepdims=True)
    sq_ref[...] += jnp.sum(hm * hm, axis=0, keepdims=True)
    h_ref[...] = h.astype(h_ref.dtype)             # bf16 writeback halves pass-1 HBM stores


# ---------------------------------------------------------------------------
# Fallback pass 2: folded BatchNorm apply (one FMA/elem) + optional fused ReLU.
# ---------------------------------------------------------------------------
def _scale_shift_kernel(h_ref, scale_ref, shift_ref, o_ref, *, relu):
    y = h_ref[...].astype(jnp.float32) * scale_ref[...] + shift_ref[...]
    if relu:
        y = jnp.maximum(y, 0.0)
    o_ref[...] = y.astype(o_ref.dtype)


# ---------------------------------------------------------------------------
# JAX glue
# ---------------------------------------------------------------------------
def _im2col_bf16(x_nhwc, stride):
    """3x3, padding=1 patch extraction (input already bf16). K-order = (kh, kw, c); K is
    zero-padded to a lane-dense multiple of 128 inside the single concatenate."""
    N, H, W, C = x_nhwc.shape
    xp = jnp.pad(x_nhwc, ((0, 0), (1, 1), (1, 1), (0, 0)))
    Ho = (H + 2 - 3) // stride + 1
    Wo = (W + 2 - 3) // stride + 1
    cols = []
    for kh in range(3):
        for kw in range(3):
            cols.append(
                xp[:, kh:kh + stride * (Ho - 1) + 1:stride,
                      kw:kw + stride * (Wo - 1) + 1:stride, :])
    K = 9 * C
    Kp = _round_up(K, 128)
    if Kp > K:
        cols.append(jnp.zeros((N, Ho, Wo, Kp - K), x_nhwc.dtype))
    patches = jnp.concatenate(cols, axis=-1)        # (N, Ho, Wo, Kp) bf16 — single materialization
    return patches.reshape(N * Ho * Wo, Kp), (N, Ho, Wo), K


def _pick_tile_m(M, bytes_per_row, cap):
    """Largest multiple-of-8 tile (<= cap) whose double-buffered blocks fit the budget."""
    if M % 8 != 0:
        return M                                    # single block == full (ragged) array dim
    tm = max(8, min(cap, M) // 8 * 8)
    while tm > 8 and 2 * tm * bytes_per_row > _INFLIGHT_BUDGET:
        tm = max(8, (tm // 2) // 8 * 8)
    return tm


def _conv_bn_stage(x_nhwc, w_oihw, gamma, beta, stride, relu_out, out_dtype):
    """One (Conv3x3 no-bias -> training-mode BN [-> fused ReLU]) stage.
    `x_nhwc` must already be ReLU'd and in bf16."""
    Cin = x_nhwc.shape[-1]
    Cout = w_oihw.shape[0]
    out_bytes = jnp.dtype(out_dtype).itemsize

    patches, (N, Ho, Wo), K = _im2col_bf16(x_nhwc, stride)    # (M, Kp) bf16
    M, Kp = patches.shape
    Cp = _round_up(max(Cout, 128), 128)                        # lane-dense output channels

    w_mat = jnp.transpose(w_oihw, (2, 3, 1, 0)).reshape(K, Cout)
    w_p = jnp.pad(w_mat, ((0, Kp - K), (0, Cp - Cout))).astype(jnp.bfloat16)
    gamma_p = jnp.pad(gamma.astype(jnp.float32), (0, Cp - Cout)).reshape(1, Cp)
    beta_p = jnp.pad(beta.astype(jnp.float32), (0, Cp - Cout)).reshape(1, Cp)

    tile_m = _pick_tile_m(M, Kp * 2 + Cp * 4 + Cp * out_bytes, cap=1024)
    grid_m = pl.cdiv(M, tile_m)
    m_resident = grid_m * tile_m

    fused_bytes = (m_resident * Cp * 4                         # resident f32 h scratch
                   + 2 * tile_m * (Kp * 2 + Cp * out_bytes)    # double-buffered LHS / out blocks
                   + 2 * Kp * Cp * 2 + 8 * Cp * 4)             # weight + per-channel blocks

    if fused_bytes <= _FUSED_BUDGET:
        # Single fused call: h never goes through HBM.
        y = pl.pallas_call(
            functools.partial(_fused_conv_bn_kernel, relu=relu_out, m_total=M),
            out_shape=jax.ShapeDtypeStruct((M, Cp), out_dtype),
            grid=(2, grid_m),
            in_specs=[
                pl.BlockSpec((tile_m, Kp), lambda p, i: (i * (1 - p), 0)),  # no LHS re-stream in phase 1
                pl.BlockSpec((Kp, Cp), lambda p, i: (0, 0)),
                pl.BlockSpec((1, Cp), lambda p, i: (0, 0)),
                pl.BlockSpec((1, Cp), lambda p, i: (0, 0)),
            ],
            out_specs=pl.BlockSpec((tile_m, Cp), lambda p, i: (i * p, 0)),  # no flush in phase 0
            scratch_shapes=[
                pltpu.VMEM((m_resident, Cp), jnp.float32),   # resident conv output
                pltpu.VMEM((1, Cp), jnp.float32),            # sum
                pltpu.VMEM((1, Cp), jnp.float32),            # sum of squares
                pltpu.VMEM((1, Cp), jnp.float32),            # folded scale
                pltpu.VMEM((1, Cp), jnp.float32),            # folded shift
            ],
            compiler_params=pltpu.CompilerParams(
                dimension_semantics=("arbitrary", "arbitrary"),
                vmem_limit_bytes=_VMEM_LIMIT),
        )(patches, w_p, gamma_p, beta_p)
    else:
        # Pass 1: conv + per-channel stats (resident accumulators), bf16 h writeback.
        h, s, sq = pl.pallas_call(
            functools.partial(_conv_stats_kernel, m_total=M),
            out_shape=(
                jax.ShapeDtypeStruct((M, Cp), jnp.bfloat16),
                jax.ShapeDtypeStruct((1, Cp), jnp.float32),
                jax.ShapeDtypeStruct((1, Cp), jnp.float32),
            ),
            grid=(grid_m,),
            in_specs=[
                pl.BlockSpec((tile_m, Kp), lambda i: (i, 0)),
                pl.BlockSpec((Kp, Cp), lambda i: (0, 0)),
            ],
            out_specs=(
                pl.BlockSpec((tile_m, Cp), lambda i: (i, 0)),
                pl.BlockSpec((1, Cp), lambda i: (0, 0)),
                pl.BlockSpec((1, Cp), lambda i: (0, 0)),
            ),
            compiler_params=pltpu.CompilerParams(
                dimension_semantics=("arbitrary",),
                vmem_limit_bytes=_VMEM_LIMIT),
        )(patches, w_p)

        # Tiny per-channel glue: fold BN into one scale + one shift (f32).
        mean = s / float(M)
        var = jnp.maximum(sq / float(M) - mean * mean, 0.0)    # biased variance (PyTorch fwd)
        inv = lax.rsqrt(var + BN_EPS)
        scale = gamma_p * inv
        shift = beta_p - mean * scale

        # Pass 2: mem-bound apply, bigger tiles, megacore-parallel.
        tile_m2 = _pick_tile_m(M, Cp * 2 + Cp * out_bytes, cap=2048)
        y = pl.pallas_call(
            functools.partial(_scale_shift_kernel, relu=relu_out),
            out_shape=jax.ShapeDtypeStruct((M, Cp), out_dtype),
            grid=(pl.cdiv(M, tile_m2),),
            in_specs=[
                pl.BlockSpec((tile_m2, Cp), lambda i: (i, 0)),
                pl.BlockSpec((1, Cp), lambda i: (0, 0)),
                pl.BlockSpec((1, Cp), lambda i: (0, 0)),
            ],
            out_specs=pl.BlockSpec((tile_m2, Cp), lambda i: (i, 0)),
            compiler_params=pltpu.CompilerParams(
                dimension_semantics=("parallel",),
                vmem_limit_bytes=_VMEM_LIMIT),
        )(h, scale, shift)

    return y[:, :Cout].reshape(N, Ho, Wo, Cout)


@functools.partial(jax.jit, static_argnames=("stride",))
def residual_branch_forward(x_nchw, params, *, stride):
    """Pallas implementation of ResidualBranch.forward (NCHW in, NCHW out)."""
    w1, g1, b1, w2, g2, b2 = params
    x = jnp.transpose(x_nchw, (0, 2, 3, 1))                   # NHWC
    x = jnp.maximum(x, 0.0).astype(jnp.bfloat16)              # ReLU_1, single bf16 materialization

    # Conv_1(3x3, stride, pad=1) -> BN_1 -> (fused) ReLU_2 ; bf16 (only feeds stage 2 matmul).
    y1 = _conv_bn_stage(x, w1, g1, b1, stride, relu_out=True, out_dtype=jnp.bfloat16)
    # Conv_2(3x3, 1, pad=1) -> BN_2 ; final output in f32.
    y2 = _conv_bn_stage(y1, w2, g2, b2, 1, relu_out=False, out_dtype=jnp.float32)

    return jnp.transpose(y2, (0, 3, 1, 2))                    # back to NCHW


# ---------------------------------------------------------------------------
# Reference (pure JAX). Conv operands in bf16 (f32 accumulation) to match the kernel's MXU
# precision; ReLU / BN statistics / normalization in f32, matching PyTorch's training-mode
# forward semantics (batch stats over N,H,W, biased variance, eps=1e-5).
# ---------------------------------------------------------------------------
def _reference(x_nchw, params, stride):
    w1, g1, b1, w2, g2, b2 = params

    def conv(x, w, s):
        return lax.conv_general_dilated(
            x.astype(jnp.bfloat16), w.astype(jnp.bfloat16), (s, s), ((1, 1), (1, 1)),
            dimension_numbers=("NCHW", "OIHW", "NCHW"),
            preferred_element_type=jnp.float32)

    def bn(x, g, b):
        mean = jnp.mean(x, axis=(0, 2, 3), keepdims=True)
        var = jnp.mean((x - mean) ** 2, axis=(0, 2, 3), keepdims=True)
        return ((x - mean) * lax.rsqrt(var + BN_EPS)
                * g.reshape(1, -1, 1, 1) + b.reshape(1, -1, 1, 1))

    h = bn(conv(jnp.maximum(x_nchw, 0.0), w1, stride), g1, b1)
    h = bn(conv(jnp.maximum(h, 0.0), w2, 1), g2, b2)
    return h


def make_params(key, in_channels, out_channels):
    """Deterministic synthetic parameters matching nn.Conv2d / nn.BatchNorm2d shapes."""
    k1, k2, k3, k4 = jax.random.split(key, 4)
    w1 = jax.random.normal(k1, (out_channels, in_channels, 3, 3), jnp.float32) * 0.2
    w2 = jax.random.normal(k2, (out_channels, out_channels, 3, 3), jnp.float32) * 0.2
    g1 = 1.0 + 0.1 * jax.random.normal(k3, (out_channels,), jnp.float32)
    b1 = 0.1 * jax.random.normal(k4, (out_channels,), jnp.float32)
    g2 = jnp.ones((out_channels,), jnp.float32)
    b2 = jnp.zeros((out_channels,), jnp.float32)
    return (w1, g1, b1, w2, g2, b2)


if __name__ == "__main__":
    key = jax.random.PRNGKey(0)
    kx, kp = jax.random.split(key)

    N, Cin, H, W = 2, 4, 16, 16
    Cout = 8
    x = jax.random.normal(kx, (N, Cin, H, W), jnp.float32)
    params = make_params(kp, Cin, Cout)

    for stride in (1, 2):
        out = jax.block_until_ready(residual_branch_forward(x, params, stride=stride))
        ref = jax.block_until_ready(_reference(x, params, stride))
        assert out.shape == ref.shape, (out.shape, ref.shape)
        assert bool(jnp.all(jnp.isfinite(out)))
        assert bool(jnp.allclose(out, ref, rtol=1e-2, atol=1e-2)), (
            f"mismatch at stride={stride}: max abs diff "
            f"{float(jnp.max(jnp.abs(out - ref)))}")

    print("KERNEL_OK")
</pallas_src>

<mosaic_0001>
module attributes {stable_mosaic.version = 11 : i64} {
  func.func @_fused_conv_bn_kernel(%arg0: i32, %arg1: i32, %arg2: memref<512x128xbf16, #tpu.memory_space<vmem>>, %arg3: memref<128x128xbf16, #tpu.memory_space<vmem>>, %arg4: memref<1x128xf32, #tpu.memory_space<vmem>>, %arg5: memref<1x128xf32, #tpu.memory_space<vmem>>, %arg6: memref<512x128xbf16, #tpu.memory_space<vmem>>, %arg7: memref<512x128xf32, #tpu.memory_space<vmem>>, %arg8: memref<1x128xf32, #tpu.memory_space<vmem>>, %arg9: memref<1x128xf32, #tpu.memory_space<vmem>>, %arg10: memref<1x128xf32, #tpu.memory_space<vmem>>, %arg11: memref<1x128xf32, #tpu.memory_space<vmem>>) attributes {dimension_semantics = [#tpu.dimension_semantics<arbitrary>, #tpu.dimension_semantics<arbitrary>], iteration_bounds = array<i64: 2, 1>, scalar_prefetch = 0 : i64, scratch_operands = 5 : i64, tpu.core_type = #tpu.core_type<tc>, window_params = [{transform_indices = @transform_0, window_bounds = array<i64: 512, 128>}, {pipeline_mode = #tpu.pipeline_mode<synchronous>, transform_indices = @transform_1, window_bounds = array<i64: 128, 128>}, {pipeline_mode = #tpu.pipeline_mode<synchronous>, transform_indices = @transform_2, window_bounds = array<i64: 1, 128>}, {pipeline_mode = #tpu.pipeline_mode<synchronous>, transform_indices = @transform_3, window_bounds = array<i64: 1, 128>}, {transform_indices = @transform_4, window_bounds = array<i64: 512, 128>}]} {
    %c512_i32 = arith.constant 512 : i32
    %0 = arith.muli %arg1, %c512_i32 : i32
    %1 = tpu.assume_multiple %0, 8 : i32
    %c0_i32 = arith.constant 0 : i32
    %2 = arith.cmpi eq, %arg0, %c0_i32 : i32
    %3 = arith.extui %2 : i1 to i32
    %c0_i32_0 = arith.constant 0 : i32
    %4 = arith.cmpi ne, %3, %c0_i32_0 : i32
    scf.if %4 {
      %c0_i32_2 = arith.constant 0 : i32
      %8 = arith.cmpi eq, %arg1, %c0_i32_2 : i32
      %9 = arith.extui %8 : i1 to i32
      %c0_i32_3 = arith.constant 0 : i32
      %10 = arith.cmpi ne, %9, %c0_i32_3 : i32
      scf.if %10 {
        %cst_21 = arith.constant 0.000000e+00 : f32
        %37 = vector.broadcast %cst_21 : f32 to vector<1x128xf32>
        %c0_22 = arith.constant 0 : index
        %c0_23 = arith.constant 0 : index
        %38 = vector.load %arg8[%c0_22, %c0_23] : memref<1x128xf32, #tpu.memory_space<vmem>>, vector<1x128xf32>
        tpu.vector_store %arg8[%c0_22, %c0_23], %37 {strides = array<i32>} : memref<1x128xf32, #tpu.memory_space<vmem>>, vector<1x128xf32>,
        %cst_24 = arith.constant 0.000000e+00 : f32
        %39 = vector.broadcast %cst_24 : f32 to vector<1x128xf32>
        %c0_25 = arith.constant 0 : index
        %c0_26 = arith.constant 0 : index
        %40 = vector.load %arg9[%c0_25, %c0_26] : memref<1x128xf32, #tpu.memory_space<vmem>>, vector<1x128xf32>
        tpu.vector_store %arg9[%c0_25, %c0_26], %39 {strides = array<i32>} : memref<1x128xf32, #tpu.memory_space<vmem>>, vector<1x128xf32>,
      } else {
      }
      %c0 = arith.constant 0 : index
      %c0_4 = arith.constant 0 : index
      %11 = vector.load %arg2[%c0, %c0_4] : memref<512x128xbf16, #tpu.memory_space<vmem>>, vector<512x128xbf16>
      %c0_5 = arith.constant 0 : index
      %c0_6 = arith.constant 0 : index
      %12 = vector.load %arg3[%c0_5, %c0_6] : memref<128x128xbf16, #tpu.memory_space<vmem>>, vector<128x128xbf16>
      %cst = arith.constant dense<0.000000e+00> : vector<512x128xf32>
      %13 = tpu.matmul %11, %12, %cst {dimension_numbers = #tpu.dot_dimension_numbers<[1], [0], [0], [1], [0, 0, 1, 1], [], []>} : vector<512x128xbf16>, vector<128x128xbf16>, vector<512x128xf32> -> vector<512x128xf32>
      %c512_i32_7 = arith.constant 512 : i32
      %14 = arith.muli %arg1, %c512_i32_7 : i32
      %15 = tpu.iota {dimensions = array<i32: 0>} : vector<512x1xi32>
      %16 = vector.broadcast %14 : i32 to vector<512x1xi32>
      %17 = arith.addi %16, %15 : vector<512x1xi32>
      %c512_i32_8 = arith.constant 512 : i32
      %18 = vector.broadcast %c512_i32_8 : i32 to vector<512x1xi32>
      %19 = arith.cmpi slt, %17, %18 : vector<512x1xi32>
      %cst_9 = arith.constant 0.000000e+00 : f32
      %20 = vector.shape_cast %19 : vector<512x1xi1> to vector<512x1xi1>
      %21 = vector.broadcast %20 : vector<512x1xi1> to vector<512x128xi1>
      %22 = vector.broadcast %cst_9 : f32 to vector<512x128xf32>
      %23 = arith.select %21, %13, %22 : vector<512x128xi1>, vector<512x128xf32>
      %c0_10 = arith.constant 0 : index
      %c0_11 = arith.constant 0 : index
      %24 = vector.load %arg8[%c0_10, %c0_11] : memref<1x128xf32, #tpu.memory_space<vmem>>, vector<1x128xf32>
      %cst_12 = arith.constant dense<0.000000e+00> : vector<128xf32>
      %25 = vector.multi_reduction <add>, %23, %cst_12 [0] : vector<512x128xf32> to vector<128xf32>
      %26 = vector.shape_cast %25 : vector<128xf32> to vector<1x128xf32>
      %27 = arith.addf %24, %26 : vector<1x128xf32>
      %c0_13 = arith.constant 0 : index
      %c0_14 = arith.constant 0 : index
      %28 = vector.load %arg8[%c0_13, %c0_14] : memref<1x128xf32, #tpu.memory_space<vmem>>, vector<1x128xf32>
      tpu.vector_store %arg8[%c0_13, %c0_14], %27 {strides = array<i32>} : memref<1x128xf32, #tpu.memory_space<vmem>>, vector<1x128xf32>,
      %c0_15 = arith.constant 0 : index
      %c0_16 = arith.constant 0 : index
      %29 = vector.load %arg9[%c0_15, %c0_16] : memref<1x128xf32, #tpu.memory_space<vmem>>, vector<1x128xf32>
      %30 = arith.mulf %23, %23 : vector<512x128xf32>
      %cst_17 = arith.constant dense<0.000000e+00> : vector<128xf32>
      %31 = vector.multi_reduction <add>, %30, %cst_17 [0] : vector<512x128xf32> to vector<128xf32>
      %32 = vector.shape_cast %31 : vector<128xf32> to vector<1x128xf32>
      %33 = arith.addf %29, %32 : vector<1x128xf32>
      %c0_18 = arith.constant 0 : index
      %c0_19 = arith.constant 0 : index
      %34 = vector.load %arg9[%c0_18, %c0_19] : memref<1x128xf32, #tpu.memory_space<vmem>>, vector<1x128xf32>
      tpu.vector_store %arg9[%c0_18, %c0_19], %33 {strides = array<i32>} : memref<1x128xf32, #tpu.memory_space<vmem>>, vector<1x128xf32>,
      %35 = arith.index_cast %1 : i32 to index
      %c0_20 = arith.constant 0 : index
      %36 = vector.load %arg7[%35, %c0_20] : memref<512x128xf32, #tpu.memory_space<vmem>>, vector<512x128xf32>
      tpu.vector_store %arg7[%35, %c0_20], %13 {strides = array<i32>} : memref<512x128xf32, #tpu.memory_space<vmem>>, vector<512x128xf32>,
    } else {
    }
    %c1_i32 = arith.constant 1 : i32
    %5 = arith.cmpi eq, %arg0, %c1_i32 : i32
    %6 = arith.extui %5 : i1 to i32
    %c0_i32_1 = arith.constant 0 : i32
    %7 = arith.cmpi ne, %6, %c0_i32_1 : i32
    scf.if %7 {
      %c0_i32_2 = arith.constant 0 : i32
      %8 = arith.cmpi eq, %arg1, %c0_i32_2 : i32
      %9 = arith.extui %8 : i1 to i32
      %c0_i32_3 = arith.constant 0 : i32
      %10 = arith.cmpi ne, %9, %c0_i32_3 : i32
      scf.if %10 {
        %c0_10 = arith.constant 0 : index
        %c0_11 = arith.constant 0 : index
        %23 = vector.load %arg8[%c0_10, %c0_11] : memref<1x128xf32, #tpu.memory_space<vmem>>, vector<1x128xf32>
        %cst_12 = arith.constant 0.001953125 : f32
        %24 = vector.broadcast %cst_12 : f32 to vector<1x128xf32>
        %25 = arith.mulf %23, %24 : vector<1x128xf32>
        %c0_13 = arith.constant 0 : index
        %c0_14 = arith.constant 0 : index
        %26 = vector.load %arg9[%c0_13, %c0_14] : memref<1x128xf32, #tpu.memory_space<vmem>>, vector<1x128xf32>
        %cst_15 = arith.constant 0.001953125 : f32
        %27 = vector.broadcast %cst_15 : f32 to vector<1x128xf32>
        %28 = arith.mulf %26, %27 : vector<1x128xf32>
        %29 = arith.mulf %25, %25 : vector<1x128xf32>
        %30 = arith.subf %28, %29 : vector<1x128xf32>
        %cst_16 = arith.constant 0.000000e+00 : f32
        %31 = vector.broadcast %cst_16 : f32 to vector<1x128xf32>
        %32 = arith.maximumf %30, %31 : vector<1x128xf32>
        %cst_17 = arith.constant 9.99999974E-6 : f32
        %33 = vector.broadcast %cst_17 : f32 to vector<1x128xf32>
        %34 = arith.addf %32, %33 : vector<1x128xf32>
        %35 = math.rsqrt %34 : vector<1x128xf32>
        %c0_18 = arith.constant 0 : index
        %c0_19 = arith.constant 0 : index
        %36 = vector.load %arg4[%c0_18, %c0_19] : memref<1x128xf32, #tpu.memory_space<vmem>>, vector<1x128xf32>
        %37 = arith.mulf %36, %35 : vector<1x128xf32>
        %c0_20 = arith.constant 0 : index
        %c0_21 = arith.constant 0 : index
        %38 = vector.load %arg10[%c0_20, %c0_21] : memref<1x128xf32, #tpu.memory_space<vmem>>, vector<1x128xf32>
        tpu.vector_store %arg10[%c0_20, %c0_21], %37 {strides = array<i32>} : memref<1x128xf32, #tpu.memory_space<vmem>>, vector<1x128xf32>,
        %c0_22 = arith.constant 0 : index
        %c0_23 = arith.constant 0 : index
        %39 = vector.load %arg5[%c0_22, %c0_23] : memref<1x128xf32, #tpu.memory_space<vmem>>, vector<1x128xf32>
        %c0_24 = arith.constant 0 : index
        %c0_25 = arith.constant 0 : index
        %40 = vector.load %arg10[%c0_24, %c0_25] : memref<1x128xf32, #tpu.memory_space<vmem>>, vector<1x128xf32>
        %41 = arith.mulf %25, %40 : vector<1x128xf32>
        %42 = arith.subf %39, %41 : vector<1x128xf32>
        %c0_26 = arith.constant 0 : index
        %c0_27 = arith.constant 0 : index
        %43 = vector.load %arg11[%c0_26, %c0_27] : memref<1x128xf32, #tpu.memory_space<vmem>>, vector<1x128xf32>
        tpu.vector_store %arg11[%c0_26, %c0_27], %42 {strides = array<i32>} : memref<1x128xf32, #tpu.memory_space<vmem>>, vector<1x128xf32>,
      } else {
      }
      %11 = arith.index_cast %1 : i32 to index
      %c0 = arith.constant 0 : index
      %12 = vector.load %arg7[%11, %c0] : memref<512x128xf32, #tpu.memory_space<vmem>>, vector<512x128xf32>
      %c0_4 = arith.constant 0 : index
      %c0_5 = arith.constant 0 : index
      %13 = vector.load %arg10[%c0_4, %c0_5] : memref<1x128xf32, #tpu.memory_space<vmem>>, vector<1x128xf32>
      %14 = vector.broadcast %13 : vector<1x128xf32> to vector<512x128xf32>
      %15 = arith.mulf %12, %14 : vector<512x128xf32>
      %c0_6 = arith.constant 0 : index
      %c0_7 = arith.constant 0 : index
      %16 = vector.load %arg11[%c0_6, %c0_7] : memref<1x128xf32, #tpu.memory_space<vmem>>, vector<1x128xf32>
      %17 = vector.broadcast %16 : vector<1x128xf32> to vector<512x128xf32>
      %18 = arith.addf %15, %17 : vector<512x128xf32>
      %cst = arith.constant 0.000000e+00 : f32
      %19 = vector.broadcast %cst : f32 to vector<512x128xf32>
      %20 = arith.maximumf %18, %19 : vector<512x128xf32>
      %21 = arith.truncf %20 : vector<512x128xf32> to vector<512x128xbf16>
      %c0_8 = arith.constant 0 : index
      %c0_9 = arith.constant 0 : index
      %22 = vector.load %arg6[%c0_8, %c0_9] : memref<512x128xbf16, #tpu.memory_space<vmem>>, vector<512x128xbf16>
      tpu.vector_store %arg6[%c0_8, %c0_9], %21 {strides = array<i32>} : memref<512x128xbf16, #tpu.memory_space<vmem>>, vector<512x128xbf16>,
    } else {
    }
    return
  }
  func.func @transform_0(%arg0: i32, %arg1: i32) -> (i32, i32) {
    %c1_i32 = arith.constant 1 : i32
    %0 = arith.subi %c1_i32, %arg0 : i32
    %1 = arith.muli %arg1, %0 : i32
    %c0_i32 = arith.constant 0 : i32
    %c0_i32_0 = arith.constant 0 : i32
    return %1, %c0_i32 : i32, i32
  }
  func.func @transform_1(%arg0: i32, %arg1: i32) -> (i32, i32) {
    %c0_i32 = arith.constant 0 : i32
    %c0_i32_0 = arith.constant 0 : i32
    %c0_i32_1 = arith.constant 0 : i32
    return %c0_i32, %c0_i32_0 : i32, i32
  }
  func.func @transform_2(%arg0: i32, %arg1: i32) -> (i32, i32) {
    %c0_i32 = arith.constant 0 : i32
    %c0_i32_0 = arith.constant 0 : i32
    %c0_i32_1 = arith.constant 0 : i32
    return %c0_i32, %c0_i32_0 : i32, i32
  }
  func.func @transform_3(%arg0: i32, %arg1: i32) -> (i32, i32) {
    %c0_i32 = arith.constant 0 : i32
    %c0_i32_0 = arith.constant 0 : i32
    %c0_i32_1 = arith.constant 0 : i32
    return %c0_i32, %c0_i32_0 : i32, i32
  }
  func.func @transform_4(%arg0: i32, %arg1: i32) -> (i32, i32) {
    %0 = arith.muli %arg1, %arg0 : i32
    %c0_i32 = arith.constant 0 : i32
    %c0_i32_0 = arith.constant 0 : i32
    return %0, %c0_i32 : i32, i32
  }
}

module attributes {stable_mosaic.version = 11 : i64} {
  func.func @_fused_conv_bn_kernel(%arg0: i32, %arg1: i32, %arg2: memref<512x128xbf16, #tpu.memory_space<vmem>>, %arg3: memref<128x128xbf16, #tpu.memory_space<vmem>>, %arg4: memref<1x128xf32, #tpu.memory_space<vmem>>, %arg5: memref<1x128xf32, #tpu.memory_space<vmem>>, %arg6: memref<512x128xf32, #tpu.memory_space<vmem>>, %arg7: memref<512x128xf32, #tpu.memory_space<vmem>>, %arg8: memref<1x128xf32, #tpu.memory_space<vmem>>, %arg9: memref<1x128xf32, #tpu.memory_space<vmem>>, %arg10: memref<1x128xf32, #tpu.memory_space<vmem>>, %arg11: memref<1x128xf32, #tpu.memory_space<vmem>>) attributes {dimension_semantics = [#tpu.dimension_semantics<arbitrary>, #tpu.dimension_semantics<arbitrary>], iteration_bounds = array<i64: 2, 1>, scalar_prefetch = 0 : i64, scratch_operands = 5 : i64, tpu.core_type = #tpu.core_type<tc>, window_params = [{transform_indices = @transform_0, window_bounds = array<i64: 512, 128>}, {pipeline_mode = #tpu.pipeline_mode<synchronous>, transform_indices = @transform_1, window_bounds = array<i64: 128, 128>}, {pipeline_mode = #tpu.pipeline_mode<synchronous>, transform_indices = @transform_2, window_bounds = array<i64: 1, 128>}, {pipeline_mode = #tpu.pipeline_mode<synchronous>, transform_indices = @transform_3, window_bounds = array<i64: 1, 128>}, {transform_indices = @transform_4, window_bounds = array<i64: 512, 128>}]} {
    %c512_i32 = arith.constant 512 : i32
    %0 = arith.muli %arg1, %c512_i32 : i32
    %1 = tpu.assume_multiple %0, 8 : i32
    %c0_i32 = arith.constant 0 : i32
    %2 = arith.cmpi eq, %arg0, %c0_i32 : i32
    %3 = arith.extui %2 : i1 to i32
    %c0_i32_0 = arith.constant 0 : i32
    %4 = arith.cmpi ne, %3, %c0_i32_0 : i32
    scf.if %4 {
      %c0_i32_2 = arith.constant 0 : i32
      %8 = arith.cmpi eq, %arg1, %c0_i32_2 : i32
      %9 = arith.extui %8 : i1 to i32
      %c0_i32_3 = arith.constant 0 : i32
      %10 = arith.cmpi ne, %9, %c0_i32_3 : i32
      scf.if %10 {
        %cst_21 = arith.constant 0.000000e+00 : f32
        %37 = vector.broadcast %cst_21 : f32 to vector<1x128xf32>
        %c0_22 = arith.constant 0 : index
        %c0_23 = arith.constant 0 : index
        %38 = vector.load %arg8[%c0_22, %c0_23] : memref<1x128xf32, #tpu.memory_space<vmem>>, vector<1x128xf32>
        tpu.vector_store %arg8[%c0_22, %c0_23], %37 {strides = array<i32>} : memref<1x128xf32, #tpu.memory_space<vmem>>, vector<1x128xf32>,
        %cst_24 = arith.constant 0.000000e+00 : f32
        %39 = vector.broadcast %cst_24 : f32 to vector<1x128xf32>
        %c0_25 = arith.constant 0 : index
        %c0_26 = arith.constant 0 : index
        %40 = vector.load %arg9[%c0_25, %c0_26] : memref<1x128xf32, #tpu.memory_space<vmem>>, vector<1x128xf32>
        tpu.vector_store %arg9[%c0_25, %c0_26], %39 {strides = array<i32>} : memref<1x128xf32, #tpu.memory_space<vmem>>, vector<1x128xf32>,
      } else {
      }
      %c0 = arith.constant 0 : index
      %c0_4 = arith.constant 0 : index
      %11 = vector.load %arg2[%c0, %c0_4] : memref<512x128xbf16, #tpu.memory_space<vmem>>, vector<512x128xbf16>
      %c0_5 = arith.constant 0 : index
      %c0_6 = arith.constant 0 : index
      %12 = vector.load %arg3[%c0_5, %c0_6] : memref<128x128xbf16, #tpu.memory_space<vmem>>, vector<128x128xbf16>
      %cst = arith.constant dense<0.000000e+00> : vector<512x128xf32>
      %13 = tpu.matmul %11, %12, %cst {dimension_numbers = #tpu.dot_dimension_numbers<[1], [0], [0], [1], [0, 0, 1, 1], [], []>} : vector<512x128xbf16>, vector<128x128xbf16>, vector<512x128xf32> -> vector<512x128xf32>
      %c512_i32_7 = arith.constant 512 : i32
      %14 = arith.muli %arg1, %c512_i32_7 : i32
      %15 = tpu.iota {dimensions = array<i32: 0>} : vector<512x1xi32>
      %16 = vector.broadcast %14 : i32 to vector<512x1xi32>
      %17 = arith.addi %16, %15 : vector<512x1xi32>
      %c512_i32_8 = arith.constant 512 : i32
      %18 = vector.broadcast %c512_i32_8 : i32 to vector<512x1xi32>
      %19 = arith.cmpi slt, %17, %18 : vector<512x1xi32>
      %cst_9 = arith.constant 0.000000e+00 : f32
      %20 = vector.shape_cast %19 : vector<512x1xi1> to vector<512x1xi1>
      %21 = vector.broadcast %20 : vector<512x1xi1> to vector<512x128xi1>
      %22 = vector.broadcast %cst_9 : f32 to vector<512x128xf32>
      %23 = arith.select %21, %13, %22 : vector<512x128xi1>, vector<512x128xf32>
      %c0_10 = arith.constant 0 : index
      %c0_11 = arith.constant 0 : index
      %24 = vector.load %arg8[%c0_10, %c0_11] : memref<1x128xf32, #tpu.memory_space<vmem>>, vector<1x128xf32>
      %cst_12 = arith.constant dense<0.000000e+00> : vector<128xf32>
      %25 = vector.multi_reduction <add>, %23, %cst_12 [0] : vector<512x128xf32> to vector<128xf32>
      %26 = vector.shape_cast %25 : vector<128xf32> to vector<1x128xf32>
      %27 = arith.addf %24, %26 : vector<1x128xf32>
      %c0_13 = arith.constant 0 : index
      %c0_14 = arith.constant 0 : index
      %28 = vector.load %arg8[%c0_13, %c0_14] : memref<1x128xf32, #tpu.memory_space<vmem>>, vector<1x128xf32>
      tpu.vector_store %arg8[%c0_13, %c0_14], %27 {strides = array<i32>} : memref<1x128xf32, #tpu.memory_space<vmem>>, vector<1x128xf32>,
      %c0_15 = arith.constant 0 : index
      %c0_16 = arith.constant 0 : index
      %29 = vector.load %arg9[%c0_15, %c0_16] : memref<1x128xf32, #tpu.memory_space<vmem>>, vector<1x128xf32>
      %30 = arith.mulf %23, %23 : vector<512x128xf32>
      %cst_17 = arith.constant dense<0.000000e+00> : vector<128xf32>
      %31 = vector.multi_reduction <add>, %30, %cst_17 [0] : vector<512x128xf32> to vector<128xf32>
      %32 = vector.shape_cast %31 : vector<128xf32> to vector<1x128xf32>
      %33 = arith.addf %29, %32 : vector<1x128xf32>
      %c0_18 = arith.constant 0 : index
      %c0_19 = arith.constant 0 : index
      %34 = vector.load %arg9[%c0_18, %c0_19] : memref<1x128xf32, #tpu.memory_space<vmem>>, vector<1x128xf32>
      tpu.vector_store %arg9[%c0_18, %c0_19], %33 {strides = array<i32>} : memref<1x128xf32, #tpu.memory_space<vmem>>, vector<1x128xf32>,
      %35 = arith.index_cast %1 : i32 to index
      %c0_20 = arith.constant 0 : index
      %36 = vector.load %arg7[%35, %c0_20] : memref<512x128xf32, #tpu.memory_space<vmem>>, vector<512x128xf32>
      tpu.vector_store %arg7[%35, %c0_20], %13 {strides = array<i32>} : memref<512x128xf32, #tpu.memory_space<vmem>>, vector<512x128xf32>,
    } else {
    }
    %c1_i32 = arith.constant 1 : i32
    %5 = arith.cmpi eq, %arg0, %c1_i32 : i32
    %6 = arith.extui %5 : i1 to i32
    %c0_i32_1 = arith.constant 0 : i32
    %7 = arith.cmpi ne, %6, %c0_i32_1 : i32
    scf.if %7 {
      %c0_i32_2 = arith.constant 0 : i32
      %8 = arith.cmpi eq, %arg1, %c0_i32_2 : i32
      %9 = arith.extui %8 : i1 to i32
      %c0_i32_3 = arith.constant 0 : i32
      %10 = arith.cmpi ne, %9, %c0_i32_3 : i32
      scf.if %10 {
        %c0_10 = arith.constant 0 : index
        %c0_11 = arith.constant 0 : index
        %20 = vector.load %arg8[%c0_10, %c0_11] : memref<1x128xf32, #tpu.memory_space<vmem>>, vector<1x128xf32>
        %cst = arith.constant 0.001953125 : f32
        %21 = vector.broadcast %cst : f32 to vector<1x128xf32>
        %22 = arith.mulf %20, %21 : vector<1x128xf32>
        %c0_12 = arith.constant 0 : index
        %c0_13 = arith.constant 0 : index
        %23 = vector.load %arg9[%c0_12, %c0_13] : memref<1x128xf32, #tpu.memory_space<vmem>>, vector<1x128xf32>
        %cst_14 = arith.constant 0.001953125 : f32
        %24 = vector.broadcast %cst_14 : f32 to vector<1x128xf32>
        %25 = arith.mulf %23, %24 : vector<1x128xf32>
        %26 = arith.mulf %22, %22 : vector<1x128xf32>
        %27 = arith.subf %25, %26 : vector<1x128xf32>
        %cst_15 = arith.constant 0.000000e+00 : f32
        %28 = vector.broadcast %cst_15 : f32 to vector<1x128xf32>
        %29 = arith.maximumf %27, %28 : vector<1x128xf32>
        %cst_16 = arith.constant 9.99999974E-6 : f32
        %30 = vector.broadcast %cst_16 : f32 to vector<1x128xf32>
        %31 = arith.addf %29, %30 : vector<1x128xf32>
        %32 = math.rsqrt %31 : vector<1x128xf32>
        %c0_17 = arith.constant 0 : index
        %c0_18 = arith.constant 0 : index
        %33 = vector.load %arg4[%c0_17, %c0_18] : memref<1x128xf32, #tpu.memory_space<vmem>>, vector<1x128xf32>
        %34 = arith.mulf %33, %32 : vector<1x128xf32>
        %c0_19 = arith.constant 0 : index
        %c0_20 = arith.constant 0 : index
        %35 = vector.load %arg10[%c0_19, %c0_20] : memref<1x128xf32, #tpu.memory_space<vmem>>, vector<1x128xf32>
        tpu.vector_store %arg10[%c0_19, %c0_20], %34 {strides = array<i32>} : memref<1x128xf32, #tpu.memory_space<vmem>>, vector<1x128xf32>,
        %c0_21 = arith.constant 0 : index
        %c0_22 = arith.constant 0 : index
        %36 = vector.load %arg5[%c0_21, %c0_22] : memref<1x128xf32, #tpu.memory_space<vmem>>, vector<1x128xf32>
        %c0_23 = arith.constant 0 : index
        %c0_24 = arith.constant 0 : index
        %37 = vector.load %arg10[%c0_23, %c0_24] : memref<1x128xf32, #tpu.memory_space<vmem>>, vector<1x128xf32>
        %38 = arith.mulf %22, %37 : vector<1x128xf32>
        %39 = arith.subf %36, %38 : vector<1x128xf32>
        %c0_25 = arith.constant 0 : index
        %c0_26 = arith.constant 0 : index
        %40 = vector.load %arg11[%c0_25, %c0_26] : memref<1x128xf32, #tpu.memory_space<vmem>>, vector<1x128xf32>
        tpu.vector_store %arg11[%c0_25, %c0_26], %39 {strides = array<i32>} : memref<1x128xf32, #tpu.memory_space<vmem>>, vector<1x128xf32>,
      } else {
      }
      %11 = arith.index_cast %1 : i32 to index
      %c0 = arith.constant 0 : index
      %12 = vector.load %arg7[%11, %c0] : memref<512x128xf32, #tpu.memory_space<vmem>>, vector<512x128xf32>
      %c0_4 = arith.constant 0 : index
      %c0_5 = arith.constant 0 : index
      %13 = vector.load %arg10[%c0_4, %c0_5] : memref<1x128xf32, #tpu.memory_space<vmem>>, vector<1x128xf32>
      %14 = vector.broadcast %13 : vector<1x128xf32> to vector<512x128xf32>
      %15 = arith.mulf %12, %14 : vector<512x128xf32>
      %c0_6 = arith.constant 0 : index
      %c0_7 = arith.constant 0 : index
      %16 = vector.load %arg11[%c0_6, %c0_7] : memref<1x128xf32, #tpu.memory_space<vmem>>, vector<1x128xf32>
      %17 = vector.broadcast %16 : vector<1x128xf32> to vector<512x128xf32>
      %18 = arith.addf %15, %17 : vector<512x128xf32>
      %c0_8 = arith.constant 0 : index
      %c0_9 = arith.constant 0 : index
      %19 = vector.load %arg6[%c0_8, %c0_9] : memref<512x128xf32, #tpu.memory_space<vmem>>, vector<512x128xf32>
      tpu.vector_store %arg6[%c0_8, %c0_9], %18 {strides = array<i32>} : memref<512x128xf32, #tpu.memory_space<vmem>>, vector<512x128xf32>,
    } else {
    }
    return
  }
  func.func @transform_0(%arg0: i32, %arg1: i32) -> (i32, i32) {
    %c1_i32 = arith.constant 1 : i32
    %0 = arith.subi %c1_i32, %arg0 : i32
    %1 = arith.muli %arg1, %0 : i32
    %c0_i32 = arith.constant 0 : i32
    %c0_i32_0 = arith.constant 0 : i32
    return %1, %c0_i32 : i32, i32
  }
  func.func @transform_1(%arg0: i32, %arg1: i32) -> (i32, i32) {
    %c0_i32 = arith.constant 0 : i32
    %c0_i32_0 = arith.constant 0 : i32
    %c0_i32_1 = arith.constant 0 : i32
    return %c0_i32, %c0_i32_0 : i32, i32
  }
  func.func @transform_2(%arg0: i32, %arg1: i32) -> (i32, i32) {
    %c0_i32 = arith.constant 0 : i32
    %c0_i32_0 = arith.constant 0 : i32
    %c0_i32_1 = arith.constant 0 : i32
    return %c0_i32, %c0_i32_0 : i32, i32
  }
  func.func @transform_3(%arg0: i32, %arg1: i32) -> (i32, i32) {
    %c0_i32 = arith.constant 0 : i32
    %c0_i32_0 = arith.constant 0 : i32
    %c0_i32_1 = arith.constant 0 : i32
    return %c0_i32, %c0_i32_0 : i32, i32
  }
  func.func @transform_4(%arg0: i32, %arg1: i32) -> (i32, i32) {
    %0 = arith.muli %arg1, %arg0 : i32
    %c0_i32 = arith.constant 0 : i32
    %c0_i32_0 = arith.constant 0 : i32
    return %0, %c0_i32 : i32, i32
  }
}

</mosaic_0001>

<llo_original>
// kernel: residual_branch_forward.2
$region0: #{residual_branch_forward.2}
  #allocation0 [shape = 'u32[]', space=smem, size = 0x4, offset = 0x4, fixed_abs, tag = 'smem constant byte address 0x4 - core index']
  #allocation1 [shape = 'u32[144,128]{1,0:T(1,128)}', space=vmem, size = 0x12000, scoped, tag = 'internal scratch']
  #allocation2 [shape = 'f32[512,128]{1,0:T(8,128)}', space=vmem, size = 0x40000, scoped, tag = 'scratch operand']
  #allocation3 [shape = 'f32[1,128]{1,0:T(1,128)}', space=vmem, size = 0x200, scoped, tag = 'scratch operand']
  #allocation4 [shape = 'f32[1,128]{1,0:T(1,128)}', space=vmem, size = 0x200, scoped, tag = 'scratch operand']
  #allocation5 [shape = 'f32[1,128]{1,0:T(1,128)}', space=vmem, size = 0x200, scoped, tag = 'scratch operand']
  #allocation6 [shape = 'f32[1,128]{1,0:T(1,128)}', space=vmem, size = 0x200, scoped, tag = 'scratch operand']
  %s0 = inlined_call_operand.vmem [shape: bf16[512,128], index: 0, kind: input, shape index: {}]
  %s1 = inlined_call_operand.vmem [shape: bf16[128,128], index: 1, kind: input, shape index: {}]
  %s2 = inlined_call_operand.vmem [shape: f32[1,128], index: 2, kind: input, shape index: {}]
  %s3 = inlined_call_operand.vmem [shape: f32[1,128], index: 3, kind: input, shape index: {}]
  %s4 = inlined_call_operand.vmem [shape: bf16[512,128], index: 4, kind: output, shape index: {}]
  %s5 = sld [smem:[#allocation0]]
  $region65: #{residual_branch_forward.2} parent=0
    _
  %s7 = ssub.s32 1, %s5
  %s8 = scalar_select 0, %s7, %s5
  loop: start=0, step=1, limit=4
  $region2: #{residual_branch_forward.2} parent=0 // loop_pre_header
    _
  $region3: #{residual_branch_forward.2} parent=0 // loop_header
    %s10 = sphi 0, %s14
    %p11 = scmp.ge.s32.totalorder %s10, 4
    %s17 = sphi 0, %s29
    %s18 = sphi 0, %s25
    %s19 = sphi 0, %s17
    %s20 = sphi 0, %s18
    %s21 = sphi 0, %s19
    %s22 = sphi 0, %s20
    %s36 = sphi 0, %s38
    %s39 = sphi 0, %s36
    %s40 = sphi 0, %s39
    %s56 = sphi 0, %s40
    %s60 = sphi 0, %s60
    %s62 = sphi 0, %s60
    %s63 = sphi 0, %s62
    %s77 = sphi 0, %s63
    %s81 = sphi 0, %s81
    %s83 = sphi 0, %s81
    %s84 = sphi 0, %s83
    %s98 = sphi 0, %s84
    %s102 = sphi 0, %s102
    %s104 = sphi 0, %s102
    %s105 = sphi 0, %s104
    %s119 = sphi 0, %s105
    %s127 = sphi 0, %s129
    %s130 = sphi 0, %s127
    %s131 = sphi 0, %s130
    %s147 = sphi 0, %s131
  $region4: #{residual_branch_forward.2} parent=0 // loop_header_branch
    %13 = sbr.rel (%p11) target = $region8
  $region5: #{residual_branch_forward.2} parent=0 // loop_body
    %s15 = ssub.s32 %s10, 1
    %s16 = ssub.s32 %s10, 2
    %s23 = sadd.s32 1, %s18
    %p24 = scmp.ge.s32.totalorder %s23, 1
    %s25 = scalar_select %p24, 0, %s23
    %s26 = sadd.s32 1, %s17
    %s27 = scalar_select %p24, %s26, %s17
    %p28 = scmp.ge.s32.totalorder %s27, 2
    %s29 = scalar_select %p28, 0, %s27
    %s30 = ssub.s32 1, %s17
    %s31 = smul.u32 %s18, %s30
    %s32 = ssub.s32 1, %s29
    %s33 = smul.u32 %s25, %s32
    %s34 = ssub.s32 %s31, %s33
    %p35 = scmp.eq.s32.totalorder %s34, 0
    %s37 = sadd.s32 %s36, 1
    %s38 = scalar_select %p35, %s36, %s37
    %p41 = pneg %p35
    %p42 = scmp.eq.s32.totalorder %s10, 1
    %p43 = por %p41, %p42
    %p44 = scmp.ne.s32.totalorder %s36, %s39
    %p45 = scmp.eq.s32.totalorder %s10, 0
    %p46 = por %p44, %p45
    %p47 = scmp.ne.s32.totalorder %s36, %s39
    %p48 = scmp.eq.s32.totalorder %s15, 1
    %p49 = por %p47, %p48
    %p50 = scmp.ne.s32.totalorder %s39, %s40
    %p51 = scmp.eq.s32.totalorder %s15, 0
    %p52 = por %p50, %p51
    %p53 = scmp.ne.s32.totalorder %s39, %s40
    %p54 = scmp.eq.s32.totalorder %s16, 1
    %p55 = por %p53, %p54
    %p57 = scmp.ne.s32.totalorder %s40, %s56
    %p58 = scmp.eq.s32.totalorder %s16, 0
    %p59 = por %p57, %p58
    %s61 = sadd.s32 %s60, 1
    %p64 = scmp.eq.s32.totalorder %s10, 1
    %p65 = scmp.ne.s32.totalorder %s60, %s62
    %p66 = scmp.eq.s32.totalorder %s10, 0
    %p67 = por %p65, %p66
    %p68 = scmp.ne.s32.totalorder %s60, %s62
    %p69 = scmp.eq.s32.totalorder %s15, 1
    %p70 = por %p68, %p69
    %p71 = scmp.ne.s32.totalorder %s62, %s63
    %p72 = scmp.eq.s32.totalorder %s15, 0
    %p73 = por %p71, %p72
    %p74 = scmp.ne.s32.totalorder %s62, %s63
    %p75 = scmp.eq.s32.totalorder %s16, 1
    %p76 = por %p74, %p75
    %p78 = scmp.ne.s32.totalorder %s63, %s77
    %p79 = scmp.eq.s32.totalorder %s16, 0
    %p80 = por %p78, %p79
    %s82 = sadd.s32 %s81, 1
    %p85 = scmp.eq.s32.totalorder %s10, 1
    %p86 = scmp.ne.s32.totalorder %s81, %s83
    %p87 = scmp.eq.s32.totalorder %s10, 0
    %p88 = por %p86, %p87
    %p89 = scmp.ne.s32.totalorder %s81, %s83
    %p90 = scmp.eq.s32.totalorder %s15, 1
    %p91 = por %p89, %p90
    %p92 = scmp.ne.s32.totalorder %s83, %s84
    %p93 = scmp.eq.s32.totalorder %s15, 0
    %p94 = por %p92, %p93
    %p95 = scmp.ne.s32.totalorder %s83, %s84
    %p96 = scmp.eq.s32.totalorder %s16, 1
    %p97 = por %p95, %p96
    %p99 = scmp.ne.s32.totalorder %s84, %s98
    %p100 = scmp.eq.s32.totalorder %s16, 0
    %p101 = por %p99, %p100
    %s103 = sadd.s32 %s102, 1
    %p106 = scmp.eq.s32.totalorder %s10, 1
    %p107 = scmp.ne.s32.totalorder %s102, %s104
    %p108 = scmp.eq.s32.totalorder %s10, 0
    %p109 = por %p107, %p108
    %p110 = scmp.ne.s32.totalorder %s102, %s104
    %p111 = scmp.eq.s32.totalorder %s15, 1
    %p112 = por %p110, %p111
    %p113 = scmp.ne.s32.totalorder %s104, %s105
    %p114 = scmp.eq.s32.totalorder %s15, 0
    %p115 = por %p113, %p114
    %p116 = scmp.ne.s32.totalorder %s104, %s105
    %p117 = scmp.eq.s32.totalorder %s16, 1
    %p118 = por %p116, %p117
    %p120 = scmp.ne.s32.totalorder %s105, %s119
    %p121 = scmp.eq.s32.totalorder %s16, 0
    %p122 = por %p120, %p121
    %s123 = smul.u32 %s18, %s17
    %s124 = smul.u32 %s25, %s29
    %s125 = ssub.s32 %s123, %s124
    %p126 = scmp.eq.s32.totalorder %s125, 0
    %s128 = sadd.s32 %s127, 1
    %s129 = scalar_select %p126, %s127, %s128
    %p132 = pneg %p126
    %p133 = scmp.eq.s32.totalorder %s10, 1
    %p134 = por %p132, %p133
    %p135 = scmp.ne.s32.totalorder %s127, %s130
    %p136 = scmp.eq.s32.totalorder %s10, 0
    %p137 = por %p135, %p136
    %p138 = scmp.ne.s32.totalorder %s127, %s130
    %p139 = scmp.eq.s32.totalorder %s15, 1
    %p140 = por %p138, %p139
    %p141 = scmp.ne.s32.totalorder %s130, %s131
    %p142 = scmp.eq.s32.totalorder %s15, 0
    %p143 = por %p141, %p142
    %p144 = scmp.ne.s32.totalorder %s130, %s131
    %p145 = scmp.eq.s32.totalorder %s16, 1
    %p146 = por %p144, %p145
    %p148 = scmp.ne.s32.totalorder %s131, %s147
    %p149 = scmp.eq.s32.totalorder %s16, 0
    %p150 = por %p148, %p149
    %p151 = scmp.le.s32.totalorder 1, %s10
    %p152 = scmp.lt.s32.totalorder %s10, 3
    %p153 = pnand %p151, %p152
    %p154 = pneg %p153
    // Predicated region
    $region9: #{residual_branch_forward.2} parent=5 // pred_check
      _
    $region10: #{residual_branch_forward.2} parent=5 // pred_check_branch
      %156 = sbr.rel (%p153) target = $region12
    $region11: #{residual_branch_forward.2} parent=5 // pred_region
      %s157 = ssub.s32 %s10, 1
      // Predicated region
      $region13: #{residual_branch_forward.2} parent=11 // pred_check
        %p158 = pneg %p73
      $region14: #{residual_branch_forward.2} parent=11 // pred_check_branch
        %160 = sbr.rel (%p158) target = $region16
      $region15: #{residual_branch_forward.2} parent=11 // pred_region
        _
      $region16: #{residual_branch_forward.2} parent=11 // pred_fallthru
        _
      // Predicated region
      $region17: #{residual_branch_forward.2} parent=11 // pred_check
        %p161 = pneg %p94
      $region18: #{residual_branch_forward.2} parent=11 // pred_check_branch
        %163 = sbr.rel (%p161) target = $region20
      $region19: #{residual_branch_forward.2} parent=11 // pred_region
        _
      $region20: #{residual_branch_forward.2} parent=11 // pred_fallthru
        _
      // Predicated region
      $region21: #{residual_branch_forward.2} parent=11 // pred_check
        %p164 = pneg %p115
      $region22: #{residual_branch_forward.2} parent=11 // pred_check_branch
        %166 = sbr.rel (%p164) target = $region24
      $region23: #{residual_branch_forward.2} parent=11 // pred_region
        _
      $region24: #{residual_branch_forward.2} parent=11 // pred_fallthru
        _
    $region12: #{residual_branch_forward.2} parent=5 // pred_fallthru
      _
    %p167 = scmp.lt.s32.totalorder %s10, 2
    // Predicated region
    $region25: #{residual_branch_forward.2} parent=5 // pred_check
      %p168 = pneg %p167
    $region26: #{residual_branch_forward.2} parent=5 // pred_check_branch
      %170 = sbr.rel (%p168) target = $region28
    $region27: #{residual_branch_forward.2} parent=5 // pred_region
      // Predicated region
      $region29: #{residual_branch_forward.2} parent=27 // pred_check
        %p171 = pneg %p46
      $region30: #{residual_branch_forward.2} parent=27 // pred_check_branch
        %173 = sbr.rel (%p171) target = $region32
      $region31: #{residual_branch_forward.2} parent=27 // pred_region
        %s174 = ssub.s32 1, %s17
        %s175 = smul.u32 %s18, %s174
        %s176 = smul.u32 64, %s175
        %p177 = scmp.lt.s32.totalorder %s176, 63
        %s178 = scalar_select %p177, %s176, 63
        %s179 = smul.addr %s178, 4
        %s180 = scalar_lea.vmem %s0, %s179
        %s181 = ssub.s32 1, %s17
        %s182 = smul.u32 %s18, %s181
        %s183 = smul.u32 64, %s182
      $region32: #{residual_branch_forward.2} parent=27 // pred_fallthru
        _
    $region28: #{residual_branch_forward.2} parent=5 // pred_fallthru
      _
    %p184 = scmp.le.s32.totalorder 1, %s10
    %p185 = scmp.lt.s32.totalorder %s10, 3
    %p186 = pnand %p184, %p185
    %p187 = pneg %p186
    // Predicated region
    $region33: #{residual_branch_forward.2} parent=5 // pred_check
      _
    $region34: #{residual_branch_forward.2} parent=5 // pred_check_branch
      %189 = sbr.rel (%p186) target = $region36
    $region35: #{residual_branch_forward.2} parent=5 // pred_region
      %s190 = ssub.s32 %s10, 1
      %s191 = ssub.s32 1, %s19
      %s192 = smul.u32 %s20, %s191
      %s193 = smul.u32 64, %s192
      %p194 = scmp.lt.s32.totalorder %s193, 63
      %s195 = scalar_select %p194, %s193, 63
      %s196 = smul.addr %s195, 4
      %s197 = scalar_lea.vmem %s0, %s196
      %p198 = pneg %p52
      %p199 = pneg %p49
      %p200 = pneg %p73
      %p201 = pneg %p70
      %p202 = pneg %p94
      %p203 = pneg %p91
      %p204 = pneg %p115
      %p205 = pneg %p112
      %p206 = pneg %p143
      %p207 = pneg %p140
      %s208 = smul.u32 %s20, %s19
      %s209 = smul.u32 64, %s208
      %p210 = scmp.lt.s32.totalorder %s209, 63
      %s211 = scalar_select %p210, %s209, 63
      %s212 = smul.addr %s211, 4
      %s213 = scalar_lea.vmem %s4, %s212
      %s214 = ssub.s32 1, %s19
      %s215 = smul.u32 %s20, %s214
      %s216 = smul.u32 64, %s215
      %p217 = scmp.lt.s32.totalorder %s216, 63
      %s218 = scalar_select %p217, %s216, 63
      %s219 = smul.addr %s218, 4
      %s220 = scalar_lea.vmem %s0, %s219
      %s221 = ssub.s32 1, %s19
      %s222 = smul.u32 %s20, %s221
      %s223 = smul.u32 64, %s222
      %s224 = smul.u32 %s20, %s19
      %s225 = smul.u32 64, %s224
      %p226 = scmp.lt.s32.totalorder %s225, 63
      %s227 = scalar_select %p226, %s225, 63
      %s228 = smul.addr %s227, 4
      %s229 = scalar_lea.vmem %s4, %s228
      %s230 = smul.u32 %s20, %s19
      %s231 = smul.u32 64, %s230
      %s233 = smul.u32 %s20, 512
      %p234 = scmp.eq.s32.totalorder %s19, 0
      // Predicated region
      $region37: #{residual_branch_forward.2} parent=35 // pred_check
        %p235 = pneg %p234
      $region38: #{residual_branch_forward.2} parent=35 // pred_check_branch
        %237 = sbr.rel (%p235) target = $region40
      $region39: #{residual_branch_forward.2} parent=35 // pred_region
        %p238 = scmp.eq.s32.totalorder %s20, 0
        // Predicated region
        $region41: #{residual_branch_forward.2} parent=39 // pred_check
          %p239 = pneg %p238
        $region42: #{residual_branch_forward.2} parent=39 // pred_check_branch
          %241 = sbr.rel (%p239) target = $region44
        $region43: #{residual_branch_forward.2} parent=39 // pred_region
          %242 = vst [vmem:[#allocation3] sm:$0x1] 0.0
          %243 = vst [vmem:[#allocation4] sm:$0x1] 0.0
        $region44: #{residual_branch_forward.2} parent=39 // pred_fallthru
          _
        %v244 = vld [vmem:[%s220] sm:$0xf]
        %v245 = vld [vmem:[%s220 + $0x4] sm:$0xf]
        %v246 = vld [vmem:[%s220 + $0x8] sm:$0xf]
        %v247 = vld [vmem:[%s220 + $0xc] sm:$0xf]
        %v248 = vld [vmem:[%s220 + $0x10] sm:$0xf]
        %v249 = vld [vmem:[%s220 + $0x14] sm:$0xf]
        %v250 = vld [vmem:[%s220 + $0x18] sm:$0xf]
        %v251 = vld [vmem:[%s220 + $0x1c] sm:$0xf]
        %v252 = vld [vmem:[%s220 + $0x20] sm:$0xf]
        %v253 = vld [vmem:[%s220 + $0x24] sm:$0xf]
        %v254 = vld [vmem:[%s220 + $0x28] sm:$0xf]
        %v255 = vld [vmem:[%s220 + $0x2c] sm:$0xf]
        %v256 = vld [vmem:[%s220 + $0x30] sm:$0xf]
        %v257 = vld [vmem:[%s220 + $0x34] sm:$0xf]
        %v258 = vld [vmem:[%s220 + $0x38] sm:$0xf]
        %v259 = vld [vmem:[%s220 + $0x3c] sm:$0xf]
        %v260 = vld [vmem:[%s220 + $0x40] sm:$0xf]
        %v261 = vld [vmem:[%s220 + $0x44] sm:$0xf]
        %v262 = vld [vmem:[%s220 + $0x48] sm:$0xf]
        %v263 = vld [vmem:[%s220 + $0x4c] sm:$0xf]
        %v264 = vld [vmem:[%s220 + $0x50] sm:$0xf]
        %v265 = vld [vmem:[%s220 + $0x54] sm:$0xf]
        %v266 = vld [vmem:[%s220 + $0x58] sm:$0xf]
        %v267 = vld [vmem:[%s220 + $0x5c] sm:$0xf]
        %v268 = vld [vmem:[%s220 + $0x60] sm:$0xf]
        %v269 = vld [vmem:[%s220 + $0x64] sm:$0xf]
        %v270 = vld [vmem:[%s220 + $0x68] sm:$0xf]
        %v271 = vld [vmem:[%s220 + $0x6c] sm:$0xf]
        %v272 = vld [vmem:[%s220 + $0x70] sm:$0xf]
        %v273 = vld [vmem:[%s220 + $0x74] sm:$0xf]
        %v274 = vld [vmem:[%s220 + $0x78] sm:$0xf]
        %v275 = vld [vmem:[%s220 + $0x7c] sm:$0xf]
        %v276 = vld [vmem:[%s220 + $0x80] sm:$0xf]
        %v277 = vld [vmem:[%s220 + $0x84] sm:$0xf]
        %v278 = vld [vmem:[%s220 + $0x88] sm:$0xf]
        %v279 = vld [vmem:[%s220 + $0x8c] sm:$0xf]
        %v280 = vld [vmem:[%s220 + $0x90] sm:$0xf]
        %v281 = vld [vmem:[%s220 + $0x94] sm:$0xf]
        %v282 = vld [vmem:[%s220 + $0x98] sm:$0xf]
        %v283 = vld [vmem:[%s220 + $0x9c] sm:$0xf]
        %v284 = vld [vmem:[%s220 + $0xa0] sm:$0xf]
        %v285 = vld [vmem:[%s220 + $0xa4] sm:$0xf]
        %v286 = vld [vmem:[%s220 + $0xa8] sm:$0xf]
        %v287 = vld [vmem:[%s220 + $0xac] sm:$0xf]
        %v288 = vld [vmem:[%s220 + $0xb0] sm:$0xf]
        %v289 = vld [vmem:[%s220 + $0xb4] sm:$0xf]
        %v290 = vld [vmem:[%s220 + $0xb8] sm:$0xf]
        %v291 = vld [vmem:[%s220 + $0xbc] sm:$0xf]
        %v292 = vld [vmem:[%s220 + $0xc0] sm:$0xf]
        %v293 = vld [vmem:[%s220 + $0xc4] sm:$0xf]
        %v294 = vld [vmem:[%s220 + $0xc8] sm:$0xf]
        %v295 = vld [vmem:[%s220 + $0xcc] sm:$0xf]
        %v296 = vld [vmem:[%s220 + $0xd0] sm:$0xf]
        %v297 = vld [vmem:[%s220 + $0xd4] sm:$0xf]
        %v298 = vld [vmem:[%s220 + $0xd8] sm:$0xf]
        %v299 = vld [vmem:[%s220 + $0xdc] sm:$0xf]
        %v300 = vld [vmem:[%s220 + $0xe0] sm:$0xf]
        %v301 = vld [vmem:[%s220 + $0xe4] sm:$0xf]
        %v302 = vld [vmem:[%s220 + $0xe8] sm:$0xf]
        %v303 = vld [vmem:[%s220 + $0xec] sm:$0xf]
        %v304 = vld [vmem:[%s220 + $0xf0] sm:$0xf]
        %v305 = vld [vmem:[%s220 + $0xf4] sm:$0xf]
        %v306 = vld [vmem:[%s220 + $0xf8] sm:$0xf]
        %v307 = vld [vmem:[%s220 + $0xfc] sm:$0xf]
        %v308 = vld [vmem:[%s1] sm:$0xf]
        %v309 = vld [vmem:[%s1 + $0x4] sm:$0xf]
        %v310 = vld [vmem:[%s1 + $0x8] sm:$0xf]
        %v311 = vld [vmem:[%s1 + $0xc] sm:$0xf]
        %v312 = vld [vmem:[%s1 + $0x10] sm:$0xf]
        %v313 = vld [vmem:[%s1 + $0x14] sm:$0xf]
        %v314 = vld [vmem:[%s1 + $0x18] sm:$0xf]
        %v315 = vld [vmem:[%s1 + $0x1c] sm:$0xf]
        %v316 = vld [vmem:[%s1 + $0x20] sm:$0xf]
        %v317 = vld [vmem:[%s1 + $0x24] sm:$0xf]
        %v318 = vld [vmem:[%s1 + $0x28] sm:$0xf]
        %v319 = vld [vmem:[%s1 + $0x2c] sm:$0xf]
        %v320 = vld [vmem:[%s1 + $0x30] sm:$0xf]
        %v321 = vld [vmem:[%s1 + $0x34] sm:$0xf]
        %v322 = vld [vmem:[%s1 + $0x38] sm:$0xf]
        %v323 = vld [vmem:[%s1 + $0x3c] sm:$0xf]
        %v388 = vunpack.c.l.b16 %v244
        %v389 = vunpack.c.l.b16 %v245
        %v390 = vunpack.c.l.b16 %v246
        %v391 = vunpack.c.l.b16 %v247
        %v392 = vunpack.c.l.b16 %v248
        %v393 = vunpack.c.l.b16 %v249
        %v394 = vunpack.c.l.b16 %v250
        %v395 = vunpack.c.l.b16 %v251
        %v396 = vunpack.c.l.b16 %v252
        %v397 = vunpack.c.l.b16 %v253
        %v398 = vunpack.c.l.b16 %v254
        %v399 = vunpack.c.l.b16 %v255
        %v400 = vunpack.c.l.b16 %v256
        %v401 = vunpack.c.l.b16 %v257
        %v402 = vunpack.c.l.b16 %v258
        %v403 = vunpack.c.l.b16 %v259
        %v404 = vunpack.c.l.b16 %v260
        %v405 = vunpack.c.l.b16 %v261
        %v406 = vunpack.c.l.b16 %v262
        %v407 = vunpack.c.l.b16 %v263
        %v408 = vunpack.c.l.b16 %v264
        %v409 = vunpack.c.l.b16 %v265
        %v410 = vunpack.c.l.b16 %v266
        %v411 = vunpack.c.l.b16 %v267
        %v412 = vunpack.c.l.b16 %v268
        %v413 = vunpack.c.l.b16 %v269
        %v414 = vunpack.c.l.b16 %v270
        %v415 = vunpack.c.l.b16 %v271
        %v416 = vunpack.c.l.b16 %v272
        %v417 = vunpack.c.l.b16 %v273
        %v418 = vunpack.c.l.b16 %v274
        %v419 = vunpack.c.l.b16 %v275
        %v420 = vunpack.c.l.b16 %v276
        %v421 = vunpack.c.l.b16 %v277
        %v422 = vunpack.c.l.b16 %v278
        %v423 = vunpack.c.l.b16 %v279
        %v424 = vunpack.c.l.b16 %v280
        %v425 = vunpack.c.l.b16 %v281
        %v426 = vunpack.c.l.b16 %v282
        %v427 = vunpack.c.l.b16 %v283
        %v428 = vunpack.c.l.b16 %v284
        %v429 = vunpack.c.l.b16 %v285
        %v430 = vunpack.c.l.b16 %v286
        %v431 = vunpack.c.l.b16 %v287
        %v432 = vunpack.c.l.b16 %v288
        %v433 = vunpack.c.l.b16 %v289
        %v434 = vunpack.c.l.b16 %v290
        %v435 = vunpack.c.l.b16 %v291
        %v436 = vunpack.c.l.b16 %v292
        %v437 = vunpack.c.l.b16 %v293
        %v438 = vunpack.c.l.b16 %v294
        %v439 = vunpack.c.l.b16 %v295
        %v440 = vunpack.c.l.b16 %v296
        %v441 = vunpack.c.l.b16 %v297
        %v442 = vunpack.c.l.b16 %v298
        %v443 = vunpack.c.l.b16 %v299
        %v444 = vunpack.c.l.b16 %v300
        %v445 = vunpack.c.l.b16 %v301
        %v446 = vunpack.c.l.b16 %v302
        %v447 = vunpack.c.l.b16 %v303
        %v448 = vunpack.c.l.b16 %v304
        %v449 = vunpack.c.l.b16 %v305
        %v450 = vunpack.c.l.b16 %v306
        %v451 = vunpack.c.l.b16 %v307
        %v452 = vpack.c.b16 %v389, %v388
        %v453 = vpack.c.b16 %v391, %v390
        %v454 = vpack.c.b16 %v393, %v392
        %v455 = vpack.c.b16 %v395, %v394
        %v456 = vpack.c.b16 %v397, %v396
        %v457 = vpack.c.b16 %v399, %v398
        %v458 = vpack.c.b16 %v401, %v400
        %v459 = vpack.c.b16 %v403, %v402
        %v460 = vpack.c.b16 %v405, %v404
        %v461 = vpack.c.b16 %v407, %v406
        %v462 = vpack.c.b16 %v409, %v408
        %v463 = vpack.c.b16 %v411, %v410
        %v464 = vpack.c.b16 %v413, %v412
        %v465 = vpack.c.b16 %v415, %v414
        %v466 = vpack.c.b16 %v417, %v416
        %v467 = vpack.c.b16 %v419, %v418
        %v468 = vpack.c.b16 %v421, %v420
        %v469 = vpack.c.b16 %v423, %v422
        %v470 = vpack.c.b16 %v425, %v424
        %v471 = vpack.c.b16 %v427, %v426
        %v472 = vpack.c.b16 %v429, %v428
        %v473 = vpack.c.b16 %v431, %v430
        %v474 = vpack.c.b16 %v433, %v432
        %v475 = vpack.c.b16 %v435, %v434
        %v476 = vpack.c.b16 %v437, %v436
        %v477 = vpack.c.b16 %v439, %v438
        %v478 = vpack.c.b16 %v441, %v440
        %v479 = vpack.c.b16 %v443, %v442
        %v480 = vpack.c.b16 %v445, %v444
        %v481 = vpack.c.b16 %v447, %v446
        %v482 = vpack.c.b16 %v449, %v448
        %v483 = vpack.c.b16 %v451, %v450
        %v532 = vunpack.c.l.b16 %v308
        %v533 = vunpack.c.l.b16 %v309
        %v534 = vunpack.c.l.b16 %v310
        %v535 = vunpack.c.l.b16 %v311
        %v536 = vunpack.c.l.b16 %v312
        %v537 = vunpack.c.l.b16 %v313
        %v538 = vunpack.c.l.b16 %v314
        %v539 = vunpack.c.l.b16 %v315
        %v540 = vunpack.c.l.b16 %v316
        %v541 = vunpack.c.l.b16 %v317
        %v542 = vunpack.c.l.b16 %v318
        %v543 = vunpack.c.l.b16 %v319
        %v544 = vunpack.c.l.b16 %v320
        %v545 = vunpack.c.l.b16 %v321
        %v546 = vunpack.c.l.b16 %v322
        %v547 = vunpack.c.l.b16 %v323
        %v548 = vpack.c.b16 %v533, %v532
        %v549 = vpack.c.b16 %v535, %v534
        %v550 = vpack.c.b16 %v537, %v536
        %v551 = vpack.c.b16 %v539, %v538
        %v552 = vpack.c.b16 %v541, %v540
        %v553 = vpack.c.b16 %v543, %v542
        %v554 = vpack.c.b16 %v545, %v544
        %v555 = vpack.c.b16 %v547, %v546
        %564 = vmatprep.subr.bf16.mxu0 0
        %565 = vmatpush1.bf16.msra.mxu0 %v548
        %566 = vmatprep.subr.bf16.mxu0 0
        %567 = vmatpush1.bf16.msra.mxu0 %v549
        %568 = vmatprep.subr.bf16.mxu0 0
        %569 = vmatpush1.bf16.msra.mxu0 %v550
        %570 = vmatprep.subr.bf16.mxu0 0
        %571 = vmatpush1.bf16.msra.mxu0 %v551
        %572 = vmatprep.subr.bf16.mxu0 0
        %573 = vmatpush1.bf16.msra.mxu0 %v552
        %574 = vmatprep.subr.bf16.mxu0 0
        %575 = vmatpush1.bf16.msra.mxu0 %v553
        %576 = vmatprep.subr.bf16.mxu0 0
        %577 = vmatpush1.bf16.msra.mxu0 %v554
        %578 = vmatprep.subr.bf16.mxu0 0
        %579 = vmatpush1.bf16.msra.mxu0 %v555
        %580 = vmatprep.subr.bf16.mxu0 0
        %581 = vmatpush1.bf16.msra.mxu0 0
        %582 = vmatprep.subr.bf16.mxu0 0
        %583 = vmatpush1.bf16.msra.mxu0 0
        %584 = vmatprep.subr.bf16.mxu0 0
        %585 = vmatpush1.bf16.msra.mxu0 0
        %586 = vmatprep.subr.bf16.mxu0 0
        %587 = vmatpush1.bf16.msra.mxu0 0
        %588 = vmatprep.subr.bf16.mxu0 0
        %589 = vmatpush1.bf16.msra.mxu0 0
        %590 = vmatprep.subr.bf16.mxu0 0
        %591 = vmatpush1.bf16.msra.mxu0 0
        %592 = vmatprep.subr.bf16.mxu0 0
        %593 = vmatpush1.bf16.msra.mxu0 0
        %594 = vmatprep.subr.bf16.mxu0 0
        %595 = vmatpush1.bf16.msra.mxu0 0
        %596 = vmatprep.mubr.bf16.mxu0 0
        %597 = vmatmul.mubr.bf16.gmra.mrb[0].mxu0 %v452
        %v598 = vpop.f32.mrb[0].mxu0
        %v599 = vadd.f32 0.0, %v598
        %v600 = vpop.f32.mrb[0].mxu0
        %v601 = vpop.f32.mrb[0].mxu0
        %v602 = vadd.f32 0.0, %v601
        %v603 = vpop.f32.mrb[0].mxu0
        %604 = vmatprep.mubr.bf16.mxu0 0
        %605 = vmatmul.mubr.bf16.gmra.mrb[0].mxu0 %v453
        %v606 = vpop.f32.mrb[0].mxu0
        %v607 = vadd.f32 0.0, %v606
        %v608 = vpop.f32.mrb[0].mxu0
        %v609 = vpop.f32.mrb[0].mxu0
        %v610 = vadd.f32 0.0, %v609
        %v611 = vpop.f32.mrb[0].mxu0
        %612 = vmatprep.mubr.bf16.mxu0 0
        %613 = vmatmul.mubr.bf16.gmra.mrb[0].mxu0 %v454
        %v614 = vpop.f32.mrb[0].mxu0
        %v615 = vadd.f32 0.0, %v614
        %v616 = vpop.f32.mrb[0].mxu0
        %v617 = vpop.f32.mrb[0].mxu0
        %v618 = vadd.f32 0.0, %v617
        %v619 = vpop.f32.mrb[0].mxu0
        %620 = vmatprep.mubr.bf16.mxu0 0
        %621 = vmatmul.mubr.bf16.gmra.mrb[0].mxu0 %v455
        %v622 = vpop.f32.mrb[0].mxu0
        %v623 = vadd.f32 0.0, %v622
        %v624 = vpop.f32.mrb[0].mxu0
        %v625 = vpop.f32.mrb[0].mxu0
        %v626 = vadd.f32 0.0, %v625
        %v627 = vpop.f32.mrb[0].mxu0
        %628 = vmatprep.mubr.bf16.mxu0 0
        %629 = vmatmul.mubr.bf16.gmra.mrb[0].mxu0 %v456
        %v630 = vpop.f32.mrb[0].mxu0
        %v631 = vadd.f32 0.0, %v630
        %v632 = vpop.f32.mrb[0].mxu0
        %v633 = vpop.f32.mrb[0].mxu0
        %v634 = vadd.f32 0.0, %v633
        %v635 = vpop.f32.mrb[0].mxu0
        %636 = vmatprep.mubr.bf16.mxu0 0
        %637 = vmatmul.mubr.bf16.gmra.mrb[0].mxu0 %v457
        %v638 = vpop.f32.mrb[0].mxu0
        %v639 = vadd.f32 0.0, %v638
        %v640 = vpop.f32.mrb[0].mxu0
        %v641 = vpop.f32.mrb[0].mxu0
        %v642 = vadd.f32 0.0, %v641
        %v643 = vpop.f32.mrb[0].mxu0
        %644 = vmatprep.mubr.bf16.mxu0 0
        %645 = vmatmul.mubr.bf16.gmra.mrb[0].mxu0 %v458
        %v646 = vpop.f32.mrb[0].mxu0
        %v647 = vadd.f32 0.0, %v646
        %v648 = vpop.f32.mrb[0].mxu0
        %v649 = vpop.f32.mrb[0].mxu0
        %v650 = vadd.f32 0.0, %v649
        %v651 = vpop.f32.mrb[0].mxu0
        %652 = vmatprep.mubr.bf16.mxu0 0
        %653 = vmatmul.mubr.bf16.gmra.mrb[0].mxu0 %v459
        %v654 = vpop.f32.mrb[0].mxu0
        %v655 = vadd.f32 0.0, %v654
        %v656 = vpop.f32.mrb[0].mxu0
        %v657 = vpop.f32.mrb[0].mxu0
        %v658 = vadd.f32 0.0, %v657
        %v659 = vpop.f32.mrb[0].mxu0
        %660 = vmatprep.mubr.bf16.mxu0 0
        %661 = vmatmul.mubr.bf16.gmra.mrb[0].mxu0 %v460
        %v662 = vpop.f32.mrb[0].mxu0
        %v663 = vadd.f32 0.0, %v662
        %v664 = vpop.f32.mrb[0].mxu0
        %v665 = vpop.f32.mrb[0].mxu0
        %v666 = vadd.f32 0.0, %v665
        %v667 = vpop.f32.mrb[0].mxu0
        %668 = vmatprep.mubr.bf16.mxu0 0
        %669 = vmatmul.mubr.bf16.gmra.mrb[0].mxu0 %v461
        %v670 = vpop.f32.mrb[0].mxu0
        %v671 = vadd.f32 0.0, %v670
        %v672 = vpop.f32.mrb[0].mxu0
        %v673 = vpop.f32.mrb[0].mxu0
        %v674 = vadd.f32 0.0, %v673
        %v675 = vpop.f32.mrb[0].mxu0
        %676 = vmatprep.mubr.bf16.mxu0 0
        %677 = vmatmul.mubr.bf16.gmra.mrb[0].mxu0 %v462
        %v678 = vpop.f32.mrb[0].mxu0
        %v679 = vadd.f32 0.0, %v678
        %v680 = vpop.f32.mrb[0].mxu0
        %v681 = vpop.f32.mrb[0].mxu0
        %v682 = vadd.f32 0.0, %v681
        %v683 = vpop.f32.mrb[0].mxu0
        %684 = vmatprep.mubr.bf16.mxu0 0
        %685 = vmatmul.mubr.bf16.gmra.mrb[0].mxu0 %v463
        %v686 = vpop.f32.mrb[0].mxu0
        %v687 = vadd.f32 0.0, %v686
        %v688 = vpop.f32.mrb[0].mxu0
        %v689 = vpop.f32.mrb[0].mxu0
        %v690 = vadd.f32 0.0, %v689
        %v691 = vpop.f32.mrb[0].mxu0
        %692 = vmatprep.mubr.bf16.mxu0 0
        %693 = vmatmul.mubr.bf16.gmra.mrb[0].mxu0 %v464
        %v694 = vpop.f32.mrb[0].mxu0
        %v695 = vadd.f32 0.0, %v694
        %v696 = vpop.f32.mrb[0].mxu0
        %v697 = vpop.f32.mrb[0].mxu0
        %v698 = vadd.f32 0.0, %v697
        %v699 = vpop.f32.mrb[0].mxu0
        %700 = vmatprep.mubr.bf16.mxu0 0
        %701 = vmatmul.mubr.bf16.gmra.mrb[0].mxu0 %v465
        %v702 = vpop.f32.mrb[0].mxu0
        %v703 = vadd.f32 0.0, %v702
        %v704 = vpop.f32.mrb[0].mxu0
        %v705 = vpop.f32.mrb[0].mxu0
        %v706 = vadd.f32 0.0, %v705
        %v707 = vpop.f32.mrb[0].mxu0
        %708 = vmatprep.mubr.bf16.mxu0 0
        %709 = vmatmul.mubr.bf16.gmra.mrb[0].mxu0 %v466
        %v710 = vpop.f32.mrb[0].mxu0
        %v711 = vadd.f32 0.0, %v710
        %v712 = vpop.f32.mrb[0].mxu0
        %v713 = vpop.f32.mrb[0].mxu0
        %v714 = vadd.f32 0.0, %v713
        %v715 = vpop.f32.mrb[0].mxu0
        %716 = vmatprep.mubr.bf16.mxu0 0
        %717 = vmatmul.mubr.bf16.gmra.mrb[0].mxu0 %v467
        %v718 = vpop.f32.mrb[0].mxu0
        %v719 = vadd.f32 0.0, %v718
        %v720 = vpop.f32.mrb[0].mxu0
        %v721 = vpop.f32.mrb[0].mxu0
        %v722 = vadd.f32 0.0, %v721
        %v723 = vpop.f32.mrb[0].mxu0
        %724 = vmatprep.mubr.bf16.mxu0 0
        %725 = vmatmul.mubr.bf16.gmra.mrb[0].mxu0 %v468
        %v726 = vpop.f32.mrb[0].mxu0
        %v727 = vadd.f32 0.0, %v726
        %v728 = vpop.f32.mrb[0].mxu0
        %v729 = vpop.f32.mrb[0].mxu0
        %v730 = vadd.f32 0.0, %v729
        %v731 = vpop.f32.mrb[0].mxu0
        %732 = vmatprep.mubr.bf16.mxu0 0
        %733 = vmatmul.mubr.bf16.gmra.mrb[0].mxu0 %v469
        %v734 = vpop.f32.mrb[0].mxu0
        %v735 = vadd.f32 0.0, %v734
        %v736 = vpop.f32.mrb[0].mxu0
        %v737 = vpop.f32.mrb[0].mxu0
        %v738 = vadd.f32 0.0, %v737
        %v739 = vpop.f32.mrb[0].mxu0
        %740 = vmatprep.mubr.bf16.mxu0 0
        %741 = vmatmul.mubr.bf16.gmra.mrb[0].mxu0 %v470
        %v742 = vpop.f32.mrb[0].mxu0
        %v743 = vadd.f32 0.0, %v742
        %v744 = vpop.f32.mrb[0].mxu0
        %v745 = vpop.f32.mrb[0].mxu0
        %v746 = vadd.f32 0.0, %v745
        %v747 = vpop.f32.mrb[0].mxu0
        %748 = vmatprep.mubr.bf16.mxu0 0
        %749 = vmatmul.mubr.bf16.gmra.mrb[0].mxu0 %v471
        %v750 = vpop.f32.mrb[0].mxu0
        %v751 = vadd.f32 0.0, %v750
        %v752 = vpop.f32.mrb[0].mxu0
        %v753 = vpop.f32.mrb[0].mxu0
        %v754 = vadd.f32 0.0, %v753
        %v755 = vpop.f32.mrb[0].mxu0
        %756 = vmatprep.mubr.bf16.mxu0 0
        %757 = vmatmul.mubr.bf16.gmra.mrb[0].mxu0 %v472
        %v758 = vpop.f32.mrb[0].mxu0
        %v759 = vadd.f32 0.0, %v758
        %v760 = vpop.f32.mrb[0].mxu0
        %v761 = vpop.f32.mrb[0].mxu0
        %v762 = vadd.f32 0.0, %v761
        %v763 = vpop.f32.mrb[0].mxu0
        %764 = vmatprep.mubr.bf16.mxu0 0
        %765 = vmatmul.mubr.bf16.gmra.mrb[0].mxu0 %v473
        %v766 = vpop.f32.mrb[0].mxu0
        %v767 = vadd.f32 0.0, %v766
        %v768 = vpop.f32.mrb[0].mxu0
        %v769 = vpop.f32.mrb[0].mxu0
        %v770 = vadd.f32 0.0, %v769
        %v771 = vpop.f32.mrb[0].mxu0
        %772 = vmatprep.mubr.bf16.mxu0 0
        %773 = vmatmul.mubr.bf16.gmra.mrb[0].mxu0 %v474
        %v774 = vpop.f32.mrb[0].mxu0
        %v775 = vadd.f32 0.0, %v774
        %v776 = vpop.f32.mrb[0].mxu0
        %v777 = vpop.f32.mrb[0].mxu0
        %v778 = vadd.f32 0.0, %v777
        %v779 = vpop.f32.mrb[0].mxu0
        %780 = vmatprep.mubr.bf16.mxu0 0
        %781 = vmatmul.mubr.bf16.gmra.mrb[0].mxu0 %v475
        %v782 = vpop.f32.mrb[0].mxu0
        %v783 = vadd.f32 0.0, %v782
        %v784 = vpop.f32.mrb[0].mxu0
        %v785 = vpop.f32.mrb[0].mxu0
        %v786 = vadd.f32 0.0, %v785
        %v787 = vpop.f32.mrb[0].mxu0
        %788 = vmatprep.mubr.bf16.mxu0 0
        %789 = vmatmul.mubr.bf16.gmra.mrb[0].mxu0 %v476
        %v790 = vpop.f32.mrb[0].mxu0
        %v791 = vadd.f32 0.0, %v790
        %v792 = vpop.f32.mrb[0].mxu0
        %v793 = vpop.f32.mrb[0].mxu0
        %v794 = vadd.f32 0.0, %v793
        %v795 = vpop.f32.mrb[0].mxu0
        %796 = vmatprep.mubr.bf16.mxu0 0
        %797 = vmatmul.mubr.bf16.gmra.mrb[0].mxu0 %v477
        %v798 = vpop.f32.mrb[0].mxu0
        %v799 = vadd.f32 0.0, %v798
        %v800 = vpop.f32.mrb[0].mxu0
        %v801 = vpop.f32.mrb[0].mxu0
        %v802 = vadd.f32 0.0, %v801
        %v803 = vpop.f32.mrb[0].mxu0
        %804 = vmatprep.mubr.bf16.mxu0 0
        %805 = vmatmul.mubr.bf16.gmra.mrb[0].mxu0 %v478
        %v806 = vpop.f32.mrb[0].mxu0
        %v807 = vadd.f32 0.0, %v806
        %v808 = vpop.f32.mrb[0].mxu0
        %v809 = vpop.f32.mrb[0].mxu0
        %v810 = vadd.f32 0.0, %v809
        %v811 = vpop.f32.mrb[0].mxu0
        %812 = vmatprep.mubr.bf16.mxu0 0
        %813 = vmatmul.mubr.bf16.gmra.mrb[0].mxu0 %v479
        %v814 = vpop.f32.mrb[0].mxu0
        %v815 = vadd.f32 0.0, %v814
        %v816 = vpop.f32.mrb[0].mxu0
        %v817 = vpop.f32.mrb[0].mxu0
        %v818 = vadd.f32 0.0, %v817
        %v819 = vpop.f32.mrb[0].mxu0
        %820 = vmatprep.mubr.bf16.mxu0 0
        %821 = vmatmul.mubr.bf16.gmra.mrb[0].mxu0 %v480
        %v822 = vpop.f32.mrb[0].mxu0
        %v823 = vadd.f32 0.0, %v822
        %v824 = vpop.f32.mrb[0].mxu0
        %v825 = vpop.f32.mrb[0].mxu0
        %v826 = vadd.f32 0.0, %v825
        %v827 = vpop.f32.mrb[0].mxu0
        %828 = vmatprep.mubr.bf16.mxu0 0
        %829 = vmatmul.mubr.bf16.gmra.mrb[0].mxu0 %v481
        %v830 = vpop.f32.mrb[0].mxu0
        %v831 = vadd.f32 0.0, %v830
        %v832 = vpop.f32.mrb[0].mxu0
        %v833 = vpop.f32.mrb[0].mxu0
        %v834 = vadd.f32 0.0, %v833
        %v835 = vpop.f32.mrb[0].mxu0
        %836 = vmatprep.mubr.bf16.mxu0 0
        %837 = vmatmul.mubr.bf16.gmra.mrb[0].mxu0 %v482
        %v838 = vpop.f32.mrb[0].mxu0
        %v839 = vadd.f32 0.0, %v838
        %v840 = vpop.f32.mrb[0].mxu0
        %v841 = vpop.f32.mrb[0].mxu0
        %v842 = vadd.f32 0.0, %v841
        %v843 = vpop.f32.mrb[0].mxu0
        %844 = vmatprep.mubr.bf16.mxu0 0
        %845 = vmatmul.mubr.bf16.gmra.mrb[0].mxu0 %v483
        %v846 = vpop.f32.mrb[0].mxu0
        %v847 = vadd.f32 0.0, %v846
        %v848 = vpop.f32.mrb[0].mxu0
        %v849 = vpop.f32.mrb[0].mxu0
        %v850 = vadd.f32 0.0, %v849
        %v851 = vpop.f32.mrb[0].mxu0
        %852 = vdwg.mxu0
        %v853 = vlaneseq
        %v854 = vshrl.u32 %v853, 7
        %v855 = vadd.s32 %v854, 8
        %v856 = vadd.s32 %v854, 16
        %v857 = vadd.s32 %v854, 24
        %v858 = vadd.s32 %v854, 32
        %v859 = vadd.s32 %v854, 40
        %v860 = vadd.s32 %v854, 48
        %v861 = vadd.s32 %v854, 56
        %v862 = vadd.s32 %v854, 64
        %v863 = vadd.s32 %v854, 72
        %v864 = vadd.s32 %v854, 80
        %v865 = vadd.s32 %v854, 88
        %v866 = vadd.s32 %v854, 96
        %v867 = vadd.s32 %v854, 104
        %v868 = vadd.s32 %v854, 112
        %v869 = vadd.s32 %v854, 120
        %v870 = vadd.s32 %v854, 128
        %v871 = vadd.s32 %v854, 136
        %v872 = vadd.s32 %v854, 144
        %v873 = vadd.s32 %v854, 152
        %v874 = vadd.s32 %v854, 160
        %v875 = vadd.s32 %v854, 168
        %v876 = vadd.s32 %v854, 176
        %v877 = vadd.s32 %v854, 184
        %v878 = vadd.s32 %v854, 192
        %v879 = vadd.s32 %v854, 200
        %v880 = vadd.s32 %v854, 208
        %v881 = vadd.s32 %v854, 216
        %v882 = vadd.s32 %v854, 224
        %v883 = vadd.s32 %v854, 232
        %v884 = vadd.s32 %v854, 240
        %v885 = vadd.s32 %v854, 248
        %v886 = vadd.s32 %v854, 256
        %v887 = vadd.s32 %v854, 264
        %v888 = vadd.s32 %v854, 272
        %v889 = vadd.s32 %v854, 280
        %v890 = vadd.s32 %v854, 288
        %v891 = vadd.s32 %v854, 296
        %v892 = vadd.s32 %v854, 304
        %v893 = vadd.s32 %v854, 312
        %v894 = vadd.s32 %v854, 320
        %v895 = vadd.s32 %v854, 328
        %v896 = vadd.s32 %v854, 336
        %v897 = vadd.s32 %v854, 344
        %v898 = vadd.s32 %v854, 352
        %v899 = vadd.s32 %v854, 360
        %v900 = vadd.s32 %v854, 368
        %v901 = vadd.s32 %v854, 376
        %v902 = vadd.s32 %v854, 384
        %v903 = vadd.s32 %v854, 392
        %v904 = vadd.s32 %v854, 400
        %v905 = vadd.s32 %v854, 408
        %v906 = vadd.s32 %v854, 416
        %v907 = vadd.s32 %v854, 424
        %v908 = vadd.s32 %v854, 432
        %v909 = vadd.s32 %v854, 440
        %v910 = vadd.s32 %v854, 448
        %v911 = vadd.s32 %v854, 456
        %v912 = vadd.s32 %v854, 464
        %v913 = vadd.s32 %v854, 472
        %v914 = vadd.s32 %v854, 480
        %v915 = vadd.s32 %v854, 488
        %v916 = vadd.s32 %v854, 496
        %v917 = vadd.s32 %v854, 504
        %v918 = vstv %s233
        %v919 = vadd.s32 %v918, %v854
        %v920 = vadd.s32 %v918, %v855
        %v921 = vadd.s32 %v918, %v856
        %v922 = vadd.s32 %v918, %v857
        %v923 = vadd.s32 %v918, %v858
        %v924 = vadd.s32 %v918, %v859
        %v925 = vadd.s32 %v918, %v860
        %v926 = vadd.s32 %v918, %v861
        %v927 = vadd.s32 %v918, %v862
        %v928 = vadd.s32 %v918, %v863
        %v929 = vadd.s32 %v918, %v864
        %v930 = vadd.s32 %v918, %v865
        %v931 = vadd.s32 %v918, %v866
        %v932 = vadd.s32 %v918, %v867
        %v933 = vadd.s32 %v918, %v868
        %v934 = vadd.s32 %v918, %v869
        %v935 = vadd.s32 %v918, %v870
        %v936 = vadd.s32 %v918, %v871
        %v937 = vadd.s32 %v918, %v872
        %v938 = vadd.s32 %v918, %v873
        %v939 = vadd.s32 %v918, %v874
        %v940 = vadd.s32 %v918, %v875
        %v941 = vadd.s32 %v918, %v876
        %v942 = vadd.s32 %v918, %v877
        %v943 = vadd.s32 %v918, %v878
        %v944 = vadd.s32 %v918, %v879
        %v945 = vadd.s32 %v918, %v880
        %v946 = vadd.s32 %v918, %v881
        %v947 = vadd.s32 %v918, %v882
        %v948 = vadd.s32 %v918, %v883
        %v949 = vadd.s32 %v918, %v884
        %v950 = vadd.s32 %v918, %v885
        %v951 = vadd.s32 %v918, %v886
        %v952 = vadd.s32 %v918, %v887
        %v953 = vadd.s32 %v918, %v888
        %v954 = vadd.s32 %v918, %v889
        %v955 = vadd.s32 %v918, %v890
        %v956 = vadd.s32 %v918, %v891
        %v957 = vadd.s32 %v918, %v892
        %v958 = vadd.s32 %v918, %v893
        %v959 = vadd.s32 %v918, %v894
        %v960 = vadd.s32 %v918, %v895
        %v961 = vadd.s32 %v918, %v896
        %v962 = vadd.s32 %v918, %v897
        %v963 = vadd.s32 %v918, %v898
        %v964 = vadd.s32 %v918, %v899
        %v965 = vadd.s32 %v918, %v900
        %v966 = vadd.s32 %v918, %v901
        %v967 = vadd.s32 %v918, %v902
        %v968 = vadd.s32 %v918, %v903
        %v969 = vadd.s32 %v918, %v904
        %v970 = vadd.s32 %v918, %v905
        %v971 = vadd.s32 %v918, %v906
        %v972 = vadd.s32 %v918, %v907
        %v973 = vadd.s32 %v918, %v908
        %v974 = vadd.s32 %v918, %v909
        %v975 = vadd.s32 %v918, %v910
        %v976 = vadd.s32 %v918, %v911
        %v977 = vadd.s32 %v918, %v912
        %v978 = vadd.s32 %v918, %v913
        %v979 = vadd.s32 %v918, %v914
        %v980 = vadd.s32 %v918, %v915
        %v981 = vadd.s32 %v918, %v916
        %v982 = vadd.s32 %v918, %v917
        %vm983 = vcmp.lt.s32.totalorder %v919, 512
        %vm984 = vcmp.lt.s32.totalorder %v920, 512
        %vm985 = vcmp.lt.s32.totalorder %v921, 512
        %vm986 = vcmp.lt.s32.totalorder %v922, 512
        %vm987 = vcmp.lt.s32.totalorder %v923, 512
        %vm988 = vcmp.lt.s32.totalorder %v924, 512
        %vm989 = vcmp.lt.s32.totalorder %v925, 512
        %vm990 = vcmp.lt.s32.totalorder %v926, 512
        %vm991 = vcmp.lt.s32.totalorder %v927, 512
        %vm992 = vcmp.lt.s32.totalorder %v928, 512
        %vm993 = vcmp.lt.s32.totalorder %v929, 512
        %vm994 = vcmp.lt.s32.totalorder %v930, 512
        %vm995 = vcmp.lt.s32.totalorder %v931, 512
        %vm996 = vcmp.lt.s32.totalorder %v932, 512
        %vm997 = vcmp.lt.s32.totalorder %v933, 512
        %vm998 = vcmp.lt.s32.totalorder %v934, 512
        %vm999 = vcmp.lt.s32.totalorder %v935, 512
        %vm1000 = vcmp.lt.s32.totalorder %v936, 512
        %vm1001 = vcmp.lt.s32.totalorder %v937, 512
        %vm1002 = vcmp.lt.s32.totalorder %v938, 512
        %vm1003 = vcmp.lt.s32.totalorder %v939, 512
        %vm1004 = vcmp.lt.s32.totalorder %v940, 512
        %vm1005 = vcmp.lt.s32.totalorder %v941, 512
        %vm1006 = vcmp.lt.s32.totalorder %v942, 512
        %vm1007 = vcmp.lt.s32.totalorder %v943, 512
        %vm1008 = vcmp.lt.s32.totalorder %v944, 512
        %vm1009 = vcmp.lt.s32.totalorder %v945, 512
        %vm1010 = vcmp.lt.s32.totalorder %v946, 512
        %vm1011 = vcmp.lt.s32.totalorder %v947, 512
        %vm1012 = vcmp.lt.s32.totalorder %v948, 512
        %vm1013 = vcmp.lt.s32.totalorder %v949, 512
        %vm1014 = vcmp.lt.s32.totalorder %v950, 512
        %vm1015 = vcmp.lt.s32.totalorder %v951, 512
        %vm1016 = vcmp.lt.s32.totalorder %v952, 512
        %vm1017 = vcmp.lt.s32.totalorder %v953, 512
        %vm1018 = vcmp.lt.s32.totalorder %v954, 512
        %vm1019 = vcmp.lt.s32.totalorder %v955, 512
        %vm1020 = vcmp.lt.s32.totalorder %v956, 512
        %vm1021 = vcmp.lt.s32.totalorder %v957, 512
        %vm1022 = vcmp.lt.s32.totalorder %v958, 512
        %vm1023 = vcmp.lt.s32.totalorder %v959, 512
        %vm1024 = vcmp.lt.s32.totalorder %v960, 512
        %vm1025 = vcmp.lt.s32.totalorder %v961, 512
        %vm1026 = vcmp.lt.s32.totalorder %v962, 512
        %vm1027 = vcmp.lt.s32.totalorder %v963, 512
        %vm1028 = vcmp.lt.s32.totalorder %v964, 512
        %vm1029 = vcmp.lt.s32.totalorder %v965, 512
        %vm1030 = vcmp.lt.s32.totalorder %v966, 512
        %vm1031 = vcmp.lt.s32.totalorder %v967, 512
        %vm1032 = vcmp.lt.s32.totalorder %v968, 512
        %vm1033 = vcmp.lt.s32.totalorder %v969, 512
        %vm1034 = vcmp.lt.s32.totalorder %v970, 512
        %vm1035 = vcmp.lt.s32.totalorder %v971, 512
        %vm1036 = vcmp.lt.s32.totalorder %v972, 512
        %vm1037 = vcmp.lt.s32.totalorder %v973, 512
        %vm1038 = vcmp.lt.s32.totalorder %v974, 512
        %vm1039 = vcmp.lt.s32.totalorder %v975, 512
        %vm1040 = vcmp.lt.s32.totalorder %v976, 512
        %vm1041 = vcmp.lt.s32.totalorder %v977, 512
        %vm1042 = vcmp.lt.s32.totalorder %v978, 512
        %vm1043 = vcmp.lt.s32.totalorder %v979, 512
        %vm1044 = vcmp.lt.s32.totalorder %v980, 512
        %vm1045 = vcmp.lt.s32.totalorder %v981, 512
        %vm1046 = vcmp.lt.s32.totalorder %v982, 512
        %v1047 = vsel %vm983, 1, 0
        %v1048 = vsel %vm984, 1, 0
        %v1049 = vsel %vm985, 1, 0
        %v1050 = vsel %vm986, 1, 0
        %v1051 = vsel %vm987, 1, 0
        %v1052 = vsel %vm988, 1, 0
        %v1053 = vsel %vm989, 1, 0
        %v1054 = vsel %vm990, 1, 0
        %v1055 = vsel %vm991, 1, 0
        %v1056 = vsel %vm992, 1, 0
        %v1057 = vsel %vm993, 1, 0
        %v1058 = vsel %vm994, 1, 0
        %v1059 = vsel %vm995, 1, 0
        %v1060 = vsel %vm996, 1, 0
        %v1061 = vsel %vm997, 1, 0
        %v1062 = vsel %vm998, 1, 0
        %v1063 = vsel %vm999, 1, 0
        %v1064 = vsel %vm1000, 1, 0
        %v1065 = vsel %vm1001, 1, 0
        %v1066 = vsel %vm1002, 1, 0
        %v1067 = vsel %vm1003, 1, 0
        %v1068 = vsel %vm1004, 1, 0
        %v1069 = vsel %vm1005, 1, 0
        %v1070 = vsel %vm1006, 1, 0
        %v1071 = vsel %vm1007, 1, 0
        %v1072 = vsel %vm1008, 1, 0
        %v1073 = vsel %vm1009, 1, 0
        %v1074 = vsel %vm1010, 1, 0
        %v1075 = vsel %vm1011, 1, 0
        %v1076 = vsel %vm1012, 1, 0
        %v1077 = vsel %vm1013, 1, 0
        %v1078 = vsel %vm1014, 1, 0
        %v1079 = vsel %vm1015, 1, 0
        %v1080 = vsel %vm1016, 1, 0
        %v1081 = vsel %vm1017, 1, 0
        %v1082 = vsel %vm1018, 1, 0
        %v1083 = vsel %vm1019, 1, 0
        %v1084 = vsel %vm1020, 1, 0
        %v1085 = vsel %vm1021, 1, 0
        %v1086 = vsel %vm1022, 1, 0
        %v1087 = vsel %vm1023, 1, 0
        %v1088 = vsel %vm1024, 1, 0
        %v1089 = vsel %vm1025, 1, 0
        %v1090 = vsel %vm1026, 1, 0
        %v1091 = vsel %vm1027, 1, 0
        %v1092 = vsel %vm1028, 1, 0
        %v1093 = vsel %vm1029, 1, 0
        %v1094 = vsel %vm1030, 1, 0
        %v1095 = vsel %vm1031, 1, 0
        %v1096 = vsel %vm1032, 1, 0
        %v1097 = vsel %vm1033, 1, 0
        %v1098 = vsel %vm1034, 1, 0
        %v1099 = vsel %vm1035, 1, 0
        %v1100 = vsel %vm1036, 1, 0
        %v1101 = vsel %vm1037, 1, 0
        %v1102 = vsel %vm1038, 1, 0
        %v1103 = vsel %vm1039, 1, 0
        %v1104 = vsel %vm1040, 1, 0
        %v1105 = vsel %vm1041, 1, 0
        %v1106 = vsel %vm1042, 1, 0
        %v1107 = vsel %vm1043, 1, 0
        %v1108 = vsel %vm1044, 1, 0
        %v1109 = vsel %vm1045, 1, 0
        %v1110 = vsel %vm1046, 1, 0
        %vm1111 = vcmp.eq.s32.totalorder %v1047, 1
        %vm1112 = vcmp.eq.s32.totalorder %v1048, 1
        %vm1113 = vcmp.eq.s32.totalorder %v1049, 1
        %vm1114 = vcmp.eq.s32.totalorder %v1050, 1
        %vm1115 = vcmp.eq.s32.totalorder %v1051, 1
        %vm1116 = vcmp.eq.s32.totalorder %v1052, 1
        %vm1117 = vcmp.eq.s32.totalorder %v1053, 1
        %vm1118 = vcmp.eq.s32.totalorder %v1054, 1
        %vm1119 = vcmp.eq.s32.totalorder %v1055, 1
        %vm1120 = vcmp.eq.s32.totalorder %v1056, 1
        %vm1121 = vcmp.eq.s32.totalorder %v1057, 1
        %vm1122 = vcmp.eq.s32.totalorder %v1058, 1
        %vm1123 = vcmp.eq.s32.totalorder %v1059, 1
        %vm1124 = vcmp.eq.s32.totalorder %v1060, 1
        %vm1125 = vcmp.eq.s32.totalorder %v1061, 1
        %vm1126 = vcmp.eq.s32.totalorder %v1062, 1
        %vm1127 = vcmp.eq.s32.totalorder %v1063, 1
        %vm1128 = vcmp.eq.s32.totalorder %v1064, 1
        %vm1129 = vcmp.eq.s32.totalorder %v1065, 1
        %vm1130 = vcmp.eq.s32.totalorder %v1066, 1
        %vm1131 = vcmp.eq.s32.totalorder %v1067, 1
        %vm1132 = vcmp.eq.s32.totalorder %v1068, 1
        %vm1133 = vcmp.eq.s32.totalorder %v1069, 1
        %vm1134 = vcmp.eq.s32.totalorder %v1070, 1
        %vm1135 = vcmp.eq.s32.totalorder %v1071, 1
        %vm1136 = vcmp.eq.s32.totalorder %v1072, 1
        %vm1137 = vcmp.eq.s32.totalorder %v1073, 1
        %vm1138 = vcmp.eq.s32.totalorder %v1074, 1
        %vm1139 = vcmp.eq.s32.totalorder %v1075, 1
        %vm1140 = vcmp.eq.s32.totalorder %v1076, 1
        %vm1141 = vcmp.eq.s32.totalorder %v1077, 1
        %vm1142 = vcmp.eq.s32.totalorder %v1078, 1
        %vm1143 = vcmp.eq.s32.totalorder %v1079, 1
        %vm1144 = vcmp.eq.s32.totalorder %v1080, 1
        %vm1145 = vcmp.eq.s32.totalorder %v1081, 1
        %vm1146 = vcmp.eq.s32.totalorder %v1082, 1
        %vm1147 = vcmp.eq.s32.totalorder %v1083, 1
        %vm1148 = vcmp.eq.s32.totalorder %v1084, 1
        %vm1149 = vcmp.eq.s32.totalorder %v1085, 1
        %vm1150 = vcmp.eq.s32.totalorder %v1086, 1
        %vm1151 = vcmp.eq.s32.totalorder %v1087, 1
        %vm1152 = vcmp.eq.s32.totalorder %v1088, 1
        %vm1153 = vcmp.eq.s32.totalorder %v1089, 1
        %vm1154 = vcmp.eq.s32.totalorder %v1090, 1
        %vm1155 = vcmp.eq.s32.totalorder %v1091, 1
        %vm1156 = vcmp.eq.s32.totalorder %v1092, 1
        %vm1157 = vcmp.eq.s32.totalorder %v1093, 1
        %vm1158 = vcmp.eq.s32.totalorder %v1094, 1
        %vm1159 = vcmp.eq.s32.totalorder %v1095, 1
        %vm1160 = vcmp.eq.s32.totalorder %v1096, 1
        %vm1161 = vcmp.eq.s32.totalorder %v1097, 1
        %vm1162 = vcmp.eq.s32.totalorder %v1098, 1
        %vm1163 = vcmp.eq.s32.totalorder %v1099, 1
        %vm1164 = vcmp.eq.s32.totalorder %v1100, 1
        %vm1165 = vcmp.eq.s32.totalorder %v1101, 1
        %vm1166 = vcmp.eq.s32.totalorder %v1102, 1
        %vm1167 = vcmp.eq.s32.totalorder %v1103, 1
        %vm1168 = vcmp.eq.s32.totalorder %v1104, 1
        %vm1169 = vcmp.eq.s32.totalorder %v1105, 1
        %vm1170 = vcmp.eq.s32.totalorder %v1106, 1
        %vm1171 = vcmp.eq.s32.totalorder %v1107, 1
        %vm1172 = vcmp.eq.s32.totalorder %v1108, 1
        %vm1173 = vcmp.eq.s32.totalorder %v1109, 1
        %vm1174 = vcmp.eq.s32.totalorder %v1110, 1
        %v1175 = vsel %vm1111, %v599, 0.0
        %v1176 = vsel %vm1112, %v602, 0.0
        %v1177 = vsel %vm1113, %v607, 0.0
        %v1178 = vsel %vm1114, %v610, 0.0
        %v1179 = vsel %vm1115, %v615, 0.0
        %v1180 = vsel %vm1116, %v618, 0.0
        %v1181 = vsel %vm1117, %v623, 0.0
        %v1182 = vsel %vm1118, %v626, 0.0
        %v1183 = vsel %vm1119, %v631, 0.0
        %v1184 = vsel %vm1120, %v634, 0.0
        %v1185 = vsel %vm1121, %v639, 0.0
        %v1186 = vsel %vm1122, %v642, 0.0
        %v1187 = vsel %vm1123, %v647, 0.0
        %v1188 = vsel %vm1124, %v650, 0.0
        %v1189 = vsel %vm1125, %v655, 0.0
        %v1190 = vsel %vm1126, %v658, 0.0
        %v1191 = vsel %vm1127, %v663, 0.0
        %v1192 = vsel %vm1128, %v666, 0.0
        %v1193 = vsel %vm1129, %v671, 0.0
        %v1194 = vsel %vm1130, %v674, 0.0
        %v1195 = vsel %vm1131, %v679, 0.0
        %v1196 = vsel %vm1132, %v682, 0.0
        %v1197 = vsel %vm1133, %v687, 0.0
        %v1198 = vsel %vm1134, %v690, 0.0
        %v1199 = vsel %vm1135, %v695, 0.0
        %v1200 = vsel %vm1136, %v698, 0.0
        %v1201 = vsel %vm1137, %v703, 0.0
        %v1202 = vsel %vm1138, %v706, 0.0
        %v1203 = vsel %vm1139, %v711, 0.0
        %v1204 = vsel %vm1140, %v714, 0.0
        %v1205 = vsel %vm1141, %v719, 0.0
        %v1206 = vsel %vm1142, %v722, 0.0
        %v1207 = vsel %vm1143, %v727, 0.0
        %v1208 = vsel %vm1144, %v730, 0.0
        %v1209 = vsel %vm1145, %v735, 0.0
        %v1210 = vsel %vm1146, %v738, 0.0
        %v1211 = vsel %vm1147, %v743, 0.0
        %v1212 = vsel %vm1148, %v746, 0.0
        %v1213 = vsel %vm1149, %v751, 0.0
        %v1214 = vsel %vm1150, %v754, 0.0
        %v1215 = vsel %vm1151, %v759, 0.0
        %v1216 = vsel %vm1152, %v762, 0.0
        %v1217 = vsel %vm1153, %v767, 0.0
        %v1218 = vsel %vm1154, %v770, 0.0
        %v1219 = vsel %vm1155, %v775, 0.0
        %v1220 = vsel %vm1156, %v778, 0.0
        %v1221 = vsel %vm1157, %v783, 0.0
        %v1222 = vsel %vm1158, %v786, 0.0
        %v1223 = vsel %vm1159, %v791, 0.0
        %v1224 = vsel %vm1160, %v794, 0.0
        %v1225 = vsel %vm1161, %v799, 0.0
        %v1226 = vsel %vm1162, %v802, 0.0
        %v1227 = vsel %vm1163, %v807, 0.0
        %v1228 = vsel %vm1164, %v810, 0.0
        %v1229 = vsel %vm1165, %v815, 0.0
        %v1230 = vsel %vm1166, %v818, 0.0
        %v1231 = vsel %vm1167, %v823, 0.0
        %v1232 = vsel %vm1168, %v826, 0.0
        %v1233 = vsel %vm1169, %v831, 0.0
        %v1234 = vsel %vm1170, %v834, 0.0
        %v1235 = vsel %vm1171, %v839, 0.0
        %v1236 = vsel %vm1172, %v842, 0.0
        %v1237 = vsel %vm1173, %v847, 0.0
        %v1238 = vsel %vm1174, %v850, 0.0
        %v1239 = vld [vmem:[#allocation3] sm:$0x1]
        %v1240 = vadd.f32 %v1175, %v1176
        %v1241 = vadd.f32 %v1240, %v1177
        %v1242 = vadd.f32 %v1241, %v1178
        %v1243 = vadd.f32 %v1242, %v1179
        %v1244 = vadd.f32 %v1243, %v1180
        %v1245 = vadd.f32 %v1244, %v1181
        %v1246 = vadd.f32 %v1245, %v1182
        %v1247 = vadd.f32 %v1246, %v1183
        %v1248 = vadd.f32 %v1247, %v1184
        %v1249 = vadd.f32 %v1248, %v1185
        %v1250 = vadd.f32 %v1249, %v1186
        %v1251 = vadd.f32 %v1250, %v1187
        %v1252 = vadd.f32 %v1251, %v1188
        %v1253 = vadd.f32 %v1252, %v1189
        %v1254 = vadd.f32 %v1253, %v1190
        %v1255 = vadd.f32 %v1254, %v1191
        %v1256 = vadd.f32 %v1255, %v1192
        %v1257 = vadd.f32 %v1256, %v1193
        %v1258 = vadd.f32 %v1257, %v1194
        %v1259 = vadd.f32 %v1258, %v1195
        %v1260 = vadd.f32 %v1259, %v1196
        %v1261 = vadd.f32 %v1260, %v1197
        %v1262 = vadd.f32 %v1261, %v1198
        %v1263 = vadd.f32 %v1262, %v1199
        %v1264 = vadd.f32 %v1263, %v1200
        %v1265 = vadd.f32 %v1264, %v1201
        %v1266 = vadd.f32 %v1265, %v1202
        %v1267 = vadd.f32 %v1266, %v1203
        %v1268 = vadd.f32 %v1267, %v1204
        %v1269 = vadd.f32 %v1268, %v1205
        %v1270 = vadd.f32 %v1269, %v1206
        %v1271 = vadd.f32 %v1270, %v1207
        %v1272 = vadd.f32 %v1271, %v1208
        %v1273 = vadd.f32 %v1272, %v1209
        %v1274 = vadd.f32 %v1273, %v1210
        %v1275 = vadd.f32 %v1274, %v1211
        %v1276 = vadd.f32 %v1275, %v1212
        %v1277 = vadd.f32 %v1276, %v1213
        %v1278 = vadd.f32 %v1277, %v1214
        %v1279 = vadd.f32 %v1278, %v1215
        %v1280 = vadd.f32 %v1279, %v1216
        %v1281 = vadd.f32 %v1280, %v1217
        %v1282 = vadd.f32 %v1281, %v1218
        %v1283 = vadd.f32 %v1282, %v1219
        %v1284 = vadd.f32 %v1283, %v1220
        %v1285 = vadd.f32 %v1284, %v1221
        %v1286 = vadd.f32 %v1285, %v1222
        %v1287 = vadd.f32 %v1286, %v1223
        %v1288 = vadd.f32 %v1287, %v1224
        %v1289 = vadd.f32 %v1288, %v1225
        %v1290 = vadd.f32 %v1289, %v1226
        %v1291 = vadd.f32 %v1290, %v1227
        %v1292 = vadd.f32 %v1291, %v1228
        %v1293 = vadd.f32 %v1292, %v1229
        %v1294 = vadd.f32 %v1293, %v1230
        %v1295 = vadd.f32 %v1294, %v1231
        %v1296 = vadd.f32 %v1295, %v1232
        %v1297 = vadd.f32 %v1296, %v1233
        %v1298 = vadd.f32 %v1297, %v1234
        %v1299 = vadd.f32 %v1298, %v1235
        %v1300 = vadd.f32 %v1299, %v1236
        %v1301 = vadd.f32 %v1300, %v1237
        %v1302 = vadd.f32 %v1301, %v1238
        %v1303 = vrot.slane %v1302, 4
        %v1304 = vadd.f32 %v1302, %v1303
        %v1305 = vrot.slane %v1304, 2
        %v1306 = vadd.f32 %v1304, %v1305
        %v1307 = vrot.slane %v1306, 1
        %v1308 = vadd.f32 %v1306, %v1307
        %v1309 = vadd.f32 %v1239, %v1308
        %1310 = vst [vmem:[#allocation3] sm:$0x1] %v1309
        %v1311 = vld [vmem:[#allocation4] sm:$0x1]
        %v1312 = vmul.f32 %v1175, %v1175
        %v1313 = vmul.f32 %v1176, %v1176
        %v1314 = vmul.f32 %v1177, %v1177
        %v1315 = vmul.f32 %v1178, %v1178
        %v1316 = vmul.f32 %v1179, %v1179
        %v1317 = vmul.f32 %v1180, %v1180
        %v1318 = vmul.f32 %v1181, %v1181
        %v1319 = vmul.f32 %v1182, %v1182
        %v1320 = vmul.f32 %v1183, %v1183
        %v1321 = vmul.f32 %v1184, %v1184
        %v1322 = vmul.f32 %v1185, %v1185
        %v1323 = vmul.f32 %v1186, %v1186
        %v1324 = vmul.f32 %v1187, %v1187
        %v1325 = vmul.f32 %v1188, %v1188
        %v1326 = vmul.f32 %v1189, %v1189
        %v1327 = vmul.f32 %v1190, %v1190
        %v1328 = vmul.f32 %v1191, %v1191
        %v1329 = vmul.f32 %v1192, %v1192
        %v1330 = vmul.f32 %v1193, %v1193
        %v1331 = vmul.f32 %v1194, %v1194
        %v1332 = vmul.f32 %v1195, %v1195
        %v1333 = vmul.f32 %v1196, %v1196
        %v1334 = vmul.f32 %v1197, %v1197
        %v1335 = vmul.f32 %v1198, %v1198
        %v1336 = vmul.f32 %v1199, %v1199
        %v1337 = vmul.f32 %v1200, %v1200
        %v1338 = vmul.f32 %v1201, %v1201
        %v1339 = vmul.f32 %v1202, %v1202
        %v1340 = vmul.f32 %v1203, %v1203
        %v1341 = vmul.f32 %v1204, %v1204
        %v1342 = vmul.f32 %v1205, %v1205
        %v1343 = vmul.f32 %v1206, %v1206
        %v1344 = vmul.f32 %v1207, %v1207
        %v1345 = vmul.f32 %v1208, %v1208
        %v1346 = vmul.f32 %v1209, %v1209
        %v1347 = vmul.f32 %v1210, %v1210
        %v1348 = vmul.f32 %v1211, %v1211
        %v1349 = vmul.f32 %v1212, %v1212
        %v1350 = vmul.f32 %v1213, %v1213
        %v1351 = vmul.f32 %v1214, %v1214
        %v1352 = vmul.f32 %v1215, %v1215
        %v1353 = vmul.f32 %v1216, %v1216
        %v1354 = vmul.f32 %v1217, %v1217
        %v1355 = vmul.f32 %v1218, %v1218
        %v1356 = vmul.f32 %v1219, %v1219
        %v1357 = vmul.f32 %v1220, %v1220
        %v1358 = vmul.f32 %v1221, %v1221
        %v1359 = vmul.f32 %v1222, %v1222
        %v1360 = vmul.f32 %v1223, %v1223
        %v1361 = vmul.f32 %v1224, %v1224
        %v1362 = vmul.f32 %v1225, %v1225
        %v1363 = vmul.f32 %v1226, %v1226
        %v1364 = vmul.f32 %v1227, %v1227
        %v1365 = vmul.f32 %v1228, %v1228
        %v1366 = vmul.f32 %v1229, %v1229
        %v1367 = vmul.f32 %v1230, %v1230
        %v1368 = vmul.f32 %v1231, %v1231
        %v1369 = vmul.f32 %v1232, %v1232
        %v1370 = vmul.f32 %v1233, %v1233
        %v1371 = vmul.f32 %v1234, %v1234
        %v1372 = vmul.f32 %v1235, %v1235
        %v1373 = vmul.f32 %v1236, %v1236
        %v1374 = vmul.f32 %v1237, %v1237
        %v1375 = vmul.f32 %v1238, %v1238
        %v1376 = vadd.f32 %v1312, %v1313
        %v1377 = vadd.f32 %v1376, %v1314
        %v1378 = vadd.f32 %v1377, %v1315
        %v1379 = vadd.f32 %v1378, %v1316
        %v1380 = vadd.f32 %v1379, %v1317
        %v1381 = vadd.f32 %v1380, %v1318
        %v1382 = vadd.f32 %v1381, %v1319
        %v1383 = vadd.f32 %v1382, %v1320
        %v1384 = vadd.f32 %v1383, %v1321
        %v1385 = vadd.f32 %v1384, %v1322
        %v1386 = vadd.f32 %v1385, %v1323
        %v1387 = vadd.f32 %v1386, %v1324
        %v1388 = vadd.f32 %v1387, %v1325
        %v1389 = vadd.f32 %v1388, %v1326
        %v1390 = vadd.f32 %v1389, %v1327
        %v1391 = vadd.f32 %v1390, %v1328
        %v1392 = vadd.f32 %v1391, %v1329
        %v1393 = vadd.f32 %v1392, %v1330
        %v1394 = vadd.f32 %v1393, %v1331
        %v1395 = vadd.f32 %v1394, %v1332
        %v1396 = vadd.f32 %v1395, %v1333
        %v1397 = vadd.f32 %v1396, %v1334
        %v1398 = vadd.f32 %v1397, %v1335
        %v1399 = vadd.f32 %v1398, %v1336
        %v1400 = vadd.f32 %v1399, %v1337
        %v1401 = vadd.f32 %v1400, %v1338
        %v1402 = vadd.f32 %v1401, %v1339
        %v1403 = vadd.f32 %v1402, %v1340
        %v1404 = vadd.f32 %v1403, %v1341
        %v1405 = vadd.f32 %v1404, %v1342
        %v1406 = vadd.f32 %v1405, %v1343
        %v1407 = vadd.f32 %v1406, %v1344
        %v1408 = vadd.f32 %v1407, %v1345
        %v1409 = vadd.f32 %v1408, %v1346
        %v1410 = vadd.f32 %v1409, %v1347
        %v1411 = vadd.f32 %v1410, %v1348
        %v1412 = vadd.f32 %v1411, %v1349
        %v1413 = vadd.f32 %v1412, %v1350
        %v1414 = vadd.f32 %v1413, %v1351
        %v1415 = vadd.f32 %v1414, %v1352
        %v1416 = vadd.f32 %v1415, %v1353
        %v1417 = vadd.f32 %v1416, %v1354
        %v1418 = vadd.f32 %v1417, %v1355
        %v1419 = vadd.f32 %v1418, %v1356
        %v1420 = vadd.f32 %v1419, %v1357
        %v1421 = vadd.f32 %v1420, %v1358
        %v1422 = vadd.f32 %v1421, %v1359
        %v1423 = vadd.f32 %v1422, %v1360
        %v1424 = vadd.f32 %v1423, %v1361
        %v1425 = vadd.f32 %v1424, %v1362
        %v1426 = vadd.f32 %v1425, %v1363
        %v1427 = vadd.f32 %v1426, %v1364
        %v1428 = vadd.f32 %v1427, %v1365
        %v1429 = vadd.f32 %v1428, %v1366
        %v1430 = vadd.f32 %v1429, %v1367
        %v1431 = vadd.f32 %v1430, %v1368
        %v1432 = vadd.f32 %v1431, %v1369
        %v1433 = vadd.f32 %v1432, %v1370
        %v1434 = vadd.f32 %v1433, %v1371
        %v1435 = vadd.f32 %v1434, %v1372
        %v1436 = vadd.f32 %v1435, %v1373
        %v1437 = vadd.f32 %v1436, %v1374
        %v1438 = vadd.f32 %v1437, %v1375
        %v1439 = vrot.slane %v1438, 4
        %v1440 = vadd.f32 %v1438, %v1439
        %v1441 = vrot.slane %v1440, 2
        %v1442 = vadd.f32 %v1440, %v1441
        %v1443 = vrot.slane %v1442, 1
        %v1444 = vadd.f32 %v1442, %v1443
        %v1445 = vadd.f32 %v1311, %v1444
        %1446 = vst [vmem:[#allocation4] sm:$0x1] %v1445
        %s1447 = scalar_lea.vmem [#allocation2], %s233
        %1448 = vst [vmem:[%s1447] sm:$0xff] %v599
        %1449 = vst [vmem:[%s1447 + $0x8] sm:$0xff] %v602
        %1450 = vst [vmem:[%s1447 + $0x10] sm:$0xff] %v607
        %1451 = vst [vmem:[%s1447 + $0x18] sm:$0xff] %v610
        %1452 = vst [vmem:[%s1447 + $0x20] sm:$0xff] %v615
        %1453 = vst [vmem:[%s1447 + $0x28] sm:$0xff] %v618
        %1454 = vst [vmem:[%s1447 + $0x30] sm:$0xff] %v623
        %1455 = vst [vmem:[%s1447 + $0x38] sm:$0xff] %v626
        %1456 = vst [vmem:[%s1447 + $0x40] sm:$0xff] %v631
        %1457 = vst [vmem:[%s1447 + $0x48] sm:$0xff] %v634
        %1458 = vst [vmem:[%s1447 + $0x50] sm:$0xff] %v639
        %1459 = vst [vmem:[%s1447 + $0x58] sm:$0xff] %v642
        %1460 = vst [vmem:[%s1447 + $0x60] sm:$0xff] %v647
        %1461 = vst [vmem:[%s1447 + $0x68] sm:$0xff] %v650
        %1462 = vst [vmem:[%s1447 + $0x70] sm:$0xff] %v655
        %1463 = vst [vmem:[%s1447 + $0x78] sm:$0xff] %v658
        %1464 = vst [vmem:[%s1447 + $0x80] sm:$0xff] %v663
        %1465 = vst [vmem:[%s1447 + $0x88] sm:$0xff] %v666
        %1466 = vst [vmem:[%s1447 + $0x90] sm:$0xff] %v671
        %1467 = vst [vmem:[%s1447 + $0x98] sm:$0xff] %v674
        %1468 = vst [vmem:[%s1447 + $0xa0] sm:$0xff] %v679
        %1469 = vst [vmem:[%s1447 + $0xa8] sm:$0xff] %v682
        %1470 = vst [vmem:[%s1447 + $0xb0] sm:$0xff] %v687
        %1471 = vst [vmem:[%s1447 + $0xb8] sm:$0xff] %v690
        %1472 = vst [vmem:[%s1447 + $0xc0] sm:$0xff] %v695
        %1473 = vst [vmem:[%s1447 + $0xc8] sm:$0xff] %v698
        %1474 = vst [vmem:[%s1447 + $0xd0] sm:$0xff] %v703
        %1475 = vst [vmem:[%s1447 + $0xd8] sm:$0xff] %v706
        %1476 = vst [vmem:[%s1447 + $0xe0] sm:$0xff] %v711
        %1477 = vst [vmem:[%s1447 + $0xe8] sm:$0xff] %v714
        %1478 = vst [vmem:[%s1447 + $0xf0] sm:$0xff] %v719
        %1479 = vst [vmem:[%s1447 + $0xf8] sm:$0xff] %v722
        %1480 = vst [vmem:[%s1447 + $0x100] sm:$0xff] %v727
        %1481 = vst [vmem:[%s1447 + $0x108] sm:$0xff] %v730
        %1482 = vst [vmem:[%s1447 + $0x110] sm:$0xff] %v735
        %1483 = vst [vmem:[%s1447 + $0x118] sm:$0xff] %v738
        %1484 = vst [vmem:[%s1447 + $0x120] sm:$0xff] %v743
        %1485 = vst [vmem:[%s1447 + $0x128] sm:$0xff] %v746
        %1486 = vst [vmem:[%s1447 + $0x130] sm:$0xff] %v751
        %1487 = vst [vmem:[%s1447 + $0x138] sm:$0xff] %v754
        %1488 = vst [vmem:[%s1447 + $0x140] sm:$0xff] %v759
        %1489 = vst [vmem:[%s1447 + $0x148] sm:$0xff] %v762
        %1490 = vst [vmem:[%s1447 + $0x150] sm:$0xff] %v767
        %1491 = vst [vmem:[%s1447 + $0x158] sm:$0xff] %v770
        %1492 = vst [vmem:[%s1447 + $0x160] sm:$0xff] %v775
        %1493 = vst [vmem:[%s1447 + $0x168] sm:$0xff] %v778
        %1494 = vst [vmem:[%s1447 + $0x170] sm:$0xff] %v783
        %1495 = vst [vmem:[%s1447 + $0x178] sm:$0xff] %v786
        %1496 = vst [vmem:[%s1447 + $0x180] sm:$0xff] %v791
        %1497 = vst [vmem:[%s1447 + $0x188] sm:$0xff] %v794
        %1498 = vst [vmem:[%s1447 + $0x190] sm:$0xff] %v799
        %1499 = vst [vmem:[%s1447 + $0x198] sm:$0xff] %v802
        %1500 = vst [vmem:[%s1447 + $0x1a0] sm:$0xff] %v807
        %1501 = vst [vmem:[%s1447 + $0x1a8] sm:$0xff] %v810
        %1502 = vst [vmem:[%s1447 + $0x1b0] sm:$0xff] %v815
        %1503 = vst [vmem:[%s1447 + $0x1b8] sm:$0xff] %v818
        %1504 = vst [vmem:[%s1447 + $0x1c0] sm:$0xff] %v823
        %1505 = vst [vmem:[%s1447 + $0x1c8] sm:$0xff] %v826
        %1506 = vst [vmem:[%s1447 + $0x1d0] sm:$0xff] %v831
        %1507 = vst [vmem:[%s1447 + $0x1d8] sm:$0xff] %v834
        %1508 = vst [vmem:[%s1447 + $0x1e0] sm:$0xff] %v839
        %1509 = vst [vmem:[%s1447 + $0x1e8] sm:$0xff] %v842
        %1510 = vst [vmem:[%s1447 + $0x1f0] sm:$0xff] %v847
        %1511 = vst [vmem:[%s1447 + $0x1f8] sm:$0xff] %v850
      $region40: #{residual_branch_forward.2} parent=35 // pred_fallthru
        _
      %p1512 = scmp.eq.s32.totalorder %s19, 1
      // Predicated region
      $region45: #{residual_branch_forward.2} parent=35 // pred_check
        %p1513 = pneg %p1512
      $region46: #{residual_branch_forward.2} parent=35 // pred_check_branch
        %1515 = sbr.rel (%p1513) target = $region48
      $region47: #{residual_branch_forward.2} parent=35 // pred_region
        %p1516 = scmp.eq.s32.totalorder %s20, 0
        // Predicated region
        $region49: #{residual_branch_forward.2} parent=47 // pred_check
          %p1517 = pneg %p1516
        $region50: #{residual_branch_forward.2} parent=47 // pred_check_branch
          %1519 = sbr.rel (%p1517) target = $region52
        $region51: #{residual_branch_forward.2} parent=47 // pred_region
          %v1520 = vld [vmem:[#allocation3] sm:$0x1]
          %v1521 = vmul.f32 %v1520, 0.001953125
          %v1522 = vld [vmem:[#allocation4] sm:$0x1]
          %v1523 = vmul.f32 %v1522, 0.001953125
          %v1524 = vmul.f32 %v1521, %v1521
          %v1525 = vsub.f32 %v1523, %v1524
          %v1526 = vmax.f32 %v1525, 0.0
          %v1527 = vadd.f32 %v1526, 1e-05
          %v1528 = vrsqrt.pop %v1527
          %v1529 = vld [vmem:[%s2] sm:$0x1]
          %v1530 = vmul.f32 %v1529, %v1528
          %1531 = vst [vmem:[#allocation5] sm:$0x1] %v1530
          %v1532 = vld [vmem:[%s3] sm:$0x1]
          %v1533 = vld [vmem:[#allocation5] sm:$0x1]
          %v1534 = vmul.f32 %v1521, %v1533
          %v1535 = vsub.f32 %v1532, %v1534
          %1536 = vst [vmem:[#allocation6] sm:$0x1] %v1535
        $region52: #{residual_branch_forward.2} parent=47 // pred_fallthru
          _
        %s1537 = scalar_lea.vmem [#allocation2], %s233
        %v1538 = vld [vmem:[%s1537] sm:$0xff]
        %v1539 = vld [vmem:[%s1537 + $0x8] sm:$0xff]
        %v1540 = vld [vmem:[%s1537 + $0x10] sm:$0xff]
        %v1541 = vld [vmem:[%s1537 + $0x18] sm:$0xff]
        %v1542 = vld [vmem:[%s1537 + $0x20] sm:$0xff]
        %v1543 = vld [vmem:[%s1537 + $0x28] sm:$0xff]
        %v1544 = vld [vmem:[%s1537 + $0x30] sm:$0xff]
        %v1545 = vld [vmem:[%s1537 + $0x38] sm:$0xff]
        %v1546 = vld [vmem:[%s1537 + $0x40] sm:$0xff]
        %v1547 = vld [vmem:[%s1537 + $0x48] sm:$0xff]
        %v1548 = vld [vmem:[%s1537 + $0x50] sm:$0xff]
        %v1549 = vld [vmem:[%s1537 + $0x58] sm:$0xff]
        %v1550 = vld [vmem:[%s1537 + $0x60] sm:$0xff]
        %v1551 = vld [vmem:[%s1537 + $0x68] sm:$0xff]
        %v1552 = vld [vmem:[%s1537 + $0x70] sm:$0xff]
        %v1553 = vld [vmem:[%s1537 + $0x78] sm:$0xff]
        %v1554 = vld [vmem:[%s1537 + $0x80] sm:$0xff]
        %v1555 = vld [vmem:[%s1537 + $0x88] sm:$0xff]
        %v1556 = vld [vmem:[%s1537 + $0x90] sm:$0xff]
        %v1557 = vld [vmem:[%s1537 + $0x98] sm:$0xff]
        %v1558 = vld [vmem:[%s1537 + $0xa0] sm:$0xff]
        %v1559 = vld [vmem:[%s1537 + $0xa8] sm:$0xff]
        %v1560 = vld [vmem:[%s1537 + $0xb0] sm:$0xff]
        %v1561 = vld [vmem:[%s1537 + $0xb8] sm:$0xff]
        %v1562 = vld [vmem:[%s1537 + $0xc0] sm:$0xff]
        %v1563 = vld [vmem:[%s1537 + $0xc8] sm:$0xff]
        %v1564 = vld [vmem:[%s1537 + $0xd0] sm:$0xff]
        %v1565 = vld [vmem:[%s1537 + $0xd8] sm:$0xff]
        %v1566 = vld [vmem:[%s1537 + $0xe0] sm:$0xff]
        %v1567 = vld [vmem:[%s1537 + $0xe8] sm:$0xff]
        %v1568 = vld [vmem:[%s1537 + $0xf0] sm:$0xff]
        %v1569 = vld [vmem:[%s1537 + $0xf8] sm:$0xff]
        %v1570 = vld [vmem:[%s1537 + $0x100] sm:$0xff]
        %v1571 = vld [vmem:[%s1537 + $0x108] sm:$0xff]
        %v1572 = vld [vmem:[%s1537 + $0x110] sm:$0xff]
        %v1573 = vld [vmem:[%s1537 + $0x118] sm:$0xff]
        %v1574 = vld [vmem:[%s1537 + $0x120] sm:$0xff]
        %v1575 = vld [vmem:[%s1537 + $0x128] sm:$0xff]
        %v1576 = vld [vmem:[%s1537 + $0x130] sm:$0xff]
        %v1577 = vld [vmem:[%s1537 + $0x138] sm:$0xff]
        %v1578 = vld [vmem:[%s1537 + $0x140] sm:$0xff]
        %v1579 = vld [vmem:[%s1537 + $0x148] sm:$0xff]
        %v1580 = vld [vmem:[%s1537 + $0x150] sm:$0xff]
        %v1581 = vld [vmem:[%s1537 + $0x158] sm:$0xff]
        %v1582 = vld [vmem:[%s1537 + $0x160] sm:$0xff]
        %v1583 = vld [vmem:[%s1537 + $0x168] sm:$0xff]
        %v1584 = vld [vmem:[%s1537 + $0x170] sm:$0xff]
        %v1585 = vld [vmem:[%s1537 + $0x178] sm:$0xff]
        %v1586 = vld [vmem:[%s1537 + $0x180] sm:$0xff]
        %v1587 = vld [vmem:[%s1537 + $0x188] sm:$0xff]
        %v1588 = vld [vmem:[%s1537 + $0x190] sm:$0xff]
        %v1589 = vld [vmem:[%s1537 + $0x198] sm:$0xff]
        %v1590 = vld [vmem:[%s1537 + $0x1a0] sm:$0xff]
        %v1591 = vld [vmem:[%s1537 + $0x1a8] sm:$0xff]
        %v1592 = vld [vmem:[%s1537 + $0x1b0] sm:$0xff]
        %v1593 = vld [vmem:[%s1537 + $0x1b8] sm:$0xff]
        %v1594 = vld [vmem:[%s1537 + $0x1c0] sm:$0xff]
        %v1595 = vld [vmem:[%s1537 + $0x1c8] sm:$0xff]
        %v1596 = vld [vmem:[%s1537 + $0x1d0] sm:$0xff]
        %v1597 = vld [vmem:[%s1537 + $0x1d8] sm:$0xff]
        %v1598 = vld [vmem:[%s1537 + $0x1e0] sm:$0xff]
        %v1599 = vld [vmem:[%s1537 + $0x1e8] sm:$0xff]
        %v1600 = vld [vmem:[%s1537 + $0x1f0] sm:$0xff]
        %v1601 = vld [vmem:[%s1537 + $0x1f8] sm:$0xff]
        %v1602 = vld [vmem:[#allocation5] sm:$0x1]
        %v1604 = vlaneseq
        %v1605 = vshrl.u32 %v1604, 7
        %v1606 = vsub.s32 0, %v1605
        %v1607 = vrot.slane %v1602, %v1606
        %v1609 = vmul.f32 %v1538, %v1607
        %v1610 = vmul.f32 %v1539, %v1607
        %v1611 = vmul.f32 %v1540, %v1607
        %v1612 = vmul.f32 %v1541, %v1607
        %v1613 = vmul.f32 %v1542, %v1607
        %v1614 = vmul.f32 %v1543, %v1607
        %v1615 = vmul.f32 %v1544, %v1607
        %v1616 = vmul.f32 %v1545, %v1607
        %v1617 = vmul.f32 %v1546, %v1607
        %v1618 = vmul.f32 %v1547, %v1607
        %v1619 = vmul.f32 %v1548, %v1607
        %v1620 = vmul.f32 %v1549, %v1607
        %v1621 = vmul.f32 %v1550, %v1607
        %v1622 = vmul.f32 %v1551, %v1607
        %v1623 = vmul.f32 %v1552, %v1607
        %v1624 = vmul.f32 %v1553, %v1607
        %v1625 = vmul.f32 %v1554, %v1607
        %v1626 = vmul.f32 %v1555, %v1607
        %v1627 = vmul.f32 %v1556, %v1607
        %v1628 = vmul.f32 %v1557, %v1607
        %v1629 = vmul.f32 %v1558, %v1607
        %v1630 = vmul.f32 %v1559, %v1607
        %v1631 = vmul.f32 %v1560, %v1607
        %v1632 = vmul.f32 %v1561, %v1607
        %v1633 = vmul.f32 %v1562, %v1607
        %v1634 = vmul.f32 %v1563, %v1607
        %v1635 = vmul.f32 %v1564, %v1607
        %v1636 = vmul.f32 %v1565, %v1607
        %v1637 = vmul.f32 %v1566, %v1607
        %v1638 = vmul.f32 %v1567, %v1607
        %v1639 = vmul.f32 %v1568, %v1607
        %v1640 = vmul.f32 %v1569, %v1607
        %v1641 = vmul.f32 %v1570, %v1607
        %v1642 = vmul.f32 %v1571, %v1607
        %v1643 = vmul.f32 %v1572, %v1607
        %v1644 = vmul.f32 %v1573, %v1607
        %v1645 = vmul.f32 %v1574, %v1607
        %v1646 = vmul.f32 %v1575, %v1607
        %v1647 = vmul.f32 %v1576, %v1607
        %v1648 = vmul.f32 %v1577, %v1607
        %v1649 = vmul.f32 %v1578, %v1607
        %v1650 = vmul.f32 %v1579, %v1607
        %v1651 = vmul.f32 %v1580, %v1607
        %v1652 = vmul.f32 %v1581, %v1607
        %v1653 = vmul.f32 %v1582, %v1607
        %v1654 = vmul.f32 %v1583, %v1607
        %v1655 = vmul.f32 %v1584, %v1607
        %v1656 = vmul.f32 %v1585, %v1607
        %v1657 = vmul.f32 %v1586, %v1607
        %v1658 = vmul.f32 %v1587, %v1607
        %v1659 = vmul.f32 %v1588, %v1607
        %v1660 = vmul.f32 %v1589, %v1607
        %v1661 = vmul.f32 %v1590, %v1607
        %v1662 = vmul.f32 %v1591, %v1607
        %v1663 = vmul.f32 %v1592, %v1607
        %v1664 = vmul.f32 %v1593, %v1607
        %v1665 = vmul.f32 %v1594, %v1607
        %v1666 = vmul.f32 %v1595, %v1607
        %v1667 = vmul.f32 %v1596, %v1607
        %v1668 = vmul.f32 %v1597, %v1607
        %v1669 = vmul.f32 %v1598, %v1607
        %v1670 = vmul.f32 %v1599, %v1607
        %v1671 = vmul.f32 %v1600, %v1607
        %v1672 = vmul.f32 %v1601, %v1607
        %v1673 = vld [vmem:[#allocation6] sm:$0x1]
        %v1675 = vlaneseq
        %v1676 = vshrl.u32 %v1675, 7
        %v1677 = vsub.s32 0, %v1676
        %v1678 = vrot.slane %v1673, %v1677
        %v1680 = vadd.f32 %v1609, %v1678
        %v1681 = vadd.f32 %v1610, %v1678
        %v1682 = vadd.f32 %v1611, %v1678
        %v1683 = vadd.f32 %v1612, %v1678
        %v1684 = vadd.f32 %v1613, %v1678
        %v1685 = vadd.f32 %v1614, %v1678
        %v1686 = vadd.f32 %v1615, %v1678
        %v1687 = vadd.f32 %v1616, %v1678
        %v1688 = vadd.f32 %v1617, %v1678
        %v1689 = vadd.f32 %v1618, %v1678
        %v1690 = vadd.f32 %v1619, %v1678
        %v1691 = vadd.f32 %v1620, %v1678
        %v1692 = vadd.f32 %v1621, %v1678
        %v1693 = vadd.f32 %v1622, %v1678
        %v1694 = vadd.f32 %v1623, %v1678
        %v1695 = vadd.f32 %v1624, %v1678
        %v1696 = vadd.f32 %v1625, %v1678
        %v1697 = vadd.f32 %v1626, %v1678
        %v1698 = vadd.f32 %v1627, %v1678
        %v1699 = vadd.f32 %v1628, %v1678
        %v1700 = vadd.f32 %v1629, %v1678
        %v1701 = vadd.f32 %v1630, %v1678
        %v1702 = vadd.f32 %v1631, %v1678
        %v1703 = vadd.f32 %v1632, %v1678
        %v1704 = vadd.f32 %v1633, %v1678
        %v1705 = vadd.f32 %v1634, %v1678
        %v1706 = vadd.f32 %v1635, %v1678
        %v1707 = vadd.f32 %v1636, %v1678
        %v1708 = vadd.f32 %v1637, %v1678
        %v1709 = vadd.f32 %v1638, %v1678
        %v1710 = vadd.f32 %v1639, %v1678
        %v1711 = vadd.f32 %v1640, %v1678
        %v1712 = vadd.f32 %v1641, %v1678
        %v1713 = vadd.f32 %v1642, %v1678
        %v1714 = vadd.f32 %v1643, %v1678
        %v1715 = vadd.f32 %v1644, %v1678
        %v1716 = vadd.f32 %v1645, %v1678
        %v1717 = vadd.f32 %v1646, %v1678
        %v1718 = vadd.f32 %v1647, %v1678
        %v1719 = vadd.f32 %v1648, %v1678
        %v1720 = vadd.f32 %v1649, %v1678
        %v1721 = vadd.f32 %v1650, %v1678
        %v1722 = vadd.f32 %v1651, %v1678
        %v1723 = vadd.f32 %v1652, %v1678
        %v1724 = vadd.f32 %v1653, %v1678
        %v1725 = vadd.f32 %v1654, %v1678
        %v1726 = vadd.f32 %v1655, %v1678
        %v1727 = vadd.f32 %v1656, %v1678
        %v1728 = vadd.f32 %v1657, %v1678
        %v1729 = vadd.f32 %v1658, %v1678
        %v1730 = vadd.f32 %v1659, %v1678
        %v1731 = vadd.f32 %v1660, %v1678
        %v1732 = vadd.f32 %v1661, %v1678
        %v1733 = vadd.f32 %v1662, %v1678
        %v1734 = vadd.f32 %v1663, %v1678
        %v1735 = vadd.f32 %v1664, %v1678
        %v1736 = vadd.f32 %v1665, %v1678
        %v1737 = vadd.f32 %v1666, %v1678
        %v1738 = vadd.f32 %v1667, %v1678
        %v1739 = vadd.f32 %v1668, %v1678
        %v1740 = vadd.f32 %v1669, %v1678
        %v1741 = vadd.f32 %v1670, %v1678
        %v1742 = vadd.f32 %v1671, %v1678
        %v1743 = vadd.f32 %v1672, %v1678
        %v1744 = vmax.f32 %v1680, 0.0
        %v1745 = vmax.f32 %v1681, 0.0
        %v1746 = vmax.f32 %v1682, 0.0
        %v1747 = vmax.f32 %v1683, 0.0
        %v1748 = vmax.f32 %v1684, 0.0
        %v1749 = vmax.f32 %v1685, 0.0
        %v1750 = vmax.f32 %v1686, 0.0
        %v1751 = vmax.f32 %v1687, 0.0
        %v1752 = vmax.f32 %v1688, 0.0
        %v1753 = vmax.f32 %v1689, 0.0
        %v1754 = vmax.f32 %v1690, 0.0
        %v1755 = vmax.f32 %v1691, 0.0
        %v1756 = vmax.f32 %v1692, 0.0
        %v1757 = vmax.f32 %v1693, 0.0
        %v1758 = vmax.f32 %v1694, 0.0
        %v1759 = vmax.f32 %v1695, 0.0
        %v1760 = vmax.f32 %v1696, 0.0
        %v1761 = vmax.f32 %v1697, 0.0
        %v1762 = vmax.f32 %v1698, 0.0
        %v1763 = vmax.f32 %v1699, 0.0
        %v1764 = vmax.f32 %v1700, 0.0
        %v1765 = vmax.f32 %v1701, 0.0
        %v1766 = vmax.f32 %v1702, 0.0
        %v1767 = vmax.f32 %v1703, 0.0
        %v1768 = vmax.f32 %v1704, 0.0
        %v1769 = vmax.f32 %v1705, 0.0
        %v1770 = vmax.f32 %v1706, 0.0
        %v1771 = vmax.f32 %v1707, 0.0
        %v1772 = vmax.f32 %v1708, 0.0
        %v1773 = vmax.f32 %v1709, 0.0
        %v1774 = vmax.f32 %v1710, 0.0
        %v1775 = vmax.f32 %v1711, 0.0
        %v1776 = vmax.f32 %v1712, 0.0
        %v1777 = vmax.f32 %v1713, 0.0
        %v1778 = vmax.f32 %v1714, 0.0
        %v1779 = vmax.f32 %v1715, 0.0
        %v1780 = vmax.f32 %v1716, 0.0
        %v1781 = vmax.f32 %v1717, 0.0
        %v1782 = vmax.f32 %v1718, 0.0
        %v1783 = vmax.f32 %v1719, 0.0
        %v1784 = vmax.f32 %v1720, 0.0
        %v1785 = vmax.f32 %v1721, 0.0
        %v1786 = vmax.f32 %v1722, 0.0
        %v1787 = vmax.f32 %v1723, 0.0
        %v1788 = vmax.f32 %v1724, 0.0
        %v1789 = vmax.f32 %v1725, 0.0
        %v1790 = vmax.f32 %v1726, 0.0
        %v1791 = vmax.f32 %v1727, 0.0
        %v1792 = vmax.f32 %v1728, 0.0
        %v1793 = vmax.f32 %v1729, 0.0
        %v1794 = vmax.f32 %v1730, 0.0
        %v1795 = vmax.f32 %v1731, 0.0
        %v1796 = vmax.f32 %v1732, 0.0
        %v1797 = vmax.f32 %v1733, 0.0
        %v1798 = vmax.f32 %v1734, 0.0
        %v1799 = vmax.f32 %v1735, 0.0
        %v1800 = vmax.f32 %v1736, 0.0
        %v1801 = vmax.f32 %v1737, 0.0
        %v1802 = vmax.f32 %v1738, 0.0
        %v1803 = vmax.f32 %v1739, 0.0
        %v1804 = vmax.f32 %v1740, 0.0
        %v1805 = vmax.f32 %v1741, 0.0
        %v1806 = vmax.f32 %v1742, 0.0
        %v1807 = vmax.f32 %v1743, 0.0
        %v1808 = vpack.c.bf16 %v1745, %v1744
        %v1809 = vpack.c.bf16 %v1747, %v1746
        %v1810 = vpack.c.bf16 %v1749, %v1748
        %v1811 = vpack.c.bf16 %v1751, %v1750
        %v1812 = vpack.c.bf16 %v1753, %v1752
        %v1813 = vpack.c.bf16 %v1755, %v1754
        %v1814 = vpack.c.bf16 %v1757, %v1756
        %v1815 = vpack.c.bf16 %v1759, %v1758
        %v1816 = vpack.c.bf16 %v1761, %v1760
        %v1817 = vpack.c.bf16 %v1763, %v1762
        %v1818 = vpack.c.bf16 %v1765, %v1764
        %v1819 = vpack.c.bf16 %v1767, %v1766
        %v1820 = vpack.c.bf16 %v1769, %v1768
        %v1821 = vpack.c.bf16 %v1771, %v1770
        %v1822 = vpack.c.bf16 %v1773, %v1772
        %v1823 = vpack.c.bf16 %v1775, %v1774
        %v1824 = vpack.c.bf16 %v1777, %v1776
        %v1825 = vpack.c.bf16 %v1779, %v1778
        %v1826 = vpack.c.bf16 %v1781, %v1780
        %v1827 = vpack.c.bf16 %v1783, %v1782
        %v1828 = vpack.c.bf16 %v1785, %v1784
        %v1829 = vpack.c.bf16 %v1787, %v1786
        %v1830 = vpack.c.bf16 %v1789, %v1788
        %v1831 = vpack.c.bf16 %v1791, %v1790
        %v1832 = vpack.c.bf16 %v1793, %v1792
        %v1833 = vpack.c.bf16 %v1795, %v1794
        %v1834 = vpack.c.bf16 %v1797, %v1796
        %v1835 = vpack.c.bf16 %v1799, %v1798
        %v1836 = vpack.c.bf16 %v1801, %v1800
        %v1837 = vpack.c.bf16 %v1803, %v1802
        %v1838 = vpack.c.bf16 %v1805, %v1804
        %v1839 = vpack.c.bf16 %v1807, %v1806
        %v1872 = vunpack.c.l.b16 %v1808
        %v1873 = vunpack.c.h.b16 %v1808
        %v1874 = vunpack.c.l.b16 %v1809
        %v1875 = vunpack.c.h.b16 %v1809
        %v1876 = vunpack.c.l.b16 %v1810
        %v1877 = vunpack.c.h.b16 %v1810
        %v1878 = vunpack.c.l.b16 %v1811
        %v1879 = vunpack.c.h.b16 %v1811
        %v1880 = vunpack.c.l.b16 %v1812
        %v1881 = vunpack.c.h.b16 %v1812
        %v1882 = vunpack.c.l.b16 %v1813
        %v1883 = vunpack.c.h.b16 %v1813
        %v1884 = vunpack.c.l.b16 %v1814
        %v1885 = vunpack.c.h.b16 %v1814
        %v1886 = vunpack.c.l.b16 %v1815
        %v1887 = vunpack.c.h.b16 %v1815
        %v1888 = vunpack.c.l.b16 %v1816
        %v1889 = vunpack.c.h.b16 %v1816
        %v1890 = vunpack.c.l.b16 %v1817
        %v1891 = vunpack.c.h.b16 %v1817
        %v1892 = vunpack.c.l.b16 %v1818
        %v1893 = vunpack.c.h.b16 %v1818
        %v1894 = vunpack.c.l.b16 %v1819
        %v1895 = vunpack.c.h.b16 %v1819
        %v1896 = vunpack.c.l.b16 %v1820
        %v1897 = vunpack.c.h.b16 %v1820
        %v1898 = vunpack.c.l.b16 %v1821
        %v1899 = vunpack.c.h.b16 %v1821
        %v1900 = vunpack.c.l.b16 %v1822
        %v1901 = vunpack.c.h.b16 %v1822
        %v1902 = vunpack.c.l.b16 %v1823
        %v1903 = vunpack.c.h.b16 %v1823
        %v1904 = vunpack.c.l.b16 %v1824
        %v1905 = vunpack.c.h.b16 %v1824
        %v1906 = vunpack.c.l.b16 %v1825
        %v1907 = vunpack.c.h.b16 %v1825
        %v1908 = vunpack.c.l.b16 %v1826
        %v1909 = vunpack.c.h.b16 %v1826
        %v1910 = vunpack.c.l.b16 %v1827
        %v1911 = vunpack.c.h.b16 %v1827
        %v1912 = vunpack.c.l.b16 %v1828
        %v1913 = vunpack.c.h.b16 %v1828
        %v1914 = vunpack.c.l.b16 %v1829
        %v1915 = vunpack.c.h.b16 %v1829
        %v1916 = vunpack.c.l.b16 %v1830
        %v1917 = vunpack.c.h.b16 %v1830
        %v1918 = vunpack.c.l.b16 %v1831
        %v1919 = vunpack.c.h.b16 %v1831
        %v1920 = vunpack.c.l.b16 %v1832
        %v1921 = vunpack.c.h.b16 %v1832
        %v1922 = vunpack.c.l.b16 %v1833
        %v1923 = vunpack.c.h.b16 %v1833
        %v1924 = vunpack.c.l.b16 %v1834
        %v1925 = vunpack.c.h.b16 %v1834
        %v1926 = vunpack.c.l.b16 %v1835
        %v1927 = vunpack.c.h.b16 %v1835
        %v1928 = vunpack.c.l.b16 %v1836
        %v1929 = vunpack.c.h.b16 %v1836
        %v1930 = vunpack.c.l.b16 %v1837
        %v1931 = vunpack.c.h.b16 %v1837
        %v1932 = vunpack.c.l.b16 %v1838
        %v1933 = vunpack.c.h.b16 %v1838
        %v1934 = vunpack.c.l.b16 %v1839
        %v1935 = vunpack.c.h.b16 %v1839
        %v1936 = vpack.c.b16 %v1872, %v1872
        %v1937 = vpack.c.b16 %v1873, %v1873
        %v1938 = vpack.c.b16 %v1874, %v1874
        %v1939 = vpack.c.b16 %v1875, %v1875
        %v1940 = vpack.c.b16 %v1876, %v1876
        %v1941 = vpack.c.b16 %v1877, %v1877
        %v1942 = vpack.c.b16 %v1878, %v1878
        %v1943 = vpack.c.b16 %v1879, %v1879
        %v1944 = vpack.c.b16 %v1880, %v1880
        %v1945 = vpack.c.b16 %v1881, %v1881
        %v1946 = vpack.c.b16 %v1882, %v1882
        %v1947 = vpack.c.b16 %v1883, %v1883
        %v1948 = vpack.c.b16 %v1884, %v1884
        %v1949 = vpack.c.b16 %v1885, %v1885
        %v1950 = vpack.c.b16 %v1886, %v1886
        %v1951 = vpack.c.b16 %v1887, %v1887
        %v1952 = vpack.c.b16 %v1888, %v1888
        %v1953 = vpack.c.b16 %v1889, %v1889
        %v1954 = vpack.c.b16 %v1890, %v1890
        %v1955 = vpack.c.b16 %v1891, %v1891
        %v1956 = vpack.c.b16 %v1892, %v1892
        %v1957 = vpack.c.b16 %v1893, %v1893
        %v1958 = vpack.c.b16 %v1894, %v1894
        %v1959 = vpack.c.b16 %v1895, %v1895
        %v1960 = vpack.c.b16 %v1896, %v1896
        %v1961 = vpack.c.b16 %v1897, %v1897
        %v1962 = vpack.c.b16 %v1898, %v1898
        %v1963 = vpack.c.b16 %v1899, %v1899
        %v1964 = vpack.c.b16 %v1900, %v1900
        %v1965 = vpack.c.b16 %v1901, %v1901
        %v1966 = vpack.c.b16 %v1902, %v1902
        %v1967 = vpack.c.b16 %v1903, %v1903
        %v1968 = vpack.c.b16 %v1904, %v1904
        %v1969 = vpack.c.b16 %v1905, %v1905
        %v1970 = vpack.c.b16 %v1906, %v1906
        %v1971 = vpack.c.b16 %v1907, %v1907
        %v1972 = vpack.c.b16 %v1908, %v1908
        %v1973 = vpack.c.b16 %v1909, %v1909
        %v1974 = vpack.c.b16 %v1910, %v1910
        %v1975 = vpack.c.b16 %v1911, %v1911
        %v1976 = vpack.c.b16 %v1912, %v1912
        %v1977 = vpack.c.b16 %v1913, %v1913
        %v1978 = vpack.c.b16 %v1914, %v1914
        %v1979 = vpack.c.b16 %v1915, %v1915
        %v1980 = vpack.c.b16 %v1916, %v1916
        %v1981 = vpack.c.b16 %v1917, %v1917
        %v1982 = vpack.c.b16 %v1918, %v1918
        %v1983 = vpack.c.b16 %v1919, %v1919
        %v1984 = vpack.c.b16 %v1920, %v1920
        %v1985 = vpack.c.b16 %v1921, %v1921
        %v1986 = vpack.c.b16 %v1922, %v1922
        %v1987 = vpack.c.b16 %v1923, %v1923
        %v1988 = vpack.c.b16 %v1924, %v1924
        %v1989 = vpack.c.b16 %v1925, %v1925
        %v1990 = vpack.c.b16 %v1926, %v1926
        %v1991 = vpack.c.b16 %v1927, %v1927
        %v1992 = vpack.c.b16 %v1928, %v1928
        %v1993 = vpack.c.b16 %v1929, %v1929
        %v1994 = vpack.c.b16 %v1930, %v1930
        %v1995 = vpack.c.b16 %v1931, %v1931
        %v1996 = vpack.c.b16 %v1932, %v1932
        %v1997 = vpack.c.b16 %v1933, %v1933
        %v1998 = vpack.c.b16 %v1934, %v1934
        %v1999 = vpack.c.b16 %v1935, %v1935
        %2064 = vst [vmem:[%s229] sm:$0xf] %v1936
        %2065 = vst [vmem:[%s229 + $0x4] sm:$0xf] %v1937
        %2066 = vst [vmem:[%s229 + $0x8] sm:$0xf] %v1938
        %2067 = vst [vmem:[%s229 + $0xc] sm:$0xf] %v1939
        %2068 = vst [vmem:[%s229 + $0x10] sm:$0xf] %v1940
        %2069 = vst [vmem:[%s229 + $0x14] sm:$0xf] %v1941
        %2070 = vst [vmem:[%s229 + $0x18] sm:$0xf] %v1942
        %2071 = vst [vmem:[%s229 + $0x1c] sm:$0xf] %v1943
        %2072 = vst [vmem:[%s229 + $0x20] sm:$0xf] %v1944
        %2073 = vst [vmem:[%s229 + $0x24] sm:$0xf] %v1945
        %2074 = vst [vmem:[%s229 + $0x28] sm:$0xf] %v1946
        %2075 = vst [vmem:[%s229 + $0x2c] sm:$0xf] %v1947
        %2076 = vst [vmem:[%s229 + $0x30] sm:$0xf] %v1948
        %2077 = vst [vmem:[%s229 + $0x34] sm:$0xf] %v1949
        %2078 = vst [vmem:[%s229 + $0x38] sm:$0xf] %v1950
        %2079 = vst [vmem:[%s229 + $0x3c] sm:$0xf] %v1951
        %2080 = vst [vmem:[%s229 + $0x40] sm:$0xf] %v1952
        %2081 = vst [vmem:[%s229 + $0x44] sm:$0xf] %v1953
        %2082 = vst [vmem:[%s229 + $0x48] sm:$0xf] %v1954
        %2083 = vst [vmem:[%s229 + $0x4c] sm:$0xf] %v1955
        %2084 = vst [vmem:[%s229 + $0x50] sm:$0xf] %v1956
        %2085 = vst [vmem:[%s229 + $0x54] sm:$0xf] %v1957
        %2086 = vst [vmem:[%s229 + $0x58] sm:$0xf] %v1958
        %2087 = vst [vmem:[%s229 + $0x5c] sm:$0xf] %v1959
        %2088 = vst [vmem:[%s229 + $0x60] sm:$0xf] %v1960
        %2089 = vst [vmem:[%s229 + $0x64] sm:$0xf] %v1961
        %2090 = vst [vmem:[%s229 + $0x68] sm:$0xf] %v1962
        %2091 = vst [vmem:[%s229 + $0x6c] sm:$0xf] %v1963
        %2092 = vst [vmem:[%s229 + $0x70] sm:$0xf] %v1964
        %2093 = vst [vmem:[%s229 + $0x74] sm:$0xf] %v1965
        %2094 = vst [vmem:[%s229 + $0x78] sm:$0xf] %v1966
        %2095 = vst [vmem:[%s229 + $0x7c] sm:$0xf] %v1967
        %2096 = vst [vmem:[%s229 + $0x80] sm:$0xf] %v1968
        %2097 = vst [vmem:[%s229 + $0x84] sm:$0xf] %v1969
        %2098 = vst [vmem:[%s229 + $0x88] sm:$0xf] %v1970
        %2099 = vst [vmem:[%s229 + $0x8c] sm:$0xf] %v1971
        %2100 = vst [vmem:[%s229 + $0x90] sm:$0xf] %v1972
        %2101 = vst [vmem:[%s229 + $0x94] sm:$0xf] %v1973
        %2102 = vst [vmem:[%s229 + $0x98] sm:$0xf] %v1974
        %2103 = vst [vmem:[%s229 + $0x9c] sm:$0xf] %v1975
        %2104 = vst [vmem:[%s229 + $0xa0] sm:$0xf] %v1976
        %2105 = vst [vmem:[%s229 + $0xa4] sm:$0xf] %v1977
        %2106 = vst [vmem:[%s229 + $0xa8] sm:$0xf] %v1978
        %2107 = vst [vmem:[%s229 + $0xac] sm:$0xf] %v1979
        %2108 = vst [vmem:[%s229 + $0xb0] sm:$0xf] %v1980
        %2109 = vst [vmem:[%s229 + $0xb4] sm:$0xf] %v1981
        %2110 = vst [vmem:[%s229 + $0xb8] sm:$0xf] %v1982
        %2111 = vst [vmem:[%s229 + $0xbc] sm:$0xf] %v1983
        %2112 = vst [vmem:[%s229 + $0xc0] sm:$0xf] %v1984
        %2113 = vst [vmem:[%s229 + $0xc4] sm:$0xf] %v1985
        %2114 = vst [vmem:[%s229 + $0xc8] sm:$0xf] %v1986
        %2115 = vst [vmem:[%s229 + $0xcc] sm:$0xf] %v1987
        %2116 = vst [vmem:[%s229 + $0xd0] sm:$0xf] %v1988
        %2117 = vst [vmem:[%s229 + $0xd4] sm:$0xf] %v1989
        %2118 = vst [vmem:[%s229 + $0xd8] sm:$0xf] %v1990
        %2119 = vst [vmem:[%s229 + $0xdc] sm:$0xf] %v1991
        %2120 = vst [vmem:[%s229 + $0xe0] sm:$0xf] %v1992
        %2121 = vst [vmem:[%s229 + $0xe4] sm:$0xf] %v1993
        %2122 = vst [vmem:[%s229 + $0xe8] sm:$0xf] %v1994
        %2123 = vst [vmem:[%s229 + $0xec] sm:$0xf] %v1995
        %2124 = vst [vmem:[%s229 + $0xf0] sm:$0xf] %v1996
        %2125 = vst [vmem:[%s229 + $0xf4] sm:$0xf] %v1997
        %2126 = vst [vmem:[%s229 + $0xf8] sm:$0xf] %v1998
        %2127 = vst [vmem:[%s229 + $0xfc] sm:$0xf] %v1999
      $region48: #{residual_branch_forward.2} parent=35 // pred_fallthru
        _
      %s2128 = smul.u32 %s20, %s19
      %s2129 = smul.u32 64, %s2128
      %p2130 = scmp.lt.s32.totalorder %s2129, 63
      %s2131 = scalar_select %p2130, %s2129, 63
      %s2132 = smul.addr %s2131, 4
      %s2133 = scalar_lea.vmem %s4, %s2132
      // Predicated region
      $region53: #{residual_branch_forward.2} parent=35 // pred_check
        %p2134 = pneg %p140
      $region54: #{residual_branch_forward.2} parent=35 // pred_check_branch
        %2136 = sbr.rel (%p2134) target = $region56
      $region55: #{residual_branch_forward.2} parent=35 // pred_region
        %s2137 = smul.u32 %s20, %s19
        %s2138 = smul.u32 64, %s2137
      $region56: #{residual_branch_forward.2} parent=35 // pred_fallthru
        _
    $region36: #{residual_branch_forward.2} parent=5 // pred_fallthru
      _
    %p2139 = scmp.le.s32.totalorder 2, %s10
    // Predicated region
    $region57: #{residual_branch_forward.2} parent=5 // pred_check
      %p2140 = pneg %p2139
    $region58: #{residual_branch_forward.2} parent=5 // pred_check_branch
      %2142 = sbr.rel (%p2140) target = $region60
    $region59: #{residual_branch_forward.2} parent=5 // pred_region
      %s2143 = ssub.s32 %s10, 2
      // Predicated region
      $region61: #{residual_branch_forward.2} parent=59 // pred_check
        %p2144 = pneg %p146
      $region62: #{residual_branch_forward.2} parent=59 // pred_check_branch
        %2146 = sbr.rel (%p2144) target = $region64
      $region63: #{residual_branch_forward.2} parent=59 // pred_region
        %s2147 = smul.u32 %s22, %s21
        %s2148 = smul.u32 64, %s2147
        %p2149 = scmp.lt.s32.totalorder %s2148, 63
        %s2150 = scalar_select %p2149, %s2148, 63
        %s2151 = smul.addr %s2150, 4
        %s2152 = scalar_lea.vmem %s4, %s2151
      $region64: #{residual_branch_forward.2} parent=59 // pred_fallthru
        _
    $region60: #{residual_branch_forward.2} parent=5 // pred_fallthru
      _
  $region6: #{residual_branch_forward.2} parent=0 // loop_footer
    %s14 = sadd.s32 1, %s10
  $region7: #{residual_branch_forward.2} parent=0 // loop_footer_branch
    %9 = sbr.rel target = $region3
  $region8: #{residual_branch_forward.2} parent=0 // loop_exit
    _

// kernel: residual_branch_forward.3
$region0: #{residual_branch_forward.3}
  #allocation0 [shape = 'u32[]', space=smem, size = 0x4, offset = 0x4, fixed_abs, tag = 'smem constant byte address 0x4 - core index']
  #allocation1 [shape = 'u32[144,128]{1,0:T(1,128)}', space=vmem, size = 0x12000, scoped, tag = 'internal scratch']
  #allocation2 [shape = 'f32[512,128]{1,0:T(8,128)}', space=vmem, size = 0x40000, scoped, tag = 'scratch operand']
  #allocation3 [shape = 'f32[1,128]{1,0:T(1,128)}', space=vmem, size = 0x200, scoped, tag = 'scratch operand']
  #allocation4 [shape = 'f32[1,128]{1,0:T(1,128)}', space=vmem, size = 0x200, scoped, tag = 'scratch operand']
  #allocation5 [shape = 'f32[1,128]{1,0:T(1,128)}', space=vmem, size = 0x200, scoped, tag = 'scratch operand']
  #allocation6 [shape = 'f32[1,128]{1,0:T(1,128)}', space=vmem, size = 0x200, scoped, tag = 'scratch operand']
  %s0 = inlined_call_operand.vmem [shape: bf16[512,128], index: 0, kind: input, shape index: {}]
  %s1 = inlined_call_operand.vmem [shape: bf16[128,128], index: 1, kind: input, shape index: {}]
  %s2 = inlined_call_operand.vmem [shape: f32[1,128], index: 2, kind: input, shape index: {}]
  %s3 = inlined_call_operand.vmem [shape: f32[1,128], index: 3, kind: input, shape index: {}]
  %s4 = inlined_call_operand.vmem [shape: f32[512,128], index: 4, kind: output, shape index: {}]
  %s5 = sld [smem:[#allocation0]]
  $region65: #{residual_branch_forward.3} parent=0
    _
  %s7 = ssub.s32 1, %s5
  %s8 = scalar_select 0, %s7, %s5
  loop: start=0, step=1, limit=4
  $region2: #{residual_branch_forward.3} parent=0 // loop_pre_header
    _
  $region3: #{residual_branch_forward.3} parent=0 // loop_header
    %s10 = sphi 0, %s14
    %p11 = scmp.ge.s32.totalorder %s10, 4
    %s17 = sphi 0, %s29
    %s18 = sphi 0, %s25
    %s19 = sphi 0, %s17
    %s20 = sphi 0, %s18
    %s21 = sphi 0, %s19
    %s22 = sphi 0, %s20
    %s36 = sphi 0, %s38
    %s39 = sphi 0, %s36
    %s40 = sphi 0, %s39
    %s56 = sphi 0, %s40
    %s60 = sphi 0, %s60
    %s62 = sphi 0, %s60
    %s63 = sphi 0, %s62
    %s77 = sphi 0, %s63
    %s81 = sphi 0, %s81
    %s83 = sphi 0, %s81
    %s84 = sphi 0, %s83
    %s98 = sphi 0, %s84
    %s102 = sphi 0, %s102
    %s104 = sphi 0, %s102
    %s105 = sphi 0, %s104
    %s119 = sphi 0, %s105
    %s127 = sphi 0, %s129
    %s130 = sphi 0, %s127
    %s131 = sphi 0, %s130
    %s147 = sphi 0, %s131
  $region4: #{residual_branch_forward.3} parent=0 // loop_header_branch
    %13 = sbr.rel (%p11) target = $region8
  $region5: #{residual_branch_forward.3} parent=0 // loop_body
    %s15 = ssub.s32 %s10, 1
    %s16 = ssub.s32 %s10, 2
    %s23 = sadd.s32 1, %s18
    %p24 = scmp.ge.s32.totalorder %s23, 1
    %s25 = scalar_select %p24, 0, %s23
    %s26 = sadd.s32 1, %s17
    %s27 = scalar_select %p24, %s26, %s17
    %p28 = scmp.ge.s32.totalorder %s27, 2
    %s29 = scalar_select %p28, 0, %s27
    %s30 = ssub.s32 1, %s17
    %s31 = smul.u32 %s18, %s30
    %s32 = ssub.s32 1, %s29
    %s33 = smul.u32 %s25, %s32
    %s34 = ssub.s32 %s31, %s33
    %p35 = scmp.eq.s32.totalorder %s34, 0
    %s37 = sadd.s32 %s36, 1
    %s38 = scalar_select %p35, %s36, %s37
    %p41 = pneg %p35
    %p42 = scmp.eq.s32.totalorder %s10, 1
    %p43 = por %p41, %p42
    %p44 = scmp.ne.s32.totalorder %s36, %s39
    %p45 = scmp.eq.s32.totalorder %s10, 0
    %p46 = por %p44, %p45
    %p47 = scmp.ne.s32.totalorder %s36, %s39
    %p48 = scmp.eq.s32.totalorder %s15, 1
    %p49 = por %p47, %p48
    %p50 = scmp.ne.s32.totalorder %s39, %s40
    %p51 = scmp.eq.s32.totalorder %s15, 0
    %p52 = por %p50, %p51
    %p53 = scmp.ne.s32.totalorder %s39, %s40
    %p54 = scmp.eq.s32.totalorder %s16, 1
    %p55 = por %p53, %p54
    %p57 = scmp.ne.s32.totalorder %s40, %s56
    %p58 = scmp.eq.s32.totalorder %s16, 0
    %p59 = por %p57, %p58
    %s61 = sadd.s32 %s60, 1
    %p64 = scmp.eq.s32.totalorder %s10, 1
    %p65 = scmp.ne.s32.totalorder %s60, %s62
    %p66 = scmp.eq.s32.totalorder %s10, 0
    %p67 = por %p65, %p66
    %p68 = scmp.ne.s32.totalorder %s60, %s62
    %p69 = scmp.eq.s32.totalorder %s15, 1
    %p70 = por %p68, %p69
    %p71 = scmp.ne.s32.totalorder %s62, %s63
    %p72 = scmp.eq.s32.totalorder %s15, 0
    %p73 = por %p71, %p72
    %p74 = scmp.ne.s32.totalorder %s62, %s63
    %p75 = scmp.eq.s32.totalorder %s16, 1
    %p76 = por %p74, %p75
    %p78 = scmp.ne.s32.totalorder %s63, %s77
    %p79 = scmp.eq.s32.totalorder %s16, 0
    %p80 = por %p78, %p79
    %s82 = sadd.s32 %s81, 1
    %p85 = scmp.eq.s32.totalorder %s10, 1
    %p86 = scmp.ne.s32.totalorder %s81, %s83
    %p87 = scmp.eq.s32.totalorder %s10, 0
    %p88 = por %p86, %p87
    %p89 = scmp.ne.s32.totalorder %s81, %s83
    %p90 = scmp.eq.s32.totalorder %s15, 1
    %p91 = por %p89, %p90
    %p92 = scmp.ne.s32.totalorder %s83, %s84
    %p93 = scmp.eq.s32.totalorder %s15, 0
    %p94 = por %p92, %p93
    %p95 = scmp.ne.s32.totalorder %s83, %s84
    %p96 = scmp.eq.s32.totalorder %s16, 1
    %p97 = por %p95, %p96
    %p99 = scmp.ne.s32.totalorder %s84, %s98
    %p100 = scmp.eq.s32.totalorder %s16, 0
    %p101 = por %p99, %p100
    %s103 = sadd.s32 %s102, 1
    %p106 = scmp.eq.s32.totalorder %s10, 1
    %p107 = scmp.ne.s32.totalorder %s102, %s104
    %p108 = scmp.eq.s32.totalorder %s10, 0
    %p109 = por %p107, %p108
    %p110 = scmp.ne.s32.totalorder %s102, %s104
    %p111 = scmp.eq.s32.totalorder %s15, 1
    %p112 = por %p110, %p111
    %p113 = scmp.ne.s32.totalorder %s104, %s105
    %p114 = scmp.eq.s32.totalorder %s15, 0
    %p115 = por %p113, %p114
    %p116 = scmp.ne.s32.totalorder %s104, %s105
    %p117 = scmp.eq.s32.totalorder %s16, 1
    %p118 = por %p116, %p117
    %p120 = scmp.ne.s32.totalorder %s105, %s119
    %p121 = scmp.eq.s32.totalorder %s16, 0
    %p122 = por %p120, %p121
    %s123 = smul.u32 %s18, %s17
    %s124 = smul.u32 %s25, %s29
    %s125 = ssub.s32 %s123, %s124
    %p126 = scmp.eq.s32.totalorder %s125, 0
    %s128 = sadd.s32 %s127, 1
    %s129 = scalar_select %p126, %s127, %s128
    %p132 = pneg %p126
    %p133 = scmp.eq.s32.totalorder %s10, 1
    %p134 = por %p132, %p133
    %p135 = scmp.ne.s32.totalorder %s127, %s130
    %p136 = scmp.eq.s32.totalorder %s10, 0
    %p137 = por %p135, %p136
    %p138 = scmp.ne.s32.totalorder %s127, %s130
    %p139 = scmp.eq.s32.totalorder %s15, 1
    %p140 = por %p138, %p139
    %p141 = scmp.ne.s32.totalorder %s130, %s131
    %p142 = scmp.eq.s32.totalorder %s15, 0
    %p143 = por %p141, %p142
    %p144 = scmp.ne.s32.totalorder %s130, %s131
    %p145 = scmp.eq.s32.totalorder %s16, 1
    %p146 = por %p144, %p145
    %p148 = scmp.ne.s32.totalorder %s131, %s147
    %p149 = scmp.eq.s32.totalorder %s16, 0
    %p150 = por %p148, %p149
    %p151 = scmp.le.s32.totalorder 1, %s10
    %p152 = scmp.lt.s32.totalorder %s10, 3
    %p153 = pnand %p151, %p152
    %p154 = pneg %p153
    // Predicated region
    $region9: #{residual_branch_forward.3} parent=5 // pred_check
      _
    $region10: #{residual_branch_forward.3} parent=5 // pred_check_branch
      %156 = sbr.rel (%p153) target = $region12
    $region11: #{residual_branch_forward.3} parent=5 // pred_region
      %s157 = ssub.s32 %s10, 1
      // Predicated region
      $region13: #{residual_branch_forward.3} parent=11 // pred_check
        %p158 = pneg %p73
      $region14: #{residual_branch_forward.3} parent=11 // pred_check_branch
        %160 = sbr.rel (%p158) target = $region16
      $region15: #{residual_branch_forward.3} parent=11 // pred_region
        _
      $region16: #{residual_branch_forward.3} parent=11 // pred_fallthru
        _
      // Predicated region
      $region17: #{residual_branch_forward.3} parent=11 // pred_check
        %p161 = pneg %p94
      $region18: #{residual_branch_forward.3} parent=11 // pred_check_branch
        %163 = sbr.rel (%p161) target = $region20
      $region19: #{residual_branch_forward.3} parent=11 // pred_region
        _
      $region20: #{residual_branch_forward.3} parent=11 // pred_fallthru
        _
      // Predicated region
      $region21: #{residual_branch_forward.3} parent=11 // pred_check
        %p164 = pneg %p115
      $region22: #{residual_branch_forward.3} parent=11 // pred_check_branch
        %166 = sbr.rel (%p164) target = $region24
      $region23: #{residual_branch_forward.3} parent=11 // pred_region
        _
      $region24: #{residual_branch_forward.3} parent=11 // pred_fallthru
        _
    $region12: #{residual_branch_forward.3} parent=5 // pred_fallthru
      _
    %p167 = scmp.lt.s32.totalorder %s10, 2
    // Predicated region
    $region25: #{residual_branch_forward.3} parent=5 // pred_check
      %p168 = pneg %p167
    $region26: #{residual_branch_forward.3} parent=5 // pred_check_branch
      %170 = sbr.rel (%p168) target = $region28
    $region27: #{residual_branch_forward.3} parent=5 // pred_region
      // Predicated region
      $region29: #{residual_branch_forward.3} parent=27 // pred_check
        %p171 = pneg %p46
      $region30: #{residual_branch_forward.3} parent=27 // pred_check_branch
        %173 = sbr.rel (%p171) target = $region32
      $region31: #{residual_branch_forward.3} parent=27 // pred_region
        %s174 = ssub.s32 1, %s17
        %s175 = smul.u32 %s18, %s174
        %s176 = smul.u32 64, %s175
        %p177 = scmp.lt.s32.totalorder %s176, 63
        %s178 = scalar_select %p177, %s176, 63
        %s179 = smul.addr %s178, 4
        %s180 = scalar_lea.vmem %s0, %s179
        %s181 = ssub.s32 1, %s17
        %s182 = smul.u32 %s18, %s181
        %s183 = smul.u32 64, %s182
      $region32: #{residual_branch_forward.3} parent=27 // pred_fallthru
        _
    $region28: #{residual_branch_forward.3} parent=5 // pred_fallthru
      _
    %p184 = scmp.le.s32.totalorder 1, %s10
    %p185 = scmp.lt.s32.totalorder %s10, 3
    %p186 = pnand %p184, %p185
    %p187 = pneg %p186
    // Predicated region
    $region33: #{residual_branch_forward.3} parent=5 // pred_check
      _
    $region34: #{residual_branch_forward.3} parent=5 // pred_check_branch
      %189 = sbr.rel (%p186) target = $region36
    $region35: #{residual_branch_forward.3} parent=5 // pred_region
      %s190 = ssub.s32 %s10, 1
      %s191 = ssub.s32 1, %s19
      %s192 = smul.u32 %s20, %s191
      %s193 = smul.u32 64, %s192
      %p194 = scmp.lt.s32.totalorder %s193, 63
      %s195 = scalar_select %p194, %s193, 63
      %s196 = smul.addr %s195, 4
      %s197 = scalar_lea.vmem %s0, %s196
      %p198 = pneg %p52
      %p199 = pneg %p49
      %p200 = pneg %p73
      %p201 = pneg %p70
      %p202 = pneg %p94
      %p203 = pneg %p91
      %p204 = pneg %p115
      %p205 = pneg %p112
      %p206 = pneg %p143
      %p207 = pneg %p140
      %s208 = smul.u32 %s20, %s19
      %s209 = smul.u32 64, %s208
      %p210 = scmp.lt.s32.totalorder %s209, 63
      %s211 = scalar_select %p210, %s209, 63
      %s212 = smul.addr %s211, 8
      %s213 = scalar_lea.vmem %s4, %s212
      %s214 = ssub.s32 1, %s19
      %s215 = smul.u32 %s20, %s214
      %s216 = smul.u32 64, %s215
      %p217 = scmp.lt.s32.totalorder %s216, 63
      %s218 = scalar_select %p217, %s216, 63
      %s219 = smul.addr %s218, 4
      %s220 = scalar_lea.vmem %s0, %s219
      %s221 = ssub.s32 1, %s19
      %s222 = smul.u32 %s20, %s221
      %s223 = smul.u32 64, %s222
      %s224 = smul.u32 %s20, %s19
      %s225 = smul.u32 64, %s224
      %p226 = scmp.lt.s32.totalorder %s225, 63
      %s227 = scalar_select %p226, %s225, 63
      %s228 = smul.addr %s227, 8
      %s229 = scalar_lea.vmem %s4, %s228
      %s230 = smul.u32 %s20, %s19
      %s231 = smul.u32 64, %s230
      %s233 = smul.u32 %s20, 512
      %p234 = scmp.eq.s32.totalorder %s19, 0
      // Predicated region
      $region37: #{residual_branch_forward.3} parent=35 // pred_check
        %p235 = pneg %p234
      $region38: #{residual_branch_forward.3} parent=35 // pred_check_branch
        %237 = sbr.rel (%p235) target = $region40
      $region39: #{residual_branch_forward.3} parent=35 // pred_region
        %p238 = scmp.eq.s32.totalorder %s20, 0
        // Predicated region
        $region41: #{residual_branch_forward.3} parent=39 // pred_check
          %p239 = pneg %p238
        $region42: #{residual_branch_forward.3} parent=39 // pred_check_branch
          %241 = sbr.rel (%p239) target = $region44
        $region43: #{residual_branch_forward.3} parent=39 // pred_region
          %242 = vst [vmem:[#allocation3] sm:$0x1] 0.0
          %243 = vst [vmem:[#allocation4] sm:$0x1] 0.0
        $region44: #{residual_branch_forward.3} parent=39 // pred_fallthru
          _
        %v244 = vld [vmem:[%s220] sm:$0xf]
        %v245 = vld [vmem:[%s220 + $0x4] sm:$0xf]
        %v246 = vld [vmem:[%s220 + $0x8] sm:$0xf]
        %v247 = vld [vmem:[%s220 + $0xc] sm:$0xf]
        %v248 = vld [vmem:[%s220 + $0x10] sm:$0xf]
        %v249 = vld [vmem:[%s220 + $0x14] sm:$0xf]
        %v250 = vld [vmem:[%s220 + $0x18] sm:$0xf]
        %v251 = vld [vmem:[%s220 + $0x1c] sm:$0xf]
        %v252 = vld [vmem:[%s220 + $0x20] sm:$0xf]
        %v253 = vld [vmem:[%s220 + $0x24] sm:$0xf]
        %v254 = vld [vmem:[%s220 + $0x28] sm:$0xf]
        %v255 = vld [vmem:[%s220 + $0x2c] sm:$0xf]
        %v256 = vld [vmem:[%s220 + $0x30] sm:$0xf]
        %v257 = vld [vmem:[%s220 + $0x34] sm:$0xf]
        %v258 = vld [vmem:[%s220 + $0x38] sm:$0xf]
        %v259 = vld [vmem:[%s220 + $0x3c] sm:$0xf]
        %v260 = vld [vmem:[%s220 + $0x40] sm:$0xf]
        %v261 = vld [vmem:[%s220 + $0x44] sm:$0xf]
        %v262 = vld [vmem:[%s220 + $0x48] sm:$0xf]
        %v263 = vld [vmem:[%s220 + $0x4c] sm:$0xf]
        %v264 = vld [vmem:[%s220 + $0x50] sm:$0xf]
        %v265 = vld [vmem:[%s220 + $0x54] sm:$0xf]
        %v266 = vld [vmem:[%s220 + $0x58] sm:$0xf]
        %v267 = vld [vmem:[%s220 + $0x5c] sm:$0xf]
        %v268 = vld [vmem:[%s220 + $0x60] sm:$0xf]
        %v269 = vld [vmem:[%s220 + $0x64] sm:$0xf]
        %v270 = vld [vmem:[%s220 + $0x68] sm:$0xf]
        %v271 = vld [vmem:[%s220 + $0x6c] sm:$0xf]
        %v272 = vld [vmem:[%s220 + $0x70] sm:$0xf]
        %v273 = vld [vmem:[%s220 + $0x74] sm:$0xf]
        %v274 = vld [vmem:[%s220 + $0x78] sm:$0xf]
        %v275 = vld [vmem:[%s220 + $0x7c] sm:$0xf]
        %v276 = vld [vmem:[%s220 + $0x80] sm:$0xf]
        %v277 = vld [vmem:[%s220 + $0x84] sm:$0xf]
        %v278 = vld [vmem:[%s220 + $0x88] sm:$0xf]
        %v279 = vld [vmem:[%s220 + $0x8c] sm:$0xf]
        %v280 = vld [vmem:[%s220 + $0x90] sm:$0xf]
        %v281 = vld [vmem:[%s220 + $0x94] sm:$0xf]
        %v282 = vld [vmem:[%s220 + $0x98] sm:$0xf]
        %v283 = vld [vmem:[%s220 + $0x9c] sm:$0xf]
        %v284 = vld [vmem:[%s220 + $0xa0] sm:$0xf]
        %v285 = vld [vmem:[%s220 + $0xa4] sm:$0xf]
        %v286 = vld [vmem:[%s220 + $0xa8] sm:$0xf]
        %v287 = vld [vmem:[%s220 + $0xac] sm:$0xf]
        %v288 = vld [vmem:[%s220 + $0xb0] sm:$0xf]
        %v289 = vld [vmem:[%s220 + $0xb4] sm:$0xf]
        %v290 = vld [vmem:[%s220 + $0xb8] sm:$0xf]
        %v291 = vld [vmem:[%s220 + $0xbc] sm:$0xf]
        %v292 = vld [vmem:[%s220 + $0xc0] sm:$0xf]
        %v293 = vld [vmem:[%s220 + $0xc4] sm:$0xf]
        %v294 = vld [vmem:[%s220 + $0xc8] sm:$0xf]
        %v295 = vld [vmem:[%s220 + $0xcc] sm:$0xf]
        %v296 = vld [vmem:[%s220 + $0xd0] sm:$0xf]
        %v297 = vld [vmem:[%s220 + $0xd4] sm:$0xf]
        %v298 = vld [vmem:[%s220 + $0xd8] sm:$0xf]
        %v299 = vld [vmem:[%s220 + $0xdc] sm:$0xf]
        %v300 = vld [vmem:[%s220 + $0xe0] sm:$0xf]
        %v301 = vld [vmem:[%s220 + $0xe4] sm:$0xf]
        %v302 = vld [vmem:[%s220 + $0xe8] sm:$0xf]
        %v303 = vld [vmem:[%s220 + $0xec] sm:$0xf]
        %v304 = vld [vmem:[%s220 + $0xf0] sm:$0xf]
        %v305 = vld [vmem:[%s220 + $0xf4] sm:$0xf]
        %v306 = vld [vmem:[%s220 + $0xf8] sm:$0xf]
        %v307 = vld [vmem:[%s220 + $0xfc] sm:$0xf]
        %v308 = vld [vmem:[%s1] sm:$0xf]
        %v309 = vld [vmem:[%s1 + $0x4] sm:$0xf]
        %v310 = vld [vmem:[%s1 + $0x8] sm:$0xf]
        %v311 = vld [vmem:[%s1 + $0xc] sm:$0xf]
        %v312 = vld [vmem:[%s1 + $0x10] sm:$0xf]
        %v313 = vld [vmem:[%s1 + $0x14] sm:$0xf]
        %v314 = vld [vmem:[%s1 + $0x18] sm:$0xf]
        %v315 = vld [vmem:[%s1 + $0x1c] sm:$0xf]
        %v316 = vld [vmem:[%s1 + $0x20] sm:$0xf]
        %v317 = vld [vmem:[%s1 + $0x24] sm:$0xf]
        %v318 = vld [vmem:[%s1 + $0x28] sm:$0xf]
        %v319 = vld [vmem:[%s1 + $0x2c] sm:$0xf]
        %v320 = vld [vmem:[%s1 + $0x30] sm:$0xf]
        %v321 = vld [vmem:[%s1 + $0x34] sm:$0xf]
        %v322 = vld [vmem:[%s1 + $0x38] sm:$0xf]
        %v323 = vld [vmem:[%s1 + $0x3c] sm:$0xf]
        %v388 = vunpack.c.l.b16 %v244
        %v389 = vunpack.c.l.b16 %v245
        %v390 = vunpack.c.l.b16 %v246
        %v391 = vunpack.c.l.b16 %v247
        %v392 = vunpack.c.l.b16 %v248
        %v393 = vunpack.c.l.b16 %v249
        %v394 = vunpack.c.l.b16 %v250
        %v395 = vunpack.c.l.b16 %v251
        %v396 = vunpack.c.l.b16 %v252
        %v397 = vunpack.c.l.b16 %v253
        %v398 = vunpack.c.l.b16 %v254
        %v399 = vunpack.c.l.b16 %v255
        %v400 = vunpack.c.l.b16 %v256
        %v401 = vunpack.c.l.b16 %v257
        %v402 = vunpack.c.l.b16 %v258
        %v403 = vunpack.c.l.b16 %v259
        %v404 = vunpack.c.l.b16 %v260
        %v405 = vunpack.c.l.b16 %v261
        %v406 = vunpack.c.l.b16 %v262
        %v407 = vunpack.c.l.b16 %v263
        %v408 = vunpack.c.l.b16 %v264
        %v409 = vunpack.c.l.b16 %v265
        %v410 = vunpack.c.l.b16 %v266
        %v411 = vunpack.c.l.b16 %v267
        %v412 = vunpack.c.l.b16 %v268
        %v413 = vunpack.c.l.b16 %v269
        %v414 = vunpack.c.l.b16 %v270
        %v415 = vunpack.c.l.b16 %v271
        %v416 = vunpack.c.l.b16 %v272
        %v417 = vunpack.c.l.b16 %v273
        %v418 = vunpack.c.l.b16 %v274
        %v419 = vunpack.c.l.b16 %v275
        %v420 = vunpack.c.l.b16 %v276
        %v421 = vunpack.c.l.b16 %v277
        %v422 = vunpack.c.l.b16 %v278
        %v423 = vunpack.c.l.b16 %v279
        %v424 = vunpack.c.l.b16 %v280
        %v425 = vunpack.c.l.b16 %v281
        %v426 = vunpack.c.l.b16 %v282
        %v427 = vunpack.c.l.b16 %v283
        %v428 = vunpack.c.l.b16 %v284
        %v429 = vunpack.c.l.b16 %v285
        %v430 = vunpack.c.l.b16 %v286
        %v431 = vunpack.c.l.b16 %v287
        %v432 = vunpack.c.l.b16 %v288
        %v433 = vunpack.c.l.b16 %v289
        %v434 = vunpack.c.l.b16 %v290
        %v435 = vunpack.c.l.b16 %v291
        %v436 = vunpack.c.l.b16 %v292
        %v437 = vunpack.c.l.b16 %v293
        %v438 = vunpack.c.l.b16 %v294
        %v439 = vunpack.c.l.b16 %v295
        %v440 = vunpack.c.l.b16 %v296
        %v441 = vunpack.c.l.b16 %v297
        %v442 = vunpack.c.l.b16 %v298
        %v443 = vunpack.c.l.b16 %v299
        %v444 = vunpack.c.l.b16 %v300
        %v445 = vunpack.c.l.b16 %v301
        %v446 = vunpack.c.l.b16 %v302
        %v447 = vunpack.c.l.b16 %v303
        %v448 = vunpack.c.l.b16 %v304
        %v449 = vunpack.c.l.b16 %v305
        %v450 = vunpack.c.l.b16 %v306
        %v451 = vunpack.c.l.b16 %v307
        %v452 = vpack.c.b16 %v389, %v388
        %v453 = vpack.c.b16 %v391, %v390
        %v454 = vpack.c.b16 %v393, %v392
        %v455 = vpack.c.b16 %v395, %v394
        %v456 = vpack.c.b16 %v397, %v396
        %v457 = vpack.c.b16 %v399, %v398
        %v458 = vpack.c.b16 %v401, %v400
        %v459 = vpack.c.b16 %v403, %v402
        %v460 = vpack.c.b16 %v405, %v404
        %v461 = vpack.c.b16 %v407, %v406
        %v462 = vpack.c.b16 %v409, %v408
        %v463 = vpack.c.b16 %v411, %v410
        %v464 = vpack.c.b16 %v413, %v412
        %v465 = vpack.c.b16 %v415, %v414
        %v466 = vpack.c.b16 %v417, %v416
        %v467 = vpack.c.b16 %v419, %v418
        %v468 = vpack.c.b16 %v421, %v420
        %v469 = vpack.c.b16 %v423, %v422
        %v470 = vpack.c.b16 %v425, %v424
        %v471 = vpack.c.b16 %v427, %v426
        %v472 = vpack.c.b16 %v429, %v428
        %v473 = vpack.c.b16 %v431, %v430
        %v474 = vpack.c.b16 %v433, %v432
        %v475 = vpack.c.b16 %v435, %v434
        %v476 = vpack.c.b16 %v437, %v436
        %v477 = vpack.c.b16 %v439, %v438
        %v478 = vpack.c.b16 %v441, %v440
        %v479 = vpack.c.b16 %v443, %v442
        %v480 = vpack.c.b16 %v445, %v444
        %v481 = vpack.c.b16 %v447, %v446
        %v482 = vpack.c.b16 %v449, %v448
        %v483 = vpack.c.b16 %v451, %v450
        %v532 = vunpack.c.l.b16 %v308
        %v533 = vunpack.c.l.b16 %v309
        %v534 = vunpack.c.l.b16 %v310
        %v535 = vunpack.c.l.b16 %v311
        %v536 = vunpack.c.l.b16 %v312
        %v537 = vunpack.c.l.b16 %v313
        %v538 = vunpack.c.l.b16 %v314
        %v539 = vunpack.c.l.b16 %v315
        %v540 = vunpack.c.l.b16 %v316
        %v541 = vunpack.c.l.b16 %v317
        %v542 = vunpack.c.l.b16 %v318
        %v543 = vunpack.c.l.b16 %v319
        %v544 = vunpack.c.l.b16 %v320
        %v545 = vunpack.c.l.b16 %v321
        %v546 = vunpack.c.l.b16 %v322
        %v547 = vunpack.c.l.b16 %v323
        %v548 = vpack.c.b16 %v533, %v532
        %v549 = vpack.c.b16 %v535, %v534
        %v550 = vpack.c.b16 %v537, %v536
        %v551 = vpack.c.b16 %v539, %v538
        %v552 = vpack.c.b16 %v541, %v540
        %v553 = vpack.c.b16 %v543, %v542
        %v554 = vpack.c.b16 %v545, %v544
        %v555 = vpack.c.b16 %v547, %v546
        %564 = vmatprep.subr.bf16.mxu0 0
        %565 = vmatpush1.bf16.msra.mxu0 %v548
        %566 = vmatprep.subr.bf16.mxu0 0
        %567 = vmatpush1.bf16.msra.mxu0 %v549
        %568 = vmatprep.subr.bf16.mxu0 0
        %569 = vmatpush1.bf16.msra.mxu0 %v550
        %570 = vmatprep.subr.bf16.mxu0 0
        %571 = vmatpush1.bf16.msra.mxu0 %v551
        %572 = vmatprep.subr.bf16.mxu0 0
        %573 = vmatpush1.bf16.msra.mxu0 %v552
        %574 = vmatprep.subr.bf16.mxu0 0
        %575 = vmatpush1.bf16.msra.mxu0 %v553
        %576 = vmatprep.subr.bf16.mxu0 0
        %577 = vmatpush1.bf16.msra.mxu0 %v554
        %578 = vmatprep.subr.bf16.mxu0 0
        %579 = vmatpush1.bf16.msra.mxu0 %v555
        %580 = vmatprep.subr.bf16.mxu0 0
        %581 = vmatpush1.bf16.msra.mxu0 0
        %582 = vmatprep.subr.bf16.mxu0 0
        %583 = vmatpush1.bf16.msra.mxu0 0
        %584 = vmatprep.subr.bf16.mxu0 0
        %585 = vmatpush1.bf16.msra.mxu0 0
        %586 = vmatprep.subr.bf16.mxu0 0
        %587 = vmatpush1.bf16.msra.mxu0 0
        %588 = vmatprep.subr.bf16.mxu0 0
        %589 = vmatpush1.bf16.msra.mxu0 0
        %590 = vmatprep.subr.bf16.mxu0 0
        %591 = vmatpush1.bf16.msra.mxu0 0
        %592 = vmatprep.subr.bf16.mxu0 0
        %593 = vmatpush1.bf16.msra.mxu0 0
        %594 = vmatprep.subr.bf16.mxu0 0
        %595 = vmatpush1.bf16.msra.mxu0 0
        %596 = vmatprep.mubr.bf16.mxu0 0
        %597 = vmatmul.mubr.bf16.gmra.mrb[0].mxu0 %v452
        %v598 = vpop.f32.mrb[0].mxu0
        %v599 = vadd.f32 0.0, %v598
        %v600 = vpop.f32.mrb[0].mxu0
        %v601 = vpop.f32.mrb[0].mxu0
        %v602 = vadd.f32 0.0, %v601
        %v603 = vpop.f32.mrb[0].mxu0
        %604 = vmatprep.mubr.bf16.mxu0 0
        %605 = vmatmul.mubr.bf16.gmra.mrb[0].mxu0 %v453
        %v606 = vpop.f32.mrb[0].mxu0
        %v607 = vadd.f32 0.0, %v606
        %v608 = vpop.f32.mrb[0].mxu0
        %v609 = vpop.f32.mrb[0].mxu0
        %v610 = vadd.f32 0.0, %v609
        %v611 = vpop.f32.mrb[0].mxu0
        %612 = vmatprep.mubr.bf16.mxu0 0
        %613 = vmatmul.mubr.bf16.gmra.mrb[0].mxu0 %v454
        %v614 = vpop.f32.mrb[0].mxu0
        %v615 = vadd.f32 0.0, %v614
        %v616 = vpop.f32.mrb[0].mxu0
        %v617 = vpop.f32.mrb[0].mxu0
        %v618 = vadd.f32 0.0, %v617
        %v619 = vpop.f32.mrb[0].mxu0
        %620 = vmatprep.mubr.bf16.mxu0 0
        %621 = vmatmul.mubr.bf16.gmra.mrb[0].mxu0 %v455
        %v622 = vpop.f32.mrb[0].mxu0
        %v623 = vadd.f32 0.0, %v622
        %v624 = vpop.f32.mrb[0].mxu0
        %v625 = vpop.f32.mrb[0].mxu0
        %v626 = vadd.f32 0.0, %v625
        %v627 = vpop.f32.mrb[0].mxu0
        %628 = vmatprep.mubr.bf16.mxu0 0
        %629 = vmatmul.mubr.bf16.gmra.mrb[0].mxu0 %v456
        %v630 = vpop.f32.mrb[0].mxu0
        %v631 = vadd.f32 0.0, %v630
        %v632 = vpop.f32.mrb[0].mxu0
        %v633 = vpop.f32.mrb[0].mxu0
        %v634 = vadd.f32 0.0, %v633
        %v635 = vpop.f32.mrb[0].mxu0
        %636 = vmatprep.mubr.bf16.mxu0 0
        %637 = vmatmul.mubr.bf16.gmra.mrb[0].mxu0 %v457
        %v638 = vpop.f32.mrb[0].mxu0
        %v639 = vadd.f32 0.0, %v638
        %v640 = vpop.f32.mrb[0].mxu0
        %v641 = vpop.f32.mrb[0].mxu0
        %v642 = vadd.f32 0.0, %v641
        %v643 = vpop.f32.mrb[0].mxu0
        %644 = vmatprep.mubr.bf16.mxu0 0
        %645 = vmatmul.mubr.bf16.gmra.mrb[0].mxu0 %v458
        %v646 = vpop.f32.mrb[0].mxu0
        %v647 = vadd.f32 0.0, %v646
        %v648 = vpop.f32.mrb[0].mxu0
        %v649 = vpop.f32.mrb[0].mxu0
        %v650 = vadd.f32 0.0, %v649
        %v651 = vpop.f32.mrb[0].mxu0
        %652 = vmatprep.mubr.bf16.mxu0 0
        %653 = vmatmul.mubr.bf16.gmra.mrb[0].mxu0 %v459
        %v654 = vpop.f32.mrb[0].mxu0
        %v655 = vadd.f32 0.0, %v654
        %v656 = vpop.f32.mrb[0].mxu0
        %v657 = vpop.f32.mrb[0].mxu0
        %v658 = vadd.f32 0.0, %v657
        %v659 = vpop.f32.mrb[0].mxu0
        %660 = vmatprep.mubr.bf16.mxu0 0
        %661 = vmatmul.mubr.bf16.gmra.mrb[0].mxu0 %v460
        %v662 = vpop.f32.mrb[0].mxu0
        %v663 = vadd.f32 0.0, %v662
        %v664 = vpop.f32.mrb[0].mxu0
        %v665 = vpop.f32.mrb[0].mxu0
        %v666 = vadd.f32 0.0, %v665
        %v667 = vpop.f32.mrb[0].mxu0
        %668 = vmatprep.mubr.bf16.mxu0 0
        %669 = vmatmul.mubr.bf16.gmra.mrb[0].mxu0 %v461
        %v670 = vpop.f32.mrb[0].mxu0
        %v671 = vadd.f32 0.0, %v670
        %v672 = vpop.f32.mrb[0].mxu0
        %v673 = vpop.f32.mrb[0].mxu0
        %v674 = vadd.f32 0.0, %v673
        %v675 = vpop.f32.mrb[0].mxu0
        %676 = vmatprep.mubr.bf16.mxu0 0
        %677 = vmatmul.mubr.bf16.gmra.mrb[0].mxu0 %v462
        %v678 = vpop.f32.mrb[0].mxu0
        %v679 = vadd.f32 0.0, %v678
        %v680 = vpop.f32.mrb[0].mxu0
        %v681 = vpop.f32.mrb[0].mxu0
        %v682 = vadd.f32 0.0, %v681
        %v683 = vpop.f32.mrb[0].mxu0
        %684 = vmatprep.mubr.bf16.mxu0 0
        %685 = vmatmul.mubr.bf16.gmra.mrb[0].mxu0 %v463
        %v686 = vpop.f32.mrb[0].mxu0
        %v687 = vadd.f32 0.0, %v686
        %v688 = vpop.f32.mrb[0].mxu0
        %v689 = vpop.f32.mrb[0].mxu0
        %v690 = vadd.f32 0.0, %v689
        %v691 = vpop.f32.mrb[0].mxu0
        %692 = vmatprep.mubr.bf16.mxu0 0
        %693 = vmatmul.mubr.bf16.gmra.mrb[0].mxu0 %v464
        %v694 = vpop.f32.mrb[0].mxu0
        %v695 = vadd.f32 0.0, %v694
        %v696 = vpop.f32.mrb[0].mxu0
        %v697 = vpop.f32.mrb[0].mxu0
        %v698 = vadd.f32 0.0, %v697
        %v699 = vpop.f32.mrb[0].mxu0
        %700 = vmatprep.mubr.bf16.mxu0 0
        %701 = vmatmul.mubr.bf16.gmra.mrb[0].mxu0 %v465
        %v702 = vpop.f32.mrb[0].mxu0
        %v703 = vadd.f32 0.0, %v702
        %v704 = vpop.f32.mrb[0].mxu0
        %v705 = vpop.f32.mrb[0].mxu0
        %v706 = vadd.f32 0.0, %v705
        %v707 = vpop.f32.mrb[0].mxu0
        %708 = vmatprep.mubr.bf16.mxu0 0
        %709 = vmatmul.mubr.bf16.gmra.mrb[0].mxu0 %v466
        %v710 = vpop.f32.mrb[0].mxu0
        %v711 = vadd.f32 0.0, %v710
        %v712 = vpop.f32.mrb[0].mxu0
        %v713 = vpop.f32.mrb[0].mxu0
        %v714 = vadd.f32 0.0, %v713
        %v715 = vpop.f32.mrb[0].mxu0
        %716 = vmatprep.mubr.bf16.mxu0 0
        %717 = vmatmul.mubr.bf16.gmra.mrb[0].mxu0 %v467
        %v718 = vpop.f32.mrb[0].mxu0
        %v719 = vadd.f32 0.0, %v718
        %v720 = vpop.f32.mrb[0].mxu0
        %v721 = vpop.f32.mrb[0].mxu0
        %v722 = vadd.f32 0.0, %v721
        %v723 = vpop.f32.mrb[0].mxu0
        %724 = vmatprep.mubr.bf16.mxu0 0
        %725 = vmatmul.mubr.bf16.gmra.mrb[0].mxu0 %v468
        %v726 = vpop.f32.mrb[0].mxu0
        %v727 = vadd.f32 0.0, %v726
        %v728 = vpop.f32.mrb[0].mxu0
        %v729 = vpop.f32.mrb[0].mxu0
        %v730 = vadd.f32 0.0, %v729
        %v731 = vpop.f32.mrb[0].mxu0
        %732 = vmatprep.mubr.bf16.mxu0 0
        %733 = vmatmul.mubr.bf16.gmra.mrb[0].mxu0 %v469
        %v734 = vpop.f32.mrb[0].mxu0
        %v735 = vadd.f32 0.0, %v734
        %v736 = vpop.f32.mrb[0].mxu0
        %v737 = vpop.f32.mrb[0].mxu0
        %v738 = vadd.f32 0.0, %v737
        %v739 = vpop.f32.mrb[0].mxu0
        %740 = vmatprep.mubr.bf16.mxu0 0
        %741 = vmatmul.mubr.bf16.gmra.mrb[0].mxu0 %v470
        %v742 = vpop.f32.mrb[0].mxu0
        %v743 = vadd.f32 0.0, %v742
        %v744 = vpop.f32.mrb[0].mxu0
        %v745 = vpop.f32.mrb[0].mxu0
        %v746 = vadd.f32 0.0, %v745
        %v747 = vpop.f32.mrb[0].mxu0
        %748 = vmatprep.mubr.bf16.mxu0 0
        %749 = vmatmul.mubr.bf16.gmra.mrb[0].mxu0 %v471
        %v750 = vpop.f32.mrb[0].mxu0
        %v751 = vadd.f32 0.0, %v750
        %v752 = vpop.f32.mrb[0].mxu0
        %v753 = vpop.f32.mrb[0].mxu0
        %v754 = vadd.f32 0.0, %v753
        %v755 = vpop.f32.mrb[0].mxu0
        %756 = vmatprep.mubr.bf16.mxu0 0
        %757 = vmatmul.mubr.bf16.gmra.mrb[0].mxu0 %v472
        %v758 = vpop.f32.mrb[0].mxu0
        %v759 = vadd.f32 0.0, %v758
        %v760 = vpop.f32.mrb[0].mxu0
        %v761 = vpop.f32.mrb[0].mxu0
        %v762 = vadd.f32 0.0, %v761
        %v763 = vpop.f32.mrb[0].mxu0
        %764 = vmatprep.mubr.bf16.mxu0 0
        %765 = vmatmul.mubr.bf16.gmra.mrb[0].mxu0 %v473
        %v766 = vpop.f32.mrb[0].mxu0
        %v767 = vadd.f32 0.0, %v766
        %v768 = vpop.f32.mrb[0].mxu0
        %v769 = vpop.f32.mrb[0].mxu0
        %v770 = vadd.f32 0.0, %v769
        %v771 = vpop.f32.mrb[0].mxu0
        %772 = vmatprep.mubr.bf16.mxu0 0
        %773 = vmatmul.mubr.bf16.gmra.mrb[0].mxu0 %v474
        %v774 = vpop.f32.mrb[0].mxu0
        %v775 = vadd.f32 0.0, %v774
        %v776 = vpop.f32.mrb[0].mxu0
        %v777 = vpop.f32.mrb[0].mxu0
        %v778 = vadd.f32 0.0, %v777
        %v779 = vpop.f32.mrb[0].mxu0
        %780 = vmatprep.mubr.bf16.mxu0 0
        %781 = vmatmul.mubr.bf16.gmra.mrb[0].mxu0 %v475
        %v782 = vpop.f32.mrb[0].mxu0
        %v783 = vadd.f32 0.0, %v782
        %v784 = vpop.f32.mrb[0].mxu0
        %v785 = vpop.f32.mrb[0].mxu0
        %v786 = vadd.f32 0.0, %v785
        %v787 = vpop.f32.mrb[0].mxu0
        %788 = vmatprep.mubr.bf16.mxu0 0
        %789 = vmatmul.mubr.bf16.gmra.mrb[0].mxu0 %v476
        %v790 = vpop.f32.mrb[0].mxu0
        %v791 = vadd.f32 0.0, %v790
        %v792 = vpop.f32.mrb[0].mxu0
        %v793 = vpop.f32.mrb[0].mxu0
        %v794 = vadd.f32 0.0, %v793
        %v795 = vpop.f32.mrb[0].mxu0
        %796 = vmatprep.mubr.bf16.mxu0 0
        %797 = vmatmul.mubr.bf16.gmra.mrb[0].mxu0 %v477
        %v798 = vpop.f32.mrb[0].mxu0
        %v799 = vadd.f32 0.0, %v798
        %v800 = vpop.f32.mrb[0].mxu0
        %v801 = vpop.f32.mrb[0].mxu0
        %v802 = vadd.f32 0.0, %v801
        %v803 = vpop.f32.mrb[0].mxu0
        %804 = vmatprep.mubr.bf16.mxu0 0
        %805 = vmatmul.mubr.bf16.gmra.mrb[0].mxu0 %v478
        %v806 = vpop.f32.mrb[0].mxu0
        %v807 = vadd.f32 0.0, %v806
        %v808 = vpop.f32.mrb[0].mxu0
        %v809 = vpop.f32.mrb[0].mxu0
        %v810 = vadd.f32 0.0, %v809
        %v811 = vpop.f32.mrb[0].mxu0
        %812 = vmatprep.mubr.bf16.mxu0 0
        %813 = vmatmul.mubr.bf16.gmra.mrb[0].mxu0 %v479
        %v814 = vpop.f32.mrb[0].mxu0
        %v815 = vadd.f32 0.0, %v814
        %v816 = vpop.f32.mrb[0].mxu0
        %v817 = vpop.f32.mrb[0].mxu0
        %v818 = vadd.f32 0.0, %v817
        %v819 = vpop.f32.mrb[0].mxu0
        %820 = vmatprep.mubr.bf16.mxu0 0
        %821 = vmatmul.mubr.bf16.gmra.mrb[0].mxu0 %v480
        %v822 = vpop.f32.mrb[0].mxu0
        %v823 = vadd.f32 0.0, %v822
        %v824 = vpop.f32.mrb[0].mxu0
        %v825 = vpop.f32.mrb[0].mxu0
        %v826 = vadd.f32 0.0, %v825
        %v827 = vpop.f32.mrb[0].mxu0
        %828 = vmatprep.mubr.bf16.mxu0 0
        %829 = vmatmul.mubr.bf16.gmra.mrb[0].mxu0 %v481
        %v830 = vpop.f32.mrb[0].mxu0
        %v831 = vadd.f32 0.0, %v830
        %v832 = vpop.f32.mrb[0].mxu0
        %v833 = vpop.f32.mrb[0].mxu0
        %v834 = vadd.f32 0.0, %v833
        %v835 = vpop.f32.mrb[0].mxu0
        %836 = vmatprep.mubr.bf16.mxu0 0
        %837 = vmatmul.mubr.bf16.gmra.mrb[0].mxu0 %v482
        %v838 = vpop.f32.mrb[0].mxu0
        %v839 = vadd.f32 0.0, %v838
        %v840 = vpop.f32.mrb[0].mxu0
        %v841 = vpop.f32.mrb[0].mxu0
        %v842 = vadd.f32 0.0, %v841
        %v843 = vpop.f32.mrb[0].mxu0
        %844 = vmatprep.mubr.bf16.mxu0 0
        %845 = vmatmul.mubr.bf16.gmra.mrb[0].mxu0 %v483
        %v846 = vpop.f32.mrb[0].mxu0
        %v847 = vadd.f32 0.0, %v846
        %v848 = vpop.f32.mrb[0].mxu0
        %v849 = vpop.f32.mrb[0].mxu0
        %v850 = vadd.f32 0.0, %v849
        %v851 = vpop.f32.mrb[0].mxu0
        %852 = vdwg.mxu0
        %v853 = vlaneseq
        %v854 = vshrl.u32 %v853, 7
        %v855 = vadd.s32 %v854, 8
        %v856 = vadd.s32 %v854, 16
        %v857 = vadd.s32 %v854, 24
        %v858 = vadd.s32 %v854, 32
        %v859 = vadd.s32 %v854, 40
        %v860 = vadd.s32 %v854, 48
        %v861 = vadd.s32 %v854, 56
        %v862 = vadd.s32 %v854, 64
        %v863 = vadd.s32 %v854, 72
        %v864 = vadd.s32 %v854, 80
        %v865 = vadd.s32 %v854, 88
        %v866 = vadd.s32 %v854, 96
        %v867 = vadd.s32 %v854, 104
        %v868 = vadd.s32 %v854, 112
        %v869 = vadd.s32 %v854, 120
        %v870 = vadd.s32 %v854, 128
        %v871 = vadd.s32 %v854, 136
        %v872 = vadd.s32 %v854, 144
        %v873 = vadd.s32 %v854, 152
        %v874 = vadd.s32 %v854, 160
        %v875 = vadd.s32 %v854, 168
        %v876 = vadd.s32 %v854, 176
        %v877 = vadd.s32 %v854, 184
        %v878 = vadd.s32 %v854, 192
        %v879 = vadd.s32 %v854, 200
        %v880 = vadd.s32 %v854, 208
        %v881 = vadd.s32 %v854, 216
        %v882 = vadd.s32 %v854, 224
        %v883 = vadd.s32 %v854, 232
        %v884 = vadd.s32 %v854, 240
        %v885 = vadd.s32 %v854, 248
        %v886 = vadd.s32 %v854, 256
        %v887 = vadd.s32 %v854, 264
        %v888 = vadd.s32 %v854, 272
        %v889 = vadd.s32 %v854, 280
        %v890 = vadd.s32 %v854, 288
        %v891 = vadd.s32 %v854, 296
        %v892 = vadd.s32 %v854, 304
        %v893 = vadd.s32 %v854, 312
        %v894 = vadd.s32 %v854, 320
        %v895 = vadd.s32 %v854, 328
        %v896 = vadd.s32 %v854, 336
        %v897 = vadd.s32 %v854, 344
        %v898 = vadd.s32 %v854, 352
        %v899 = vadd.s32 %v854, 360
        %v900 = vadd.s32 %v854, 368
        %v901 = vadd.s32 %v854, 376
        %v902 = vadd.s32 %v854, 384
        %v903 = vadd.s32 %v854, 392
        %v904 = vadd.s32 %v854, 400
        %v905 = vadd.s32 %v854, 408
        %v906 = vadd.s32 %v854, 416
        %v907 = vadd.s32 %v854, 424
        %v908 = vadd.s32 %v854, 432
        %v909 = vadd.s32 %v854, 440
        %v910 = vadd.s32 %v854, 448
        %v911 = vadd.s32 %v854, 456
        %v912 = vadd.s32 %v854, 464
        %v913 = vadd.s32 %v854, 472
        %v914 = vadd.s32 %v854, 480
        %v915 = vadd.s32 %v854, 488
        %v916 = vadd.s32 %v854, 496
        %v917 = vadd.s32 %v854, 504
        %v918 = vstv %s233
        %v919 = vadd.s32 %v918, %v854
        %v920 = vadd.s32 %v918, %v855
        %v921 = vadd.s32 %v918, %v856
        %v922 = vadd.s32 %v918, %v857
        %v923 = vadd.s32 %v918, %v858
        %v924 = vadd.s32 %v918, %v859
        %v925 = vadd.s32 %v918, %v860
        %v926 = vadd.s32 %v918, %v861
        %v927 = vadd.s32 %v918, %v862
        %v928 = vadd.s32 %v918, %v863
        %v929 = vadd.s32 %v918, %v864
        %v930 = vadd.s32 %v918, %v865
        %v931 = vadd.s32 %v918, %v866
        %v932 = vadd.s32 %v918, %v867
        %v933 = vadd.s32 %v918, %v868
        %v934 = vadd.s32 %v918, %v869
        %v935 = vadd.s32 %v918, %v870
        %v936 = vadd.s32 %v918, %v871
        %v937 = vadd.s32 %v918, %v872
        %v938 = vadd.s32 %v918, %v873
        %v939 = vadd.s32 %v918, %v874
        %v940 = vadd.s32 %v918, %v875
        %v941 = vadd.s32 %v918, %v876
        %v942 = vadd.s32 %v918, %v877
        %v943 = vadd.s32 %v918, %v878
        %v944 = vadd.s32 %v918, %v879
        %v945 = vadd.s32 %v918, %v880
        %v946 = vadd.s32 %v918, %v881
        %v947 = vadd.s32 %v918, %v882
        %v948 = vadd.s32 %v918, %v883
        %v949 = vadd.s32 %v918, %v884
        %v950 = vadd.s32 %v918, %v885
        %v951 = vadd.s32 %v918, %v886
        %v952 = vadd.s32 %v918, %v887
        %v953 = vadd.s32 %v918, %v888
        %v954 = vadd.s32 %v918, %v889
        %v955 = vadd.s32 %v918, %v890
        %v956 = vadd.s32 %v918, %v891
        %v957 = vadd.s32 %v918, %v892
        %v958 = vadd.s32 %v918, %v893
        %v959 = vadd.s32 %v918, %v894
        %v960 = vadd.s32 %v918, %v895
        %v961 = vadd.s32 %v918, %v896
        %v962 = vadd.s32 %v918, %v897
        %v963 = vadd.s32 %v918, %v898
        %v964 = vadd.s32 %v918, %v899
        %v965 = vadd.s32 %v918, %v900
        %v966 = vadd.s32 %v918, %v901
        %v967 = vadd.s32 %v918, %v902
        %v968 = vadd.s32 %v918, %v903
        %v969 = vadd.s32 %v918, %v904
        %v970 = vadd.s32 %v918, %v905
        %v971 = vadd.s32 %v918, %v906
        %v972 = vadd.s32 %v918, %v907
        %v973 = vadd.s32 %v918, %v908
        %v974 = vadd.s32 %v918, %v909
        %v975 = vadd.s32 %v918, %v910
        %v976 = vadd.s32 %v918, %v911
        %v977 = vadd.s32 %v918, %v912
        %v978 = vadd.s32 %v918, %v913
        %v979 = vadd.s32 %v918, %v914
        %v980 = vadd.s32 %v918, %v915
        %v981 = vadd.s32 %v918, %v916
        %v982 = vadd.s32 %v918, %v917
        %vm983 = vcmp.lt.s32.totalorder %v919, 512
        %vm984 = vcmp.lt.s32.totalorder %v920, 512
        %vm985 = vcmp.lt.s32.totalorder %v921, 512
        %vm986 = vcmp.lt.s32.totalorder %v922, 512
        %vm987 = vcmp.lt.s32.totalorder %v923, 512
        %vm988 = vcmp.lt.s32.totalorder %v924, 512
        %vm989 = vcmp.lt.s32.totalorder %v925, 512
        %vm990 = vcmp.lt.s32.totalorder %v926, 512
        %vm991 = vcmp.lt.s32.totalorder %v927, 512
        %vm992 = vcmp.lt.s32.totalorder %v928, 512
        %vm993 = vcmp.lt.s32.totalorder %v929, 512
        %vm994 = vcmp.lt.s32.totalorder %v930, 512
        %vm995 = vcmp.lt.s32.totalorder %v931, 512
        %vm996 = vcmp.lt.s32.totalorder %v932, 512
        %vm997 = vcmp.lt.s32.totalorder %v933, 512
        %vm998 = vcmp.lt.s32.totalorder %v934, 512
        %vm999 = vcmp.lt.s32.totalorder %v935, 512
        %vm1000 = vcmp.lt.s32.totalorder %v936, 512
        %vm1001 = vcmp.lt.s32.totalorder %v937, 512
        %vm1002 = vcmp.lt.s32.totalorder %v938, 512
        %vm1003 = vcmp.lt.s32.totalorder %v939, 512
        %vm1004 = vcmp.lt.s32.totalorder %v940, 512
        %vm1005 = vcmp.lt.s32.totalorder %v941, 512
        %vm1006 = vcmp.lt.s32.totalorder %v942, 512
        %vm1007 = vcmp.lt.s32.totalorder %v943, 512
        %vm1008 = vcmp.lt.s32.totalorder %v944, 512
        %vm1009 = vcmp.lt.s32.totalorder %v945, 512
        %vm1010 = vcmp.lt.s32.totalorder %v946, 512
        %vm1011 = vcmp.lt.s32.totalorder %v947, 512
        %vm1012 = vcmp.lt.s32.totalorder %v948, 512
        %vm1013 = vcmp.lt.s32.totalorder %v949, 512
        %vm1014 = vcmp.lt.s32.totalorder %v950, 512
        %vm1015 = vcmp.lt.s32.totalorder %v951, 512
        %vm1016 = vcmp.lt.s32.totalorder %v952, 512
        %vm1017 = vcmp.lt.s32.totalorder %v953, 512
        %vm1018 = vcmp.lt.s32.totalorder %v954, 512
        %vm1019 = vcmp.lt.s32.totalorder %v955, 512
        %vm1020 = vcmp.lt.s32.totalorder %v956, 512
        %vm1021 = vcmp.lt.s32.totalorder %v957, 512
        %vm1022 = vcmp.lt.s32.totalorder %v958, 512
        %vm1023 = vcmp.lt.s32.totalorder %v959, 512
        %vm1024 = vcmp.lt.s32.totalorder %v960, 512
        %vm1025 = vcmp.lt.s32.totalorder %v961, 512
        %vm1026 = vcmp.lt.s32.totalorder %v962, 512
        %vm1027 = vcmp.lt.s32.totalorder %v963, 512
        %vm1028 = vcmp.lt.s32.totalorder %v964, 512
        %vm1029 = vcmp.lt.s32.totalorder %v965, 512
        %vm1030 = vcmp.lt.s32.totalorder %v966, 512
        %vm1031 = vcmp.lt.s32.totalorder %v967, 512
        %vm1032 = vcmp.lt.s32.totalorder %v968, 512
        %vm1033 = vcmp.lt.s32.totalorder %v969, 512
        %vm1034 = vcmp.lt.s32.totalorder %v970, 512
        %vm1035 = vcmp.lt.s32.totalorder %v971, 512
        %vm1036 = vcmp.lt.s32.totalorder %v972, 512
        %vm1037 = vcmp.lt.s32.totalorder %v973, 512
        %vm1038 = vcmp.lt.s32.totalorder %v974, 512
        %vm1039 = vcmp.lt.s32.totalorder %v975, 512
        %vm1040 = vcmp.lt.s32.totalorder %v976, 512
        %vm1041 = vcmp.lt.s32.totalorder %v977, 512
        %vm1042 = vcmp.lt.s32.totalorder %v978, 512
        %vm1043 = vcmp.lt.s32.totalorder %v979, 512
        %vm1044 = vcmp.lt.s32.totalorder %v980, 512
        %vm1045 = vcmp.lt.s32.totalorder %v981, 512
        %vm1046 = vcmp.lt.s32.totalorder %v982, 512
        %v1047 = vsel %vm983, 1, 0
        %v1048 = vsel %vm984, 1, 0
        %v1049 = vsel %vm985, 1, 0
        %v1050 = vsel %vm986, 1, 0
        %v1051 = vsel %vm987, 1, 0
        %v1052 = vsel %vm988, 1, 0
        %v1053 = vsel %vm989, 1, 0
        %v1054 = vsel %vm990, 1, 0
        %v1055 = vsel %vm991, 1, 0
        %v1056 = vsel %vm992, 1, 0
        %v1057 = vsel %vm993, 1, 0
        %v1058 = vsel %vm994, 1, 0
        %v1059 = vsel %vm995, 1, 0
        %v1060 = vsel %vm996, 1, 0
        %v1061 = vsel %vm997, 1, 0
        %v1062 = vsel %vm998, 1, 0
        %v1063 = vsel %vm999, 1, 0
        %v1064 = vsel %vm1000, 1, 0
        %v1065 = vsel %vm1001, 1, 0
        %v1066 = vsel %vm1002, 1, 0
        %v1067 = vsel %vm1003, 1, 0
        %v1068 = vsel %vm1004, 1, 0
        %v1069 = vsel %vm1005, 1, 0
        %v1070 = vsel %vm1006, 1, 0
        %v1071 = vsel %vm1007, 1, 0
        %v1072 = vsel %vm1008, 1, 0
        %v1073 = vsel %vm1009, 1, 0
        %v1074 = vsel %vm1010, 1, 0
        %v1075 = vsel %vm1011, 1, 0
        %v1076 = vsel %vm1012, 1, 0
        %v1077 = vsel %vm1013, 1, 0
        %v1078 = vsel %vm1014, 1, 0
        %v1079 = vsel %vm1015, 1, 0
        %v1080 = vsel %vm1016, 1, 0
        %v1081 = vsel %vm1017, 1, 0
        %v1082 = vsel %vm1018, 1, 0
        %v1083 = vsel %vm1019, 1, 0
        %v1084 = vsel %vm1020, 1, 0
        %v1085 = vsel %vm1021, 1, 0
        %v1086 = vsel %vm1022, 1, 0
        %v1087 = vsel %vm1023, 1, 0
        %v1088 = vsel %vm1024, 1, 0
        %v1089 = vsel %vm1025, 1, 0
        %v1090 = vsel %vm1026, 1, 0
        %v1091 = vsel %vm1027, 1, 0
        %v1092 = vsel %vm1028, 1, 0
        %v1093 = vsel %vm1029, 1, 0
        %v1094 = vsel %vm1030, 1, 0
        %v1095 = vsel %vm1031, 1, 0
        %v1096 = vsel %vm1032, 1, 0
        %v1097 = vsel %vm1033, 1, 0
        %v1098 = vsel %vm1034, 1, 0
        %v1099 = vsel %vm1035, 1, 0
        %v1100 = vsel %vm1036, 1, 0
        %v1101 = vsel %vm1037, 1, 0
        %v1102 = vsel %vm1038, 1, 0
        %v1103 = vsel %vm1039, 1, 0
        %v1104 = vsel %vm1040, 1, 0
        %v1105 = vsel %vm1041, 1, 0
        %v1106 = vsel %vm1042, 1, 0
        %v1107 = vsel %vm1043, 1, 0
        %v1108 = vsel %vm1044, 1, 0
        %v1109 = vsel %vm1045, 1, 0
        %v1110 = vsel %vm1046, 1, 0
        %vm1111 = vcmp.eq.s32.totalorder %v1047, 1
        %vm1112 = vcmp.eq.s32.totalorder %v1048, 1
        %vm1113 = vcmp.eq.s32.totalorder %v1049, 1
        %vm1114 = vcmp.eq.s32.totalorder %v1050, 1
        %vm1115 = vcmp.eq.s32.totalorder %v1051, 1
        %vm1116 = vcmp.eq.s32.totalorder %v1052, 1
        %vm1117 = vcmp.eq.s32.totalorder %v1053, 1
        %vm1118 = vcmp.eq.s32.totalorder %v1054, 1
        %vm1119 = vcmp.eq.s32.totalorder %v1055, 1
        %vm1120 = vcmp.eq.s32.totalorder %v1056, 1
        %vm1121 = vcmp.eq.s32.totalorder %v1057, 1
        %vm1122 = vcmp.eq.s32.totalorder %v1058, 1
        %vm1123 = vcmp.eq.s32.totalorder %v1059, 1
        %vm1124 = vcmp.eq.s32.totalorder %v1060, 1
        %vm1125 = vcmp.eq.s32.totalorder %v1061, 1
        %vm1126 = vcmp.eq.s32.totalorder %v1062, 1
        %vm1127 = vcmp.eq.s32.totalorder %v1063, 1
        %vm1128 = vcmp.eq.s32.totalorder %v1064, 1
        %vm1129 = vcmp.eq.s32.totalorder %v1065, 1
        %vm1130 = vcmp.eq.s32.totalorder %v1066, 1
        %vm1131 = vcmp.eq.s32.totalorder %v1067, 1
        %vm1132 = vcmp.eq.s32.totalorder %v1068, 1
        %vm1133 = vcmp.eq.s32.totalorder %v1069, 1
        %vm1134 = vcmp.eq.s32.totalorder %v1070, 1
        %vm1135 = vcmp.eq.s32.totalorder %v1071, 1
        %vm1136 = vcmp.eq.s32.totalorder %v1072, 1
        %vm1137 = vcmp.eq.s32.totalorder %v1073, 1
        %vm1138 = vcmp.eq.s32.totalorder %v1074, 1
        %vm1139 = vcmp.eq.s32.totalorder %v1075, 1
        %vm1140 = vcmp.eq.s32.totalorder %v1076, 1
        %vm1141 = vcmp.eq.s32.totalorder %v1077, 1
        %vm1142 = vcmp.eq.s32.totalorder %v1078, 1
        %vm1143 = vcmp.eq.s32.totalorder %v1079, 1
        %vm1144 = vcmp.eq.s32.totalorder %v1080, 1
        %vm1145 = vcmp.eq.s32.totalorder %v1081, 1
        %vm1146 = vcmp.eq.s32.totalorder %v1082, 1
        %vm1147 = vcmp.eq.s32.totalorder %v1083, 1
        %vm1148 = vcmp.eq.s32.totalorder %v1084, 1
        %vm1149 = vcmp.eq.s32.totalorder %v1085, 1
        %vm1150 = vcmp.eq.s32.totalorder %v1086, 1
        %vm1151 = vcmp.eq.s32.totalorder %v1087, 1
        %vm1152 = vcmp.eq.s32.totalorder %v1088, 1
        %vm1153 = vcmp.eq.s32.totalorder %v1089, 1
        %vm1154 = vcmp.eq.s32.totalorder %v1090, 1
        %vm1155 = vcmp.eq.s32.totalorder %v1091, 1
        %vm1156 = vcmp.eq.s32.totalorder %v1092, 1
        %vm1157 = vcmp.eq.s32.totalorder %v1093, 1
        %vm1158 = vcmp.eq.s32.totalorder %v1094, 1
        %vm1159 = vcmp.eq.s32.totalorder %v1095, 1
        %vm1160 = vcmp.eq.s32.totalorder %v1096, 1
        %vm1161 = vcmp.eq.s32.totalorder %v1097, 1
        %vm1162 = vcmp.eq.s32.totalorder %v1098, 1
        %vm1163 = vcmp.eq.s32.totalorder %v1099, 1
        %vm1164 = vcmp.eq.s32.totalorder %v1100, 1
        %vm1165 = vcmp.eq.s32.totalorder %v1101, 1
        %vm1166 = vcmp.eq.s32.totalorder %v1102, 1
        %vm1167 = vcmp.eq.s32.totalorder %v1103, 1
        %vm1168 = vcmp.eq.s32.totalorder %v1104, 1
        %vm1169 = vcmp.eq.s32.totalorder %v1105, 1
        %vm1170 = vcmp.eq.s32.totalorder %v1106, 1
        %vm1171 = vcmp.eq.s32.totalorder %v1107, 1
        %vm1172 = vcmp.eq.s32.totalorder %v1108, 1
        %vm1173 = vcmp.eq.s32.totalorder %v1109, 1
        %vm1174 = vcmp.eq.s32.totalorder %v1110, 1
        %v1175 = vsel %vm1111, %v599, 0.0
        %v1176 = vsel %vm1112, %v602, 0.0
        %v1177 = vsel %vm1113, %v607, 0.0
        %v1178 = vsel %vm1114, %v610, 0.0
        %v1179 = vsel %vm1115, %v615, 0.0
        %v1180 = vsel %vm1116, %v618, 0.0
        %v1181 = vsel %vm1117, %v623, 0.0
        %v1182 = vsel %vm1118, %v626, 0.0
        %v1183 = vsel %vm1119, %v631, 0.0
        %v1184 = vsel %vm1120, %v634, 0.0
        %v1185 = vsel %vm1121, %v639, 0.0
        %v1186 = vsel %vm1122, %v642, 0.0
        %v1187 = vsel %vm1123, %v647, 0.0
        %v1188 = vsel %vm1124, %v650, 0.0
        %v1189 = vsel %vm1125, %v655, 0.0
        %v1190 = vsel %vm1126, %v658, 0.0
        %v1191 = vsel %vm1127, %v663, 0.0
        %v1192 = vsel %vm1128, %v666, 0.0
        %v1193 = vsel %vm1129, %v671, 0.0
        %v1194 = vsel %vm1130, %v674, 0.0
        %v1195 = vsel %vm1131, %v679, 0.0
        %v1196 = vsel %vm1132, %v682, 0.0
        %v1197 = vsel %vm1133, %v687, 0.0
        %v1198 = vsel %vm1134, %v690, 0.0
        %v1199 = vsel %vm1135, %v695, 0.0
        %v1200 = vsel %vm1136, %v698, 0.0
        %v1201 = vsel %vm1137, %v703, 0.0
        %v1202 = vsel %vm1138, %v706, 0.0
        %v1203 = vsel %vm1139, %v711, 0.0
        %v1204 = vsel %vm1140, %v714, 0.0
        %v1205 = vsel %vm1141, %v719, 0.0
        %v1206 = vsel %vm1142, %v722, 0.0
        %v1207 = vsel %vm1143, %v727, 0.0
        %v1208 = vsel %vm1144, %v730, 0.0
        %v1209 = vsel %vm1145, %v735, 0.0
        %v1210 = vsel %vm1146, %v738, 0.0
        %v1211 = vsel %vm1147, %v743, 0.0
        %v1212 = vsel %vm1148, %v746, 0.0
        %v1213 = vsel %vm1149, %v751, 0.0
        %v1214 = vsel %vm1150, %v754, 0.0
        %v1215 = vsel %vm1151, %v759, 0.0
        %v1216 = vsel %vm1152, %v762, 0.0
        %v1217 = vsel %vm1153, %v767, 0.0
        %v1218 = vsel %vm1154, %v770, 0.0
        %v1219 = vsel %vm1155, %v775, 0.0
        %v1220 = vsel %vm1156, %v778, 0.0
        %v1221 = vsel %vm1157, %v783, 0.0
        %v1222 = vsel %vm1158, %v786, 0.0
        %v1223 = vsel %vm1159, %v791, 0.0
        %v1224 = vsel %vm1160, %v794, 0.0
        %v1225 = vsel %vm1161, %v799, 0.0
        %v1226 = vsel %vm1162, %v802, 0.0
        %v1227 = vsel %vm1163, %v807, 0.0
        %v1228 = vsel %vm1164, %v810, 0.0
        %v1229 = vsel %vm1165, %v815, 0.0
        %v1230 = vsel %vm1166, %v818, 0.0
        %v1231 = vsel %vm1167, %v823, 0.0
        %v1232 = vsel %vm1168, %v826, 0.0
        %v1233 = vsel %vm1169, %v831, 0.0
        %v1234 = vsel %vm1170, %v834, 0.0
        %v1235 = vsel %vm1171, %v839, 0.0
        %v1236 = vsel %vm1172, %v842, 0.0
        %v1237 = vsel %vm1173, %v847, 0.0
        %v1238 = vsel %vm1174, %v850, 0.0
        %v1239 = vld [vmem:[#allocation3] sm:$0x1]
        %v1240 = vadd.f32 %v1175, %v1176
        %v1241 = vadd.f32 %v1240, %v1177
        %v1242 = vadd.f32 %v1241, %v1178
        %v1243 = vadd.f32 %v1242, %v1179
        %v1244 = vadd.f32 %v1243, %v1180
        %v1245 = vadd.f32 %v1244, %v1181
        %v1246 = vadd.f32 %v1245, %v1182
        %v1247 = vadd.f32 %v1246, %v1183
        %v1248 = vadd.f32 %v1247, %v1184
        %v1249 = vadd.f32 %v1248, %v1185
        %v1250 = vadd.f32 %v1249, %v1186
        %v1251 = vadd.f32 %v1250, %v1187
        %v1252 = vadd.f32 %v1251, %v1188
        %v1253 = vadd.f32 %v1252, %v1189
        %v1254 = vadd.f32 %v1253, %v1190
        %v1255 = vadd.f32 %v1254, %v1191
        %v1256 = vadd.f32 %v1255, %v1192
        %v1257 = vadd.f32 %v1256, %v1193
        %v1258 = vadd.f32 %v1257, %v1194
        %v1259 = vadd.f32 %v1258, %v1195
        %v1260 = vadd.f32 %v1259, %v1196
        %v1261 = vadd.f32 %v1260, %v1197
        %v1262 = vadd.f32 %v1261, %v1198
        %v1263 = vadd.f32 %v1262, %v1199
        %v1264 = vadd.f32 %v1263, %v1200
        %v1265 = vadd.f32 %v1264, %v1201
        %v1266 = vadd.f32 %v1265, %v1202
        %v1267 = vadd.f32 %v1266, %v1203
        %v1268 = vadd.f32 %v1267, %v1204
        %v1269 = vadd.f32 %v1268, %v1205
        %v1270 = vadd.f32 %v1269, %v1206
        %v1271 = vadd.f32 %v1270, %v1207
        %v1272 = vadd.f32 %v1271, %v1208
        %v1273 = vadd.f32 %v1272, %v1209
        %v1274 = vadd.f32 %v1273, %v1210
        %v1275 = vadd.f32 %v1274, %v1211
        %v1276 = vadd.f32 %v1275, %v1212
        %v1277 = vadd.f32 %v1276, %v1213
        %v1278 = vadd.f32 %v1277, %v1214
        %v1279 = vadd.f32 %v1278, %v1215
        %v1280 = vadd.f32 %v1279, %v1216
        %v1281 = vadd.f32 %v1280, %v1217
        %v1282 = vadd.f32 %v1281, %v1218
        %v1283 = vadd.f32 %v1282, %v1219
        %v1284 = vadd.f32 %v1283, %v1220
        %v1285 = vadd.f32 %v1284, %v1221
        %v1286 = vadd.f32 %v1285, %v1222
        %v1287 = vadd.f32 %v1286, %v1223
        %v1288 = vadd.f32 %v1287, %v1224
        %v1289 = vadd.f32 %v1288, %v1225
        %v1290 = vadd.f32 %v1289, %v1226
        %v1291 = vadd.f32 %v1290, %v1227
        %v1292 = vadd.f32 %v1291, %v1228
        %v1293 = vadd.f32 %v1292, %v1229
        %v1294 = vadd.f32 %v1293, %v1230
        %v1295 = vadd.f32 %v1294, %v1231
        %v1296 = vadd.f32 %v1295, %v1232
        %v1297 = vadd.f32 %v1296, %v1233
        %v1298 = vadd.f32 %v1297, %v1234
        %v1299 = vadd.f32 %v1298, %v1235
        %v1300 = vadd.f32 %v1299, %v1236
        %v1301 = vadd.f32 %v1300, %v1237
        %v1302 = vadd.f32 %v1301, %v1238
        %v1303 = vrot.slane %v1302, 4
        %v1304 = vadd.f32 %v1302, %v1303
        %v1305 = vrot.slane %v1304, 2
        %v1306 = vadd.f32 %v1304, %v1305
        %v1307 = vrot.slane %v1306, 1
        %v1308 = vadd.f32 %v1306, %v1307
        %v1309 = vadd.f32 %v1239, %v1308
        %1310 = vst [vmem:[#allocation3] sm:$0x1] %v1309
        %v1311 = vld [vmem:[#allocation4] sm:$0x1]
        %v1312 = vmul.f32 %v1175, %v1175
        %v1313 = vmul.f32 %v1176, %v1176
        %v1314 = vmul.f32 %v1177, %v1177
        %v1315 = vmul.f32 %v1178, %v1178
        %v1316 = vmul.f32 %v1179, %v1179
        %v1317 = vmul.f32 %v1180, %v1180
        %v1318 = vmul.f32 %v1181, %v1181
        %v1319 = vmul.f32 %v1182, %v1182
        %v1320 = vmul.f32 %v1183, %v1183
        %v1321 = vmul.f32 %v1184, %v1184
        %v1322 = vmul.f32 %v1185, %v1185
        %v1323 = vmul.f32 %v1186, %v1186
        %v1324 = vmul.f32 %v1187, %v1187
        %v1325 = vmul.f32 %v1188, %v1188
        %v1326 = vmul.f32 %v1189, %v1189
        %v1327 = vmul.f32 %v1190, %v1190
        %v1328 = vmul.f32 %v1191, %v1191
        %v1329 = vmul.f32 %v1192, %v1192
        %v1330 = vmul.f32 %v1193, %v1193
        %v1331 = vmul.f32 %v1194, %v1194
        %v1332 = vmul.f32 %v1195, %v1195
        %v1333 = vmul.f32 %v1196, %v1196
        %v1334 = vmul.f32 %v1197, %v1197
        %v1335 = vmul.f32 %v1198, %v1198
        %v1336 = vmul.f32 %v1199, %v1199
        %v1337 = vmul.f32 %v1200, %v1200
        %v1338 = vmul.f32 %v1201, %v1201
        %v1339 = vmul.f32 %v1202, %v1202
        %v1340 = vmul.f32 %v1203, %v1203
        %v1341 = vmul.f32 %v1204, %v1204
        %v1342 = vmul.f32 %v1205, %v1205
        %v1343 = vmul.f32 %v1206, %v1206
        %v1344 = vmul.f32 %v1207, %v1207
        %v1345 = vmul.f32 %v1208, %v1208
        %v1346 = vmul.f32 %v1209, %v1209
        %v1347 = vmul.f32 %v1210, %v1210
        %v1348 = vmul.f32 %v1211, %v1211
        %v1349 = vmul.f32 %v1212, %v1212
        %v1350 = vmul.f32 %v1213, %v1213
        %v1351 = vmul.f32 %v1214, %v1214
        %v1352 = vmul.f32 %v1215, %v1215
        %v1353 = vmul.f32 %v1216, %v1216
        %v1354 = vmul.f32 %v1217, %v1217
        %v1355 = vmul.f32 %v1218, %v1218
        %v1356 = vmul.f32 %v1219, %v1219
        %v1357 = vmul.f32 %v1220, %v1220
        %v1358 = vmul.f32 %v1221, %v1221
        %v1359 = vmul.f32 %v1222, %v1222
        %v1360 = vmul.f32 %v1223, %v1223
        %v1361 = vmul.f32 %v1224, %v1224
        %v1362 = vmul.f32 %v1225, %v1225
        %v1363 = vmul.f32 %v1226, %v1226
        %v1364 = vmul.f32 %v1227, %v1227
        %v1365 = vmul.f32 %v1228, %v1228
        %v1366 = vmul.f32 %v1229, %v1229
        %v1367 = vmul.f32 %v1230, %v1230
        %v1368 = vmul.f32 %v1231, %v1231
        %v1369 = vmul.f32 %v1232, %v1232
        %v1370 = vmul.f32 %v1233, %v1233
        %v1371 = vmul.f32 %v1234, %v1234
        %v1372 = vmul.f32 %v1235, %v1235
        %v1373 = vmul.f32 %v1236, %v1236
        %v1374 = vmul.f32 %v1237, %v1237
        %v1375 = vmul.f32 %v1238, %v1238
        %v1376 = vadd.f32 %v1312, %v1313
        %v1377 = vadd.f32 %v1376, %v1314
        %v1378 = vadd.f32 %v1377, %v1315
        %v1379 = vadd.f32 %v1378, %v1316
        %v1380 = vadd.f32 %v1379, %v1317
        %v1381 = vadd.f32 %v1380, %v1318
        %v1382 = vadd.f32 %v1381, %v1319
        %v1383 = vadd.f32 %v1382, %v1320
        %v1384 = vadd.f32 %v1383, %v1321
        %v1385 = vadd.f32 %v1384, %v1322
        %v1386 = vadd.f32 %v1385, %v1323
        %v1387 = vadd.f32 %v1386, %v1324
        %v1388 = vadd.f32 %v1387, %v1325
        %v1389 = vadd.f32 %v1388, %v1326
        %v1390 = vadd.f32 %v1389, %v1327
        %v1391 = vadd.f32 %v1390, %v1328
        %v1392 = vadd.f32 %v1391, %v1329
        %v1393 = vadd.f32 %v1392, %v1330
        %v1394 = vadd.f32 %v1393, %v1331
        %v1395 = vadd.f32 %v1394, %v1332
        %v1396 = vadd.f32 %v1395, %v1333
        %v1397 = vadd.f32 %v1396, %v1334
        %v1398 = vadd.f32 %v1397, %v1335
        %v1399 = vadd.f32 %v1398, %v1336
        %v1400 = vadd.f32 %v1399, %v1337
        %v1401 = vadd.f32 %v1400, %v1338
        %v1402 = vadd.f32 %v1401, %v1339
        %v1403 = vadd.f32 %v1402, %v1340
        %v1404 = vadd.f32 %v1403, %v1341
        %v1405 = vadd.f32 %v1404, %v1342
        %v1406 = vadd.f32 %v1405, %v1343
        %v1407 = vadd.f32 %v1406, %v1344
        %v1408 = vadd.f32 %v1407, %v1345
        %v1409 = vadd.f32 %v1408, %v1346
        %v1410 = vadd.f32 %v1409, %v1347
        %v1411 = vadd.f32 %v1410, %v1348
        %v1412 = vadd.f32 %v1411, %v1349
        %v1413 = vadd.f32 %v1412, %v1350
        %v1414 = vadd.f32 %v1413, %v1351
        %v1415 = vadd.f32 %v1414, %v1352
        %v1416 = vadd.f32 %v1415, %v1353
        %v1417 = vadd.f32 %v1416, %v1354
        %v1418 = vadd.f32 %v1417, %v1355
        %v1419 = vadd.f32 %v1418, %v1356
        %v1420 = vadd.f32 %v1419, %v1357
        %v1421 = vadd.f32 %v1420, %v1358
        %v1422 = vadd.f32 %v1421, %v1359
        %v1423 = vadd.f32 %v1422, %v1360
        %v1424 = vadd.f32 %v1423, %v1361
        %v1425 = vadd.f32 %v1424, %v1362
        %v1426 = vadd.f32 %v1425, %v1363
        %v1427 = vadd.f32 %v1426, %v1364
        %v1428 = vadd.f32 %v1427, %v1365
        %v1429 = vadd.f32 %v1428, %v1366
        %v1430 = vadd.f32 %v1429, %v1367
        %v1431 = vadd.f32 %v1430, %v1368
        %v1432 = vadd.f32 %v1431, %v1369
        %v1433 = vadd.f32 %v1432, %v1370
        %v1434 = vadd.f32 %v1433, %v1371
        %v1435 = vadd.f32 %v1434, %v1372
        %v1436 = vadd.f32 %v1435, %v1373
        %v1437 = vadd.f32 %v1436, %v1374
        %v1438 = vadd.f32 %v1437, %v1375
        %v1439 = vrot.slane %v1438, 4
        %v1440 = vadd.f32 %v1438, %v1439
        %v1441 = vrot.slane %v1440, 2
        %v1442 = vadd.f32 %v1440, %v1441
        %v1443 = vrot.slane %v1442, 1
        %v1444 = vadd.f32 %v1442, %v1443
        %v1445 = vadd.f32 %v1311, %v1444
        %1446 = vst [vmem:[#allocation4] sm:$0x1] %v1445
        %s1447 = scalar_lea.vmem [#allocation2], %s233
        %1448 = vst [vmem:[%s1447] sm:$0xff] %v599
        %1449 = vst [vmem:[%s1447 + $0x8] sm:$0xff] %v602
        %1450 = vst [vmem:[%s1447 + $0x10] sm:$0xff] %v607
        %1451 = vst [vmem:[%s1447 + $0x18] sm:$0xff] %v610
        %1452 = vst [vmem:[%s1447 + $0x20] sm:$0xff] %v615
        %1453 = vst [vmem:[%s1447 + $0x28] sm:$0xff] %v618
        %1454 = vst [vmem:[%s1447 + $0x30] sm:$0xff] %v623
        %1455 = vst [vmem:[%s1447 + $0x38] sm:$0xff] %v626
        %1456 = vst [vmem:[%s1447 + $0x40] sm:$0xff] %v631
        %1457 = vst [vmem:[%s1447 + $0x48] sm:$0xff] %v634
        %1458 = vst [vmem:[%s1447 + $0x50] sm:$0xff] %v639
        %1459 = vst [vmem:[%s1447 + $0x58] sm:$0xff] %v642
        %1460 = vst [vmem:[%s1447 + $0x60] sm:$0xff] %v647
        %1461 = vst [vmem:[%s1447 + $0x68] sm:$0xff] %v650
        %1462 = vst [vmem:[%s1447 + $0x70] sm:$0xff] %v655
        %1463 = vst [vmem:[%s1447 + $0x78] sm:$0xff] %v658
        %1464 = vst [vmem:[%s1447 + $0x80] sm:$0xff] %v663
        %1465 = vst [vmem:[%s1447 + $0x88] sm:$0xff] %v666
        %1466 = vst [vmem:[%s1447 + $0x90] sm:$0xff] %v671
        %1467 = vst [vmem:[%s1447 + $0x98] sm:$0xff] %v674
        %1468 = vst [vmem:[%s1447 + $0xa0] sm:$0xff] %v679
        %1469 = vst [vmem:[%s1447 + $0xa8] sm:$0xff] %v682
        %1470 = vst [vmem:[%s1447 + $0xb0] sm:$0xff] %v687
        %1471 = vst [vmem:[%s1447 + $0xb8] sm:$0xff] %v690
        %1472 = vst [vmem:[%s1447 + $0xc0] sm:$0xff] %v695
        %1473 = vst [vmem:[%s1447 + $0xc8] sm:$0xff] %v698
        %1474 = vst [vmem:[%s1447 + $0xd0] sm:$0xff] %v703
        %1475 = vst [vmem:[%s1447 + $0xd8] sm:$0xff] %v706
        %1476 = vst [vmem:[%s1447 + $0xe0] sm:$0xff] %v711
        %1477 = vst [vmem:[%s1447 + $0xe8] sm:$0xff] %v714
        %1478 = vst [vmem:[%s1447 + $0xf0] sm:$0xff] %v719
        %1479 = vst [vmem:[%s1447 + $0xf8] sm:$0xff] %v722
        %1480 = vst [vmem:[%s1447 + $0x100] sm:$0xff] %v727
        %1481 = vst [vmem:[%s1447 + $0x108] sm:$0xff] %v730
        %1482 = vst [vmem:[%s1447 + $0x110] sm:$0xff] %v735
        %1483 = vst [vmem:[%s1447 + $0x118] sm:$0xff] %v738
        %1484 = vst [vmem:[%s1447 + $0x120] sm:$0xff] %v743
        %1485 = vst [vmem:[%s1447 + $0x128] sm:$0xff] %v746
        %1486 = vst [vmem:[%s1447 + $0x130] sm:$0xff] %v751
        %1487 = vst [vmem:[%s1447 + $0x138] sm:$0xff] %v754
        %1488 = vst [vmem:[%s1447 + $0x140] sm:$0xff] %v759
        %1489 = vst [vmem:[%s1447 + $0x148] sm:$0xff] %v762
        %1490 = vst [vmem:[%s1447 + $0x150] sm:$0xff] %v767
        %1491 = vst [vmem:[%s1447 + $0x158] sm:$0xff] %v770
        %1492 = vst [vmem:[%s1447 + $0x160] sm:$0xff] %v775
        %1493 = vst [vmem:[%s1447 + $0x168] sm:$0xff] %v778
        %1494 = vst [vmem:[%s1447 + $0x170] sm:$0xff] %v783
        %1495 = vst [vmem:[%s1447 + $0x178] sm:$0xff] %v786
        %1496 = vst [vmem:[%s1447 + $0x180] sm:$0xff] %v791
        %1497 = vst [vmem:[%s1447 + $0x188] sm:$0xff] %v794
        %1498 = vst [vmem:[%s1447 + $0x190] sm:$0xff] %v799
        %1499 = vst [vmem:[%s1447 + $0x198] sm:$0xff] %v802
        %1500 = vst [vmem:[%s1447 + $0x1a0] sm:$0xff] %v807
        %1501 = vst [vmem:[%s1447 + $0x1a8] sm:$0xff] %v810
        %1502 = vst [vmem:[%s1447 + $0x1b0] sm:$0xff] %v815
        %1503 = vst [vmem:[%s1447 + $0x1b8] sm:$0xff] %v818
        %1504 = vst [vmem:[%s1447 + $0x1c0] sm:$0xff] %v823
        %1505 = vst [vmem:[%s1447 + $0x1c8] sm:$0xff] %v826
        %1506 = vst [vmem:[%s1447 + $0x1d0] sm:$0xff] %v831
        %1507 = vst [vmem:[%s1447 + $0x1d8] sm:$0xff] %v834
        %1508 = vst [vmem:[%s1447 + $0x1e0] sm:$0xff] %v839
        %1509 = vst [vmem:[%s1447 + $0x1e8] sm:$0xff] %v842
        %1510 = vst [vmem:[%s1447 + $0x1f0] sm:$0xff] %v847
        %1511 = vst [vmem:[%s1447 + $0x1f8] sm:$0xff] %v850
      $region40: #{residual_branch_forward.3} parent=35 // pred_fallthru
        _
      %p1512 = scmp.eq.s32.totalorder %s19, 1
      // Predicated region
      $region45: #{residual_branch_forward.3} parent=35 // pred_check
        %p1513 = pneg %p1512
      $region46: #{residual_branch_forward.3} parent=35 // pred_check_branch
        %1515 = sbr.rel (%p1513) target = $region48
      $region47: #{residual_branch_forward.3} parent=35 // pred_region
        %p1516 = scmp.eq.s32.totalorder %s20, 0
        // Predicated region
        $region49: #{residual_branch_forward.3} parent=47 // pred_check
          %p1517 = pneg %p1516
        $region50: #{residual_branch_forward.3} parent=47 // pred_check_branch
          %1519 = sbr.rel (%p1517) target = $region52
        $region51: #{residual_branch_forward.3} parent=47 // pred_region
          %v1520 = vld [vmem:[#allocation3] sm:$0x1]
          %v1521 = vmul.f32 %v1520, 0.001953125
          %v1522 = vld [vmem:[#allocation4] sm:$0x1]
          %v1523 = vmul.f32 %v1522, 0.001953125
          %v1524 = vmul.f32 %v1521, %v1521
          %v1525 = vsub.f32 %v1523, %v1524
          %v1526 = vmax.f32 %v1525, 0.0
          %v1527 = vadd.f32 %v1526, 1e-05
          %v1528 = vrsqrt.pop %v1527
          %v1529 = vld [vmem:[%s2] sm:$0x1]
          %v1530 = vmul.f32 %v1529, %v1528
          %1531 = vst [vmem:[#allocation5] sm:$0x1] %v1530
          %v1532 = vld [vmem:[%s3] sm:$0x1]
          %v1533 = vld [vmem:[#allocation5] sm:$0x1]
          %v1534 = vmul.f32 %v1521, %v1533
          %v1535 = vsub.f32 %v1532, %v1534
          %1536 = vst [vmem:[#allocation6] sm:$0x1] %v1535
        $region52: #{residual_branch_forward.3} parent=47 // pred_fallthru
          _
        %s1537 = scalar_lea.vmem [#allocation2], %s233
        %v1538 = vld [vmem:[%s1537] sm:$0xff]
        %v1539 = vld [vmem:[%s1537 + $0x8] sm:$0xff]
        %v1540 = vld [vmem:[%s1537 + $0x10] sm:$0xff]
        %v1541 = vld [vmem:[%s1537 + $0x18] sm:$0xff]
        %v1542 = vld [vmem:[%s1537 + $0x20] sm:$0xff]
        %v1543 = vld [vmem:[%s1537 + $0x28] sm:$0xff]
        %v1544 = vld [vmem:[%s1537 + $0x30] sm:$0xff]
        %v1545 = vld [vmem:[%s1537 + $0x38] sm:$0xff]
        %v1546 = vld [vmem:[%s1537 + $0x40] sm:$0xff]
        %v1547 = vld [vmem:[%s1537 + $0x48] sm:$0xff]
        %v1548 = vld [vmem:[%s1537 + $0x50] sm:$0xff]
        %v1549 = vld [vmem:[%s1537 + $0x58] sm:$0xff]
        %v1550 = vld [vmem:[%s1537 + $0x60] sm:$0xff]
        %v1551 = vld [vmem:[%s1537 + $0x68] sm:$0xff]
        %v1552 = vld [vmem:[%s1537 + $0x70] sm:$0xff]
        %v1553 = vld [vmem:[%s1537 + $0x78] sm:$0xff]
        %v1554 = vld [vmem:[%s1537 + $0x80] sm:$0xff]
        %v1555 = vld [vmem:[%s1537 + $0x88] sm:$0xff]
        %v1556 = vld [vmem:[%s1537 + $0x90] sm:$0xff]
        %v1557 = vld [vmem:[%s1537 + $0x98] sm:$0xff]
        %v1558 = vld [vmem:[%s1537 + $0xa0] sm:$0xff]
        %v1559 = vld [vmem:[%s1537 + $0xa8] sm:$0xff]
        %v1560 = vld [vmem:[%s1537 + $0xb0] sm:$0xff]
        %v1561 = vld [vmem:[%s1537 + $0xb8] sm:$0xff]
        %v1562 = vld [vmem:[%s1537 + $0xc0] sm:$0xff]
        %v1563 = vld [vmem:[%s1537 + $0xc8] sm:$0xff]
        %v1564 = vld [vmem:[%s1537 + $0xd0] sm:$0xff]
        %v1565 = vld [vmem:[%s1537 + $0xd8] sm:$0xff]
        %v1566 = vld [vmem:[%s1537 + $0xe0] sm:$0xff]
        %v1567 = vld [vmem:[%s1537 + $0xe8] sm:$0xff]
        %v1568 = vld [vmem:[%s1537 + $0xf0] sm:$0xff]
        %v1569 = vld [vmem:[%s1537 + $0xf8] sm:$0xff]
        %v1570 = vld [vmem:[%s1537 + $0x100] sm:$0xff]
        %v1571 = vld [vmem:[%s1537 + $0x108] sm:$0xff]
        %v1572 = vld [vmem:[%s1537 + $0x110] sm:$0xff]
        %v1573 = vld [vmem:[%s1537 + $0x118] sm:$0xff]
        %v1574 = vld [vmem:[%s1537 + $0x120] sm:$0xff]
        %v1575 = vld [vmem:[%s1537 + $0x128] sm:$0xff]
        %v1576 = vld [vmem:[%s1537 + $0x130] sm:$0xff]
        %v1577 = vld [vmem:[%s1537 + $0x138] sm:$0xff]
        %v1578 = vld [vmem:[%s1537 + $0x140] sm:$0xff]
        %v1579 = vld [vmem:[%s1537 + $0x148] sm:$0xff]
        %v1580 = vld [vmem:[%s1537 + $0x150] sm:$0xff]
        %v1581 = vld [vmem:[%s1537 + $0x158] sm:$0xff]
        %v1582 = vld [vmem:[%s1537 + $0x160] sm:$0xff]
        %v1583 = vld [vmem:[%s1537 + $0x168] sm:$0xff]
        %v1584 = vld [vmem:[%s1537 + $0x170] sm:$0xff]
        %v1585 = vld [vmem:[%s1537 + $0x178] sm:$0xff]
        %v1586 = vld [vmem:[%s1537 + $0x180] sm:$0xff]
        %v1587 = vld [vmem:[%s1537 + $0x188] sm:$0xff]
        %v1588 = vld [vmem:[%s1537 + $0x190] sm:$0xff]
        %v1589 = vld [vmem:[%s1537 + $0x198] sm:$0xff]
        %v1590 = vld [vmem:[%s1537 + $0x1a0] sm:$0xff]
        %v1591 = vld [vmem:[%s1537 + $0x1a8] sm:$0xff]
        %v1592 = vld [vmem:[%s1537 + $0x1b0] sm:$0xff]
        %v1593 = vld [vmem:[%s1537 + $0x1b8] sm:$0xff]
        %v1594 = vld [vmem:[%s1537 + $0x1c0] sm:$0xff]
        %v1595 = vld [vmem:[%s1537 + $0x1c8] sm:$0xff]
        %v1596 = vld [vmem:[%s1537 + $0x1d0] sm:$0xff]
        %v1597 = vld [vmem:[%s1537 + $0x1d8] sm:$0xff]
        %v1598 = vld [vmem:[%s1537 + $0x1e0] sm:$0xff]
        %v1599 = vld [vmem:[%s1537 + $0x1e8] sm:$0xff]
        %v1600 = vld [vmem:[%s1537 + $0x1f0] sm:$0xff]
        %v1601 = vld [vmem:[%s1537 + $0x1f8] sm:$0xff]
        %v1602 = vld [vmem:[#allocation5] sm:$0x1]
        %v1604 = vlaneseq
        %v1605 = vshrl.u32 %v1604, 7
        %v1606 = vsub.s32 0, %v1605
        %v1607 = vrot.slane %v1602, %v1606
        %v1609 = vmul.f32 %v1538, %v1607
        %v1610 = vmul.f32 %v1539, %v1607
        %v1611 = vmul.f32 %v1540, %v1607
        %v1612 = vmul.f32 %v1541, %v1607
        %v1613 = vmul.f32 %v1542, %v1607
        %v1614 = vmul.f32 %v1543, %v1607
        %v1615 = vmul.f32 %v1544, %v1607
        %v1616 = vmul.f32 %v1545, %v1607
        %v1617 = vmul.f32 %v1546, %v1607
        %v1618 = vmul.f32 %v1547, %v1607
        %v1619 = vmul.f32 %v1548, %v1607
        %v1620 = vmul.f32 %v1549, %v1607
        %v1621 = vmul.f32 %v1550, %v1607
        %v1622 = vmul.f32 %v1551, %v1607
        %v1623 = vmul.f32 %v1552, %v1607
        %v1624 = vmul.f32 %v1553, %v1607
        %v1625 = vmul.f32 %v1554, %v1607
        %v1626 = vmul.f32 %v1555, %v1607
        %v1627 = vmul.f32 %v1556, %v1607
        %v1628 = vmul.f32 %v1557, %v1607
        %v1629 = vmul.f32 %v1558, %v1607
        %v1630 = vmul.f32 %v1559, %v1607
        %v1631 = vmul.f32 %v1560, %v1607
        %v1632 = vmul.f32 %v1561, %v1607
        %v1633 = vmul.f32 %v1562, %v1607
        %v1634 = vmul.f32 %v1563, %v1607
        %v1635 = vmul.f32 %v1564, %v1607
        %v1636 = vmul.f32 %v1565, %v1607
        %v1637 = vmul.f32 %v1566, %v1607
        %v1638 = vmul.f32 %v1567, %v1607
        %v1639 = vmul.f32 %v1568, %v1607
        %v1640 = vmul.f32 %v1569, %v1607
        %v1641 = vmul.f32 %v1570, %v1607
        %v1642 = vmul.f32 %v1571, %v1607
        %v1643 = vmul.f32 %v1572, %v1607
        %v1644 = vmul.f32 %v1573, %v1607
        %v1645 = vmul.f32 %v1574, %v1607
        %v1646 = vmul.f32 %v1575, %v1607
        %v1647 = vmul.f32 %v1576, %v1607
        %v1648 = vmul.f32 %v1577, %v1607
        %v1649 = vmul.f32 %v1578, %v1607
        %v1650 = vmul.f32 %v1579, %v1607
        %v1651 = vmul.f32 %v1580, %v1607
        %v1652 = vmul.f32 %v1581, %v1607
        %v1653 = vmul.f32 %v1582, %v1607
        %v1654 = vmul.f32 %v1583, %v1607
        %v1655 = vmul.f32 %v1584, %v1607
        %v1656 = vmul.f32 %v1585, %v1607
        %v1657 = vmul.f32 %v1586, %v1607
        %v1658 = vmul.f32 %v1587, %v1607
        %v1659 = vmul.f32 %v1588, %v1607
        %v1660 = vmul.f32 %v1589, %v1607
        %v1661 = vmul.f32 %v1590, %v1607
        %v1662 = vmul.f32 %v1591, %v1607
        %v1663 = vmul.f32 %v1592, %v1607
        %v1664 = vmul.f32 %v1593, %v1607
        %v1665 = vmul.f32 %v1594, %v1607
        %v1666 = vmul.f32 %v1595, %v1607
        %v1667 = vmul.f32 %v1596, %v1607
        %v1668 = vmul.f32 %v1597, %v1607
        %v1669 = vmul.f32 %v1598, %v1607
        %v1670 = vmul.f32 %v1599, %v1607
        %v1671 = vmul.f32 %v1600, %v1607
        %v1672 = vmul.f32 %v1601, %v1607
        %v1673 = vld [vmem:[#allocation6] sm:$0x1]
        %v1675 = vlaneseq
        %v1676 = vshrl.u32 %v1675, 7
        %v1677 = vsub.s32 0, %v1676
        %v1678 = vrot.slane %v1673, %v1677
        %v1680 = vadd.f32 %v1609, %v1678
        %v1681 = vadd.f32 %v1610, %v1678
        %v1682 = vadd.f32 %v1611, %v1678
        %v1683 = vadd.f32 %v1612, %v1678
        %v1684 = vadd.f32 %v1613, %v1678
        %v1685 = vadd.f32 %v1614, %v1678
        %v1686 = vadd.f32 %v1615, %v1678
        %v1687 = vadd.f32 %v1616, %v1678
        %v1688 = vadd.f32 %v1617, %v1678
        %v1689 = vadd.f32 %v1618, %v1678
        %v1690 = vadd.f32 %v1619, %v1678
        %v1691 = vadd.f32 %v1620, %v1678
        %v1692 = vadd.f32 %v1621, %v1678
        %v1693 = vadd.f32 %v1622, %v1678
        %v1694 = vadd.f32 %v1623, %v1678
        %v1695 = vadd.f32 %v1624, %v1678
        %v1696 = vadd.f32 %v1625, %v1678
        %v1697 = vadd.f32 %v1626, %v1678
        %v1698 = vadd.f32 %v1627, %v1678
        %v1699 = vadd.f32 %v1628, %v1678
        %v1700 = vadd.f32 %v1629, %v1678
        %v1701 = vadd.f32 %v1630, %v1678
        %v1702 = vadd.f32 %v1631, %v1678
        %v1703 = vadd.f32 %v1632, %v1678
        %v1704 = vadd.f32 %v1633, %v1678
        %v1705 = vadd.f32 %v1634, %v1678
        %v1706 = vadd.f32 %v1635, %v1678
        %v1707 = vadd.f32 %v1636, %v1678
        %v1708 = vadd.f32 %v1637, %v1678
        %v1709 = vadd.f32 %v1638, %v1678
        %v1710 = vadd.f32 %v1639, %v1678
        %v1711 = vadd.f32 %v1640, %v1678
        %v1712 = vadd.f32 %v1641, %v1678
        %v1713 = vadd.f32 %v1642, %v1678
        %v1714 = vadd.f32 %v1643, %v1678
        %v1715 = vadd.f32 %v1644, %v1678
        %v1716 = vadd.f32 %v1645, %v1678
        %v1717 = vadd.f32 %v1646, %v1678
        %v1718 = vadd.f32 %v1647, %v1678
        %v1719 = vadd.f32 %v1648, %v1678
        %v1720 = vadd.f32 %v1649, %v1678
        %v1721 = vadd.f32 %v1650, %v1678
        %v1722 = vadd.f32 %v1651, %v1678
        %v1723 = vadd.f32 %v1652, %v1678
        %v1724 = vadd.f32 %v1653, %v1678
        %v1725 = vadd.f32 %v1654, %v1678
        %v1726 = vadd.f32 %v1655, %v1678
        %v1727 = vadd.f32 %v1656, %v1678
        %v1728 = vadd.f32 %v1657, %v1678
        %v1729 = vadd.f32 %v1658, %v1678
        %v1730 = vadd.f32 %v1659, %v1678
        %v1731 = vadd.f32 %v1660, %v1678
        %v1732 = vadd.f32 %v1661, %v1678
        %v1733 = vadd.f32 %v1662, %v1678
        %v1734 = vadd.f32 %v1663, %v1678
        %v1735 = vadd.f32 %v1664, %v1678
        %v1736 = vadd.f32 %v1665, %v1678
        %v1737 = vadd.f32 %v1666, %v1678
        %v1738 = vadd.f32 %v1667, %v1678
        %v1739 = vadd.f32 %v1668, %v1678
        %v1740 = vadd.f32 %v1669, %v1678
        %v1741 = vadd.f32 %v1670, %v1678
        %v1742 = vadd.f32 %v1671, %v1678
        %v1743 = vadd.f32 %v1672, %v1678
        %1744 = vst [vmem:[%s229] sm:$0xff] %v1680
        %1745 = vst [vmem:[%s229 + $0x8] sm:$0xff] %v1681
        %1746 = vst [vmem:[%s229 + $0x10] sm:$0xff] %v1682
        %1747 = vst [vmem:[%s229 + $0x18] sm:$0xff] %v1683
        %1748 = vst [vmem:[%s229 + $0x20] sm:$0xff] %v1684
        %1749 = vst [vmem:[%s229 + $0x28] sm:$0xff] %v1685
        %1750 = vst [vmem:[%s229 + $0x30] sm:$0xff] %v1686
        %1751 = vst [vmem:[%s229 + $0x38] sm:$0xff] %v1687
        %1752 = vst [vmem:[%s229 + $0x40] sm:$0xff] %v1688
        %1753 = vst [vmem:[%s229 + $0x48] sm:$0xff] %v1689
        %1754 = vst [vmem:[%s229 + $0x50] sm:$0xff] %v1690
        %1755 = vst [vmem:[%s229 + $0x58] sm:$0xff] %v1691
        %1756 = vst [vmem:[%s229 + $0x60] sm:$0xff] %v1692
        %1757 = vst [vmem:[%s229 + $0x68] sm:$0xff] %v1693
        %1758 = vst [vmem:[%s229 + $0x70] sm:$0xff] %v1694
        %1759 = vst [vmem:[%s229 + $0x78] sm:$0xff] %v1695
        %1760 = vst [vmem:[%s229 + $0x80] sm:$0xff] %v1696
        %1761 = vst [vmem:[%s229 + $0x88] sm:$0xff] %v1697
        %1762 = vst [vmem:[%s229 + $0x90] sm:$0xff] %v1698
        %1763 = vst [vmem:[%s229 + $0x98] sm:$0xff] %v1699
        %1764 = vst [vmem:[%s229 + $0xa0] sm:$0xff] %v1700
        %1765 = vst [vmem:[%s229 + $0xa8] sm:$0xff] %v1701
        %1766 = vst [vmem:[%s229 + $0xb0] sm:$0xff] %v1702
        %1767 = vst [vmem:[%s229 + $0xb8] sm:$0xff] %v1703
        %1768 = vst [vmem:[%s229 + $0xc0] sm:$0xff] %v1704
        %1769 = vst [vmem:[%s229 + $0xc8] sm:$0xff] %v1705
        %1770 = vst [vmem:[%s229 + $0xd0] sm:$0xff] %v1706
        %1771 = vst [vmem:[%s229 + $0xd8] sm:$0xff] %v1707
        %1772 = vst [vmem:[%s229 + $0xe0] sm:$0xff] %v1708
        %1773 = vst [vmem:[%s229 + $0xe8] sm:$0xff] %v1709
        %1774 = vst [vmem:[%s229 + $0xf0] sm:$0xff] %v1710
        %1775 = vst [vmem:[%s229 + $0xf8] sm:$0xff] %v1711
        %1776 = vst [vmem:[%s229 + $0x100] sm:$0xff] %v1712
        %1777 = vst [vmem:[%s229 + $0x108] sm:$0xff] %v1713
        %1778 = vst [vmem:[%s229 + $0x110] sm:$0xff] %v1714
        %1779 = vst [vmem:[%s229 + $0x118] sm:$0xff] %v1715
        %1780 = vst [vmem:[%s229 + $0x120] sm:$0xff] %v1716
        %1781 = vst [vmem:[%s229 + $0x128] sm:$0xff] %v1717
        %1782 = vst [vmem:[%s229 + $0x130] sm:$0xff] %v1718
        %1783 = vst [vmem:[%s229 + $0x138] sm:$0xff] %v1719
        %1784 = vst [vmem:[%s229 + $0x140] sm:$0xff] %v1720
        %1785 = vst [vmem:[%s229 + $0x148] sm:$0xff] %v1721
        %1786 = vst [vmem:[%s229 + $0x150] sm:$0xff] %v1722
        %1787 = vst [vmem:[%s229 + $0x158] sm:$0xff] %v1723
        %1788 = vst [vmem:[%s229 + $0x160] sm:$0xff] %v1724
        %1789 = vst [vmem:[%s229 + $0x168] sm:$0xff] %v1725
        %1790 = vst [vmem:[%s229 + $0x170] sm:$0xff] %v1726
        %1791 = vst [vmem:[%s229 + $0x178] sm:$0xff] %v1727
        %1792 = vst [vmem:[%s229 + $0x180] sm:$0xff] %v1728
        %1793 = vst [vmem:[%s229 + $0x188] sm:$0xff] %v1729
        %1794 = vst [vmem:[%s229 + $0x190] sm:$0xff] %v1730
        %1795 = vst [vmem:[%s229 + $0x198] sm:$0xff] %v1731
        %1796 = vst [vmem:[%s229 + $0x1a0] sm:$0xff] %v1732
        %1797 = vst [vmem:[%s229 + $0x1a8] sm:$0xff] %v1733
        %1798 = vst [vmem:[%s229 + $0x1b0] sm:$0xff] %v1734
        %1799 = vst [vmem:[%s229 + $0x1b8] sm:$0xff] %v1735
        %1800 = vst [vmem:[%s229 + $0x1c0] sm:$0xff] %v1736
        %1801 = vst [vmem:[%s229 + $0x1c8] sm:$0xff] %v1737
        %1802 = vst [vmem:[%s229 + $0x1d0] sm:$0xff] %v1738
        %1803 = vst [vmem:[%s229 + $0x1d8] sm:$0xff] %v1739
        %1804 = vst [vmem:[%s229 + $0x1e0] sm:$0xff] %v1740
        %1805 = vst [vmem:[%s229 + $0x1e8] sm:$0xff] %v1741
        %1806 = vst [vmem:[%s229 + $0x1f0] sm:$0xff] %v1742
        %1807 = vst [vmem:[%s229 + $0x1f8] sm:$0xff] %v1743
      $region48: #{residual_branch_forward.3} parent=35 // pred_fallthru
        _
      %s1808 = smul.u32 %s20, %s19
      %s1809 = smul.u32 64, %s1808
      %p1810 = scmp.lt.s32.totalorder %s1809, 63
      %s1811 = scalar_select %p1810, %s1809, 63
      %s1812 = smul.addr %s1811, 8
      %s1813 = scalar_lea.vmem %s4, %s1812
      // Predicated region
      $region53: #{residual_branch_forward.3} parent=35 // pred_check
        %p1814 = pneg %p140
      $region54: #{residual_branch_forward.3} parent=35 // pred_check_branch
        %1816 = sbr.rel (%p1814) target = $region56
      $region55: #{residual_branch_forward.3} parent=35 // pred_region
        %s1817 = smul.u32 %s20, %s19
        %s1818 = smul.u32 64, %s1817
      $region56: #{residual_branch_forward.3} parent=35 // pred_fallthru
        _
    $region36: #{residual_branch_forward.3} parent=5 // pred_fallthru
      _
    %p1819 = scmp.le.s32.totalorder 2, %s10
    // Predicated region
    $region57: #{residual_branch_forward.3} parent=5 // pred_check
      %p1820 = pneg %p1819
    $region58: #{residual_branch_forward.3} parent=5 // pred_check_branch
      %1822 = sbr.rel (%p1820) target = $region60
    $region59: #{residual_branch_forward.3} parent=5 // pred_region
      %s1823 = ssub.s32 %s10, 2
      // Predicated region
      $region61: #{residual_branch_forward.3} parent=59 // pred_check
        %p1824 = pneg %p146
      $region62: #{residual_branch_forward.3} parent=59 // pred_check_branch
        %1826 = sbr.rel (%p1824) target = $region64
      $region63: #{residual_branch_forward.3} parent=59 // pred_region
        %s1827 = smul.u32 %s22, %s21
        %s1828 = smul.u32 64, %s1827
        %p1829 = scmp.lt.s32.totalorder %s1828, 63
        %s1830 = scalar_select %p1829, %s1828, 63
        %s1831 = smul.addr %s1830, 8
        %s1832 = scalar_lea.vmem %s4, %s1831
      $region64: #{residual_branch_forward.3} parent=59 // pred_fallthru
        _
    $region60: #{residual_branch_forward.3} parent=5 // pred_fallthru
      _
  $region6: #{residual_branch_forward.3} parent=0 // loop_footer
    %s14 = sadd.s32 1, %s10
  $region7: #{residual_branch_forward.3} parent=0 // loop_footer_branch
    %9 = sbr.rel target = $region3
  $region8: #{residual_branch_forward.3} parent=0 // loop_exit
    _

</llo_original>
